<compile_context>
chip_gen: v6e
topology: v6e:2x2x1
jax: 0.10.0
libtpu: 0.0.40
codegen_flags: <defaults>
</compile_context>

<pallas_src>
import functools

import jax
import jax.numpy as jnp
from jax.experimental import pallas as pl
from jax.experimental.pallas import tpu as pltpu


H1, H2, H3 = 1000, 500, 200
_BATCH_ALIGN = 16  # bf16 native sublane tile; also a multiple of 8 (f32 outs)


def _round_up(n, m):
    return ((n + m - 1) // m) * m


# ----------------------------- Pallas kernel ------------------------------

def _vae_kernel(x_ref, eps_ref,
                w1_ref, b1_ref, w2_ref, b2_ref, w3_ref, b3_ref,
                wms_ref, bms_ref,
                w4_ref, b4_ref, w5_ref, b5_ref, w6_ref, b6_ref,
                recon_ref, mu_ref, logvar_ref, *, act_bf16):
    f32 = jnp.float32
    bf16 = jnp.bfloat16
    Lp = mu_ref.shape[-1]

    def lin(h_bf16, w_ref, b_ref):
        # bf16 x bf16 MXU matmul with f32 accumulation; bias add in f32.
        return jnp.dot(h_bf16, w_ref[...], preferred_element_type=f32) + b_ref[...]

    if act_bf16:
        # v6e/v7x: bf16 EUP tanh, bf16 activations between layers.
        def act(y_f32):
            return jnp.tanh(y_f32.astype(bf16))
    else:
        # v5e (no bf16 EUP/VPU): f32 tanh, cast only for the next MXU matmul.
        def act(y_f32):
            return jnp.tanh(y_f32).astype(bf16)

    x = x_ref[...]      # bf16
    eps = eps_ref[...]  # bf16

    # ---- encoder ----
    h = act(lin(x, w1_ref, b1_ref))
    # dropout p == 0.0 (module default) -> identity
    # TODO(synk): stochastic dropout via pltpu.prng_seed/prng_random_bits if p > 0
    h = act(lin(h, w2_ref, b2_ref))
    h = act(lin(h, w3_ref, b3_ref))

    # fused mu / logvar heads: single matmul, sliced on a 128-lane boundary
    ms = lin(h, wms_ref, bms_ref)          # f32
    mu = ms[:, :Lp]
    logvar = ms[:, Lp:]

    # ---- reparametrize: z = eps * exp(0.5*logvar) + mu (kept in f32) ----
    z = eps.astype(f32) * jnp.exp(0.5 * logvar) + mu

    # ---- decoder ----
    d = act(lin(z.astype(bf16), w4_ref, b4_ref))
    d = act(lin(d, w5_ref, b5_ref))
    recon = lin(d, w6_ref, b6_ref)

    recon_ref[...] = recon
    mu_ref[...] = mu
    logvar_ref[...] = logvar


# --------------------------- parameter prepare -----------------------------

def prepare_vae_params(params, input_dim, latent_dim):
    """Pad, fuse mu|sigma, and bf16-cast all weights ONCE (not per forward)."""
    Dp = _round_up(input_dim, 128)
    H1p, H2p, H3p = _round_up(H1, 128), _round_up(H2, 128), _round_up(H3, 128)
    Lp = _round_up(latent_dim, 128)

    def pw(w, rows, cols):  # padded weight -> bf16
        r, c = w.shape
        return jnp.pad(w, ((0, rows - r), (0, cols - c))).astype(jnp.bfloat16)

    def pb(b, cols):        # padded bias -> (1, cols) f32
        return jnp.pad(b, (0, cols - b.shape[0])).reshape(1, cols).astype(jnp.float32)

    (w1, b1), (w2, b2), (w3, b3) = params["d1"], params["d2"], params["d3"]
    (wmu, bmu), (wsig, bsig) = params["mu"], params["sigma"]
    (w4, b4), (w5, b5), (w6, b6) = params["d4"], params["d5"], params["d6"]

    wms = jnp.concatenate([pw(wmu, H3p, Lp), pw(wsig, H3p, Lp)], axis=1)
    bms = jnp.concatenate([pb(bmu, Lp), pb(bsig, Lp)], axis=1)

    prepared = (
        pw(w1, Dp, H1p),  pb(b1, H1p),
        pw(w2, H1p, H2p), pb(b2, H2p),
        pw(w3, H2p, H3p), pb(b3, H3p),
        wms, bms,
        pw(w4, Lp, H2p),  pb(b4, H2p),
        pw(w5, H2p, H1p), pb(b5, H1p),
        pw(w6, H1p, Dp),  pb(b6, Dp),
    )
    dims = dict(Dp=Dp, H1p=H1p, H2p=H2p, H3p=H3p, Lp=Lp)
    return prepared, dims


# ------------------------------- wrapper -----------------------------------

def vae_forward_pallas(x, eps, prepared, dims, *, tile_b=512, act_bf16=None):
    """Fused VAE forward. x: (B, input_dim), eps: (B, latent_dim)."""
    B, D = x.shape
    L = eps.shape[1]
    Dp, H1p, H2p, H3p, Lp = (dims["Dp"], dims["H1p"], dims["H2p"],
                             dims["H3p"], dims["Lp"])

    if act_bf16 is None:
        kind = jax.devices()[0].device_kind.lower()
        # bf16 EUP path only on v6e / v7x; v5e (and older) keep f32 tanh.
        act_bf16 = ("v6" in kind) or ("v7" in kind)

    # Batch tiling: pad only to a 16-row multiple, then pick a tile that
    # covers it with near-even tiles (no round_up(B, TB) over-padding).
    tile_b = max(_BATCH_ALIGN, (tile_b // _BATCH_ALIGN) * _BATCH_ALIGN)
    B_al = _round_up(B, _BATCH_ALIGN)
    if B_al <= tile_b:
        TB, n_b = B_al, 1
    else:
        n_b = -(-B_al // tile_b)                       # cdiv
        TB = _round_up(-(-B_al // n_b), _BATCH_ALIGN)  # even-ish tiles
    Bp = TB * n_b

    # Pad + cast inputs to bf16 (halves input DMA; matmul operands are bf16).
    xp = jnp.pad(x, ((0, Bp - B), (0, Dp - D))).astype(jnp.bfloat16)
    epsp = jnp.pad(eps, ((0, Bp - B), (0, Lp - L))).astype(jnp.bfloat16)

    def row_spec(cols):
        return pl.BlockSpec((TB, cols), lambda i: (i, 0))

    def const_spec(shape):
        # same block index every grid step -> weights stay resident in VMEM
        return pl.BlockSpec(shape, lambda i: (0, 0))

    w_shapes = [
        (Dp, H1p), (1, H1p),
        (H1p, H2p), (1, H2p),
        (H2p, H3p), (1, H3p),
        (H3p, 2 * Lp), (1, 2 * Lp),
        (Lp, H2p), (1, H2p),
        (H2p, H1p), (1, H1p),
        (H1p, Dp), (1, Dp),
    ]

    # For <=2 tiles, don't shard the batch axis across TensorCores (v7x
    # megacore would otherwise stream the ~3 MiB weight set once per core).
    semantics = ("arbitrary",) if n_b <= 2 else ("parallel",)

    kernel = functools.partial(_vae_kernel, act_bf16=act_bf16)

    recon_p, mu_p, logvar_p = pl.pallas_call(
        kernel,
        grid=(n_b,),
        out_shape=(
            jax.ShapeDtypeStruct((Bp, Dp), jnp.float32),
            jax.ShapeDtypeStruct((Bp, Lp), jnp.float32),
            jax.ShapeDtypeStruct((Bp, Lp), jnp.float32),
        ),
        in_specs=[row_spec(Dp), row_spec(Lp)] + [const_spec(s) for s in w_shapes],
        out_specs=(row_spec(Dp), row_spec(Lp), row_spec(Lp)),
        compiler_params=pltpu.CompilerParams(
            dimension_semantics=semantics,
            vmem_limit_bytes=32 << 20,   # fits v7x (64 MiB); raises v5e's 16 MiB default
        ),
    )(xp, epsp, *prepared)

    return recon_p[:B, :D], mu_p[:B, :L], logvar_p[:B, :L]


# --------------------------- parameter init --------------------------------

def _linear_params(key, fan_in, fan_out):
    # mimics PyTorch nn.Linear default init: U(-1/sqrt(fan_in), 1/sqrt(fan_in))
    kw, kb = jax.random.split(key)
    bound = 1.0 / (fan_in ** 0.5)
    w = jax.random.uniform(kw, (fan_in, fan_out), jnp.float32, -bound, bound)
    b = jax.random.uniform(kb, (fan_out,), jnp.float32, -bound, bound)
    return w, b


def init_vae_params(key, input_dim, latent_dim):
    keys = jax.random.split(key, 8)
    return {
        "d1":    _linear_params(keys[0], input_dim, H1),
        "d2":    _linear_params(keys[1], H1, H2),
        "d3":    _linear_params(keys[2], H2, H3),
        "mu":    _linear_params(keys[3], H3, latent_dim),
        "sigma": _linear_params(keys[4], H3, latent_dim),
        "d4":    _linear_params(keys[5], latent_dim, H2),
        "d5":    _linear_params(keys[6], H2, H1),
        "d6":    _linear_params(keys[7], H1, input_dim),
    }


# ------------------------- pure-JAX reference -------------------------------

def vae_forward_ref(x, eps, params):
    # Matches the kernel's mixed precision: bf16 matmul operands, f32
    # accumulation, bf16-quantized eps.
    bf16 = jnp.bfloat16
    f32 = jnp.float32

    def lin(h, p):
        w, b = p
        return jnp.dot(h.astype(bf16), w.astype(bf16),
                       preferred_element_type=f32) + b

    h = jnp.tanh(lin(x, params["d1"]))
    h = jnp.tanh(lin(h, params["d2"]))
    h = jnp.tanh(lin(h, params["d3"]))
    mu = lin(h, params["mu"])
    logvar = lin(h, params["sigma"])
    eps_q = eps.astype(bf16).astype(f32)
    z = eps_q * jnp.exp(0.5 * logvar) + mu
    d = jnp.tanh(lin(z, params["d4"]))
    d = jnp.tanh(lin(d, params["d5"]))
    recon = lin(d, params["d6"])
    return recon, mu, logvar


# --------------------------------- main -------------------------------------

if __name__ == "__main__":
    input_dim = 64
    latent_dim = 10

    root = jax.random.PRNGKey(0)
    k_params, k_x, k_eps, k_x2, k_eps2 = jax.random.split(root, 5)

    params = init_vae_params(k_params, input_dim, latent_dim)
    # one-time padding / bf16 cast / head fusion (amortized across forwards)
    prepared, dims = prepare_vae_params(params, input_dim, latent_dim)
    prepared = jax.block_until_ready(prepared)

    # ---- tiny-batch serving case: single tile, no batch over-padding ----
    batch = 4
    x = jax.random.normal(k_x, (batch, input_dim), jnp.float32)
    eps = jax.random.normal(k_eps, (batch, latent_dim), jnp.float32)

    recon, mu, logvar = jax.block_until_ready(
        vae_forward_pallas(x, eps, prepared, dims)
    )
    recon_r, mu_r, logvar_r = vae_forward_ref(x, eps, params)
    assert recon.shape == (batch, input_dim)
    assert mu.shape == (batch, latent_dim) and logvar.shape == (batch, latent_dim)
    assert jnp.allclose(recon, recon_r, rtol=2e-2, atol=2e-2)
    assert jnp.allclose(mu, mu_r, rtol=2e-2, atol=2e-2)
    assert jnp.allclose(logvar, logvar_r, rtol=2e-2, atol=2e-2)

    # ---- multi-tile case exercising adaptive batch tiling (tile_b clamps
    #      100 -> 96, batch 200 covered by 3 tiles of 80 rows, not 2x padded) ----
    batch2 = 200
    x2 = jax.random.normal(k_x2, (batch2, input_dim), jnp.float32)
    eps2 = jax.random.normal(k_eps2, (batch2, latent_dim), jnp.float32)

    recon2, mu2, logvar2 = jax.block_until_ready(
        vae_forward_pallas(x2, eps2, prepared, dims, tile_b=100)
    )
    recon2_r, mu2_r, logvar2_r = vae_forward_ref(x2, eps2, params)
    assert recon2.shape == (batch2, input_dim)
    assert jnp.allclose(recon2, recon2_r, rtol=2e-2, atol=2e-2)
    assert jnp.allclose(mu2, mu2_r, rtol=2e-2, atol=2e-2)
    assert jnp.allclose(logvar2, logvar2_r, rtol=2e-2, atol=2e-2)

    print("KERNEL_OK")
</pallas_src>

<mosaic_0001>
module attributes {stable_mosaic.version = 11 : i64} {
  func.func @_vae_kernel(%arg0: i32, %arg1: memref<16x128xbf16, #tpu.memory_space<vmem>>, %arg2: memref<16x128xbf16, #tpu.memory_space<vmem>>, %arg3: memref<128x1024xbf16, #tpu.memory_space<vmem>>, %arg4: memref<1x1024xf32, #tpu.memory_space<vmem>>, %arg5: memref<1024x512xbf16, #tpu.memory_space<vmem>>, %arg6: memref<1x512xf32, #tpu.memory_space<vmem>>, %arg7: memref<512x256xbf16, #tpu.memory_space<vmem>>, %arg8: memref<1x256xf32, #tpu.memory_space<vmem>>, %arg9: memref<256x256xbf16, #tpu.memory_space<vmem>>, %arg10: memref<1x256xf32, #tpu.memory_space<vmem>>, %arg11: memref<128x512xbf16, #tpu.memory_space<vmem>>, %arg12: memref<1x512xf32, #tpu.memory_space<vmem>>, %arg13: memref<512x1024xbf16, #tpu.memory_space<vmem>>, %arg14: memref<1x1024xf32, #tpu.memory_space<vmem>>, %arg15: memref<1024x128xbf16, #tpu.memory_space<vmem>>, %arg16: memref<1x128xf32, #tpu.memory_space<vmem>>, %arg17: memref<16x128xf32, #tpu.memory_space<vmem>>, %arg18: memref<16x128xf32, #tpu.memory_space<vmem>>, %arg19: memref<16x128xf32, #tpu.memory_space<vmem>>) attributes {dimension_semantics = [#tpu.dimension_semantics<arbitrary>], iteration_bounds = array<i64: 1>, scalar_prefetch = 0 : i64, scratch_operands = 0 : i64, tpu.core_type = #tpu.core_type<tc>, window_params = [{transform_indices = @transform_0, window_bounds = array<i64: 16, 128>}, {transform_indices = @transform_1, window_bounds = array<i64: 16, 128>}, {pipeline_mode = #tpu.pipeline_mode<synchronous>, transform_indices = @transform_2, window_bounds = array<i64: 128, 1024>}, {pipeline_mode = #tpu.pipeline_mode<synchronous>, transform_indices = @transform_3, window_bounds = array<i64: 1, 1024>}, {pipeline_mode = #tpu.pipeline_mode<synchronous>, transform_indices = @transform_4, window_bounds = array<i64: 1024, 512>}, {pipeline_mode = #tpu.pipeline_mode<synchronous>, transform_indices = @transform_5, window_bounds = array<i64: 1, 512>}, {pipeline_mode = #tpu.pipeline_mode<synchronous>, transform_indices = @transform_6, window_bounds = array<i64: 512, 256>}, {pipeline_mode = #tpu.pipeline_mode<synchronous>, transform_indices = @transform_7, window_bounds = array<i64: 1, 256>}, {pipeline_mode = #tpu.pipeline_mode<synchronous>, transform_indices = @transform_8, window_bounds = array<i64: 256, 256>}, {pipeline_mode = #tpu.pipeline_mode<synchronous>, transform_indices = @transform_9, window_bounds = array<i64: 1, 256>}, {pipeline_mode = #tpu.pipeline_mode<synchronous>, transform_indices = @transform_10, window_bounds = array<i64: 128, 512>}, {pipeline_mode = #tpu.pipeline_mode<synchronous>, transform_indices = @transform_11, window_bounds = array<i64: 1, 512>}, {pipeline_mode = #tpu.pipeline_mode<synchronous>, transform_indices = @transform_12, window_bounds = array<i64: 512, 1024>}, {pipeline_mode = #tpu.pipeline_mode<synchronous>, transform_indices = @transform_13, window_bounds = array<i64: 1, 1024>}, {pipeline_mode = #tpu.pipeline_mode<synchronous>, transform_indices = @transform_14, window_bounds = array<i64: 1024, 128>}, {pipeline_mode = #tpu.pipeline_mode<synchronous>, transform_indices = @transform_15, window_bounds = array<i64: 1, 128>}, {transform_indices = @transform_16, window_bounds = array<i64: 16, 128>}, {transform_indices = @transform_17, window_bounds = array<i64: 16, 128>}, {transform_indices = @transform_18, window_bounds = array<i64: 16, 128>}]} {
    %c0 = arith.constant 0 : index
    %c0_0 = arith.constant 0 : index
    %0 = vector.load %arg1[%c0, %c0_0] : memref<16x128xbf16, #tpu.memory_space<vmem>>, vector<16x128xbf16>
    %c0_1 = arith.constant 0 : index
    %c0_2 = arith.constant 0 : index
    %1 = vector.load %arg2[%c0_1, %c0_2] : memref<16x128xbf16, #tpu.memory_space<vmem>>, vector<16x128xbf16>
    %c0_3 = arith.constant 0 : index
    %c0_4 = arith.constant 0 : index
    %2 = vector.load %arg3[%c0_3, %c0_4] : memref<128x1024xbf16, #tpu.memory_space<vmem>>, vector<128x1024xbf16>
    %cst = arith.constant dense<0.000000e+00> : vector<16x1024xf32>
    %3 = tpu.matmul %0, %2, %cst {dimension_numbers = #tpu.dot_dimension_numbers<[1], [0], [0], [1], [0, 0, 1, 1], [], []>} : vector<16x128xbf16>, vector<128x1024xbf16>, vector<16x1024xf32> -> vector<16x1024xf32>
    %c0_5 = arith.constant 0 : index
    %c0_6 = arith.constant 0 : index
    %4 = vector.load %arg4[%c0_5, %c0_6] : memref<1x1024xf32, #tpu.memory_space<vmem>>, vector<1x1024xf32>
    %5 = vector.broadcast %4 : vector<1x1024xf32> to vector<16x1024xf32>
    %6 = arith.addf %3, %5 : vector<16x1024xf32>
    %7 = math.tanh %6 : vector<16x1024xf32>
    %8 = arith.truncf %7 : vector<16x1024xf32> to vector<16x1024xbf16>
    %c0_7 = arith.constant 0 : index
    %c0_8 = arith.constant 0 : index
    %9 = vector.load %arg5[%c0_7, %c0_8] : memref<1024x512xbf16, #tpu.memory_space<vmem>>, vector<1024x512xbf16>
    %cst_9 = arith.constant dense<0.000000e+00> : vector<16x512xf32>
    %10 = tpu.matmul %8, %9, %cst_9 {dimension_numbers = #tpu.dot_dimension_numbers<[1], [0], [0], [1], [0, 0, 1, 1], [], []>} : vector<16x1024xbf16>, vector<1024x512xbf16>, vector<16x512xf32> -> vector<16x512xf32>
    %c0_10 = arith.constant 0 : index
    %c0_11 = arith.constant 0 : index
    %11 = vector.load %arg6[%c0_10, %c0_11] : memref<1x512xf32, #tpu.memory_space<vmem>>, vector<1x512xf32>
    %12 = vector.broadcast %11 : vector<1x512xf32> to vector<16x512xf32>
    %13 = arith.addf %10, %12 : vector<16x512xf32>
    %14 = math.tanh %13 : vector<16x512xf32>
    %15 = arith.truncf %14 : vector<16x512xf32> to vector<16x512xbf16>
    %c0_12 = arith.constant 0 : index
    %c0_13 = arith.constant 0 : index
    %16 = vector.load %arg7[%c0_12, %c0_13] : memref<512x256xbf16, #tpu.memory_space<vmem>>, vector<512x256xbf16>
    %cst_14 = arith.constant dense<0.000000e+00> : vector<16x256xf32>
    %17 = tpu.matmul %15, %16, %cst_14 {dimension_numbers = #tpu.dot_dimension_numbers<[1], [0], [0], [1], [0, 0, 1, 1], [], []>} : vector<16x512xbf16>, vector<512x256xbf16>, vector<16x256xf32> -> vector<16x256xf32>
    %c0_15 = arith.constant 0 : index
    %c0_16 = arith.constant 0 : index
    %18 = vector.load %arg8[%c0_15, %c0_16] : memref<1x256xf32, #tpu.memory_space<vmem>>, vector<1x256xf32>
    %19 = vector.broadcast %18 : vector<1x256xf32> to vector<16x256xf32>
    %20 = arith.addf %17, %19 : vector<16x256xf32>
    %21 = math.tanh %20 : vector<16x256xf32>
    %22 = arith.truncf %21 : vector<16x256xf32> to vector<16x256xbf16>
    %c0_17 = arith.constant 0 : index
    %c0_18 = arith.constant 0 : index
    %23 = vector.load %arg9[%c0_17, %c0_18] : memref<256x256xbf16, #tpu.memory_space<vmem>>, vector<256x256xbf16>
    %cst_19 = arith.constant dense<0.000000e+00> : vector<16x256xf32>
    %24 = tpu.matmul %22, %23, %cst_19 {dimension_numbers = #tpu.dot_dimension_numbers<[1], [0], [0], [1], [0, 0, 1, 1], [], []>} : vector<16x256xbf16>, vector<256x256xbf16>, vector<16x256xf32> -> vector<16x256xf32>
    %c0_20 = arith.constant 0 : index
    %c0_21 = arith.constant 0 : index
    %25 = vector.load %arg10[%c0_20, %c0_21] : memref<1x256xf32, #tpu.memory_space<vmem>>, vector<1x256xf32>
    %26 = vector.broadcast %25 : vector<1x256xf32> to vector<16x256xf32>
    %27 = arith.addf %24, %26 : vector<16x256xf32>
    %28 = vector.extract_strided_slice %27 {offsets = [0, 0], sizes = [16, 128], strides = [1, 1]} : vector<16x256xf32> to vector<16x128xf32>
    %29 = vector.extract_strided_slice %27 {offsets = [0, 128], sizes = [16, 128], strides = [1, 1]} : vector<16x256xf32> to vector<16x128xf32>
    %30 = arith.extf %1 : vector<16x128xbf16> to vector<16x128xf32>
    %cst_22 = arith.constant 5.000000e-01 : f32
    %31 = vector.broadcast %cst_22 : f32 to vector<16x128xf32>
    %32 = arith.mulf %31, %29 : vector<16x128xf32>
    %33 = math.exp %32 : vector<16x128xf32>
    %34 = arith.mulf %30, %33 : vector<16x128xf32>
    %35 = arith.addf %34, %28 : vector<16x128xf32>
    %36 = arith.truncf %35 : vector<16x128xf32> to vector<16x128xbf16>
    %c0_23 = arith.constant 0 : index
    %c0_24 = arith.constant 0 : index
    %37 = vector.load %arg11[%c0_23, %c0_24] : memref<128x512xbf16, #tpu.memory_space<vmem>>, vector<128x512xbf16>
    %cst_25 = arith.constant dense<0.000000e+00> : vector<16x512xf32>
    %38 = tpu.matmul %36, %37, %cst_25 {dimension_numbers = #tpu.dot_dimension_numbers<[1], [0], [0], [1], [0, 0, 1, 1], [], []>} : vector<16x128xbf16>, vector<128x512xbf16>, vector<16x512xf32> -> vector<16x512xf32>
    %c0_26 = arith.constant 0 : index
    %c0_27 = arith.constant 0 : index
    %39 = vector.load %arg12[%c0_26, %c0_27] : memref<1x512xf32, #tpu.memory_space<vmem>>, vector<1x512xf32>
    %40 = vector.broadcast %39 : vector<1x512xf32> to vector<16x512xf32>
    %41 = arith.addf %38, %40 : vector<16x512xf32>
    %42 = math.tanh %41 : vector<16x512xf32>
    %43 = arith.truncf %42 : vector<16x512xf32> to vector<16x512xbf16>
    %c0_28 = arith.constant 0 : index
    %c0_29 = arith.constant 0 : index
    %44 = vector.load %arg13[%c0_28, %c0_29] : memref<512x1024xbf16, #tpu.memory_space<vmem>>, vector<512x1024xbf16>
    %cst_30 = arith.constant dense<0.000000e+00> : vector<16x1024xf32>
    %45 = tpu.matmul %43, %44, %cst_30 {dimension_numbers = #tpu.dot_dimension_numbers<[1], [0], [0], [1], [0, 0, 1, 1], [], []>} : vector<16x512xbf16>, vector<512x1024xbf16>, vector<16x1024xf32> -> vector<16x1024xf32>
    %c0_31 = arith.constant 0 : index
    %c0_32 = arith.constant 0 : index
    %46 = vector.load %arg14[%c0_31, %c0_32] : memref<1x1024xf32, #tpu.memory_space<vmem>>, vector<1x1024xf32>
    %47 = vector.broadcast %46 : vector<1x1024xf32> to vector<16x1024xf32>
    %48 = arith.addf %45, %47 : vector<16x1024xf32>
    %49 = math.tanh %48 : vector<16x1024xf32>
    %50 = arith.truncf %49 : vector<16x1024xf32> to vector<16x1024xbf16>
    %c0_33 = arith.constant 0 : index
    %c0_34 = arith.constant 0 : index
    %51 = vector.load %arg15[%c0_33, %c0_34] : memref<1024x128xbf16, #tpu.memory_space<vmem>>, vector<1024x128xbf16>
    %cst_35 = arith.constant dense<0.000000e+00> : vector<16x128xf32>
    %52 = tpu.matmul %50, %51, %cst_35 {dimension_numbers = #tpu.dot_dimension_numbers<[1], [0], [0], [1], [0, 0, 1, 1], [], []>} : vector<16x1024xbf16>, vector<1024x128xbf16>, vector<16x128xf32> -> vector<16x128xf32>
    %c0_36 = arith.constant 0 : index
    %c0_37 = arith.constant 0 : index
    %53 = vector.load %arg16[%c0_36, %c0_37] : memref<1x128xf32, #tpu.memory_space<vmem>>, vector<1x128xf32>
    %54 = vector.broadcast %53 : vector<1x128xf32> to vector<16x128xf32>
    %55 = arith.addf %52, %54 : vector<16x128xf32>
    %c0_38 = arith.constant 0 : index
    %c0_39 = arith.constant 0 : index
    %56 = vector.load %arg17[%c0_38, %c0_39] : memref<16x128xf32, #tpu.memory_space<vmem>>, vector<16x128xf32>
    tpu.vector_store %arg17[%c0_38, %c0_39], %55 {strides = array<i32>} : memref<16x128xf32, #tpu.memory_space<vmem>>, vector<16x128xf32>,
    %c0_40 = arith.constant 0 : index
    %c0_41 = arith.constant 0 : index
    %57 = vector.load %arg18[%c0_40, %c0_41] : memref<16x128xf32, #tpu.memory_space<vmem>>, vector<16x128xf32>
    tpu.vector_store %arg18[%c0_40, %c0_41], %28 {strides = array<i32>} : memref<16x128xf32, #tpu.memory_space<vmem>>, vector<16x128xf32>,
    %c0_42 = arith.constant 0 : index
    %c0_43 = arith.constant 0 : index
    %58 = vector.load %arg19[%c0_42, %c0_43] : memref<16x128xf32, #tpu.memory_space<vmem>>, vector<16x128xf32>
    tpu.vector_store %arg19[%c0_42, %c0_43], %29 {strides = array<i32>} : memref<16x128xf32, #tpu.memory_space<vmem>>, vector<16x128xf32>,
    return
  }
  func.func @transform_0(%arg0: i32) -> (i32, i32) {
    %c0_i32 = arith.constant 0 : i32
    %c0_i32_0 = arith.constant 0 : i32
    return %arg0, %c0_i32 : i32, i32
  }
  func.func @transform_1(%arg0: i32) -> (i32, i32) {
    %c0_i32 = arith.constant 0 : i32
    %c0_i32_0 = arith.constant 0 : i32
    return %arg0, %c0_i32 : i32, i32
  }
  func.func @transform_2(%arg0: i32) -> (i32, i32) {
    %c0_i32 = arith.constant 0 : i32
    %c0_i32_0 = arith.constant 0 : i32
    %c0_i32_1 = arith.constant 0 : i32
    return %c0_i32, %c0_i32_0 : i32, i32
  }
  func.func @transform_3(%arg0: i32) -> (i32, i32) {
    %c0_i32 = arith.constant 0 : i32
    %c0_i32_0 = arith.constant 0 : i32
    %c0_i32_1 = arith.constant 0 : i32
    return %c0_i32, %c0_i32_0 : i32, i32
  }
  func.func @transform_4(%arg0: i32) -> (i32, i32) {
    %c0_i32 = arith.constant 0 : i32
    %c0_i32_0 = arith.constant 0 : i32
    %c0_i32_1 = arith.constant 0 : i32
    return %c0_i32, %c0_i32_0 : i32, i32
  }
  func.func @transform_5(%arg0: i32) -> (i32, i32) {
    %c0_i32 = arith.constant 0 : i32
    %c0_i32_0 = arith.constant 0 : i32
    %c0_i32_1 = arith.constant 0 : i32
    return %c0_i32, %c0_i32_0 : i32, i32
  }
  func.func @transform_6(%arg0: i32) -> (i32, i32) {
    %c0_i32 = arith.constant 0 : i32
    %c0_i32_0 = arith.constant 0 : i32
    %c0_i32_1 = arith.constant 0 : i32
    return %c0_i32, %c0_i32_0 : i32, i32
  }
  func.func @transform_7(%arg0: i32) -> (i32, i32) {
    %c0_i32 = arith.constant 0 : i32
    %c0_i32_0 = arith.constant 0 : i32
    %c0_i32_1 = arith.constant 0 : i32
    return %c0_i32, %c0_i32_0 : i32, i32
  }
  func.func @transform_8(%arg0: i32) -> (i32, i32) {
    %c0_i32 = arith.constant 0 : i32
    %c0_i32_0 = arith.constant 0 : i32
    %c0_i32_1 = arith.constant 0 : i32
    return %c0_i32, %c0_i32_0 : i32, i32
  }
  func.func @transform_9(%arg0: i32) -> (i32, i32) {
    %c0_i32 = arith.constant 0 : i32
    %c0_i32_0 = arith.constant 0 : i32
    %c0_i32_1 = arith.constant 0 : i32
    return %c0_i32, %c0_i32_0 : i32, i32
  }
  func.func @transform_10(%arg0: i32) -> (i32, i32) {
    %c0_i32 = arith.constant 0 : i32
    %c0_i32_0 = arith.constant 0 : i32
    %c0_i32_1 = arith.constant 0 : i32
    return %c0_i32, %c0_i32_0 : i32, i32
  }
  func.func @transform_11(%arg0: i32) -> (i32, i32) {
    %c0_i32 = arith.constant 0 : i32
    %c0_i32_0 = arith.constant 0 : i32
    %c0_i32_1 = arith.constant 0 : i32
    return %c0_i32, %c0_i32_0 : i32, i32
  }
  func.func @transform_12(%arg0: i32) -> (i32, i32) {
    %c0_i32 = arith.constant 0 : i32
    %c0_i32_0 = arith.constant 0 : i32
    %c0_i32_1 = arith.constant 0 : i32
    return %c0_i32, %c0_i32_0 : i32, i32
  }
  func.func @transform_13(%arg0: i32) -> (i32, i32) {
    %c0_i32 = arith.constant 0 : i32
    %c0_i32_0 = arith.constant 0 : i32
    %c0_i32_1 = arith.constant 0 : i32
    return %c0_i32, %c0_i32_0 : i32, i32
  }
  func.func @transform_14(%arg0: i32) -> (i32, i32) {
    %c0_i32 = arith.constant 0 : i32
    %c0_i32_0 = arith.constant 0 : i32
    %c0_i32_1 = arith.constant 0 : i32
    return %c0_i32, %c0_i32_0 : i32, i32
  }
  func.func @transform_15(%arg0: i32) -> (i32, i32) {
    %c0_i32 = arith.constant 0 : i32
    %c0_i32_0 = arith.constant 0 : i32
    %c0_i32_1 = arith.constant 0 : i32
    return %c0_i32, %c0_i32_0 : i32, i32
  }
  func.func @transform_16(%arg0: i32) -> (i32, i32) {
    %c0_i32 = arith.constant 0 : i32
    %c0_i32_0 = arith.constant 0 : i32
    return %arg0, %c0_i32 : i32, i32
  }
  func.func @transform_17(%arg0: i32) -> (i32, i32) {
    %c0_i32 = arith.constant 0 : i32
    %c0_i32_0 = arith.constant 0 : i32
    return %arg0, %c0_i32 : i32, i32
  }
  func.func @transform_18(%arg0: i32) -> (i32, i32) {
    %c0_i32 = arith.constant 0 : i32
    %c0_i32_0 = arith.constant 0 : i32
    return %arg0, %c0_i32 : i32, i32
  }
}

</mosaic_0001>

<llo_original>
// kernel: tpu_custom_call.1
$region0: #{tpu_custom_call.1}
  #allocation0 [shape = 'u32[]', space=smem, size = 0x4, offset = 0x4, fixed_abs, tag = 'smem constant byte address 0x4 - core index']
  #allocation1 [shape = 'u32[144,128]{1,0:T(1,128)}', space=vmem, size = 0x12000, scoped, tag = 'internal scratch']
  %s0 = inlined_call_operand.hbm [shape: bf16[16,128], index: 0, kind: input, shape index: {}]
  %s1 = inlined_call_operand.hbm [shape: bf16[16,128], index: 1, kind: input, shape index: {}]
  %s2 = inlined_call_operand.hbm [shape: bf16[128,1024], index: 2, kind: input, shape index: {}]
  %s3 = inlined_call_operand.hbm [shape: f32[1,1024], index: 3, kind: input, shape index: {}]
  %s4 = inlined_call_operand.hbm [shape: bf16[1024,512], index: 4, kind: input, shape index: {}]
  %s5 = inlined_call_operand.vmem [shape: f32[1,512], index: 5, kind: input, shape index: {}]
  %s6 = inlined_call_operand.hbm [shape: bf16[512,256], index: 6, kind: input, shape index: {}]
  %s7 = inlined_call_operand.hbm [shape: f32[1,256], index: 7, kind: input, shape index: {}]
  %s8 = inlined_call_operand.hbm [shape: bf16[256,256], index: 8, kind: input, shape index: {}]
  %s9 = inlined_call_operand.hbm [shape: f32[1,256], index: 9, kind: input, shape index: {}]
  %s10 = inlined_call_operand.hbm [shape: bf16[128,512], index: 10, kind: input, shape index: {}]
  %s11 = inlined_call_operand.vmem [shape: f32[1,512], index: 11, kind: input, shape index: {}]
  %s12 = inlined_call_operand.hbm [shape: bf16[512,1024], index: 12, kind: input, shape index: {}]
  %s13 = inlined_call_operand.vmem [shape: f32[1,1024], index: 13, kind: input, shape index: {}]
  %s14 = inlined_call_operand.hbm [shape: bf16[1024,128], index: 14, kind: input, shape index: {}]
  %s15 = inlined_call_operand.vmem [shape: f32[1,128], index: 15, kind: input, shape index: {}]
  %s16 = inlined_call_operand.hbm [shape: f32[16,128], index: 16, kind: output, shape index: {0}]
  %s17 = inlined_call_operand.hbm [shape: f32[16,128], index: 17, kind: output, shape index: {1}]
  %s18 = inlined_call_operand.hbm [shape: f32[16,128], index: 18, kind: output, shape index: {2}]
  %19 = xla_tuple %s16, %s17, %s18
  %s20 = sld [smem:[#allocation0]]
  $region138: #{tpu_custom_call.1} parent=0
    _
  %s22 = ssub.s32 1, %s20
  %s23 = scalar_select 0, %s22, %s20
  $region1: #{tpu_custom_call.1} parent=0
    #allocation2 [shape = 'u8[4096]{0}', space=vmem, size = 0x1000, scoped, tag = 'input window, operand 0, single buffered']
    #allocation3 [shape = 's32[1]{0}', space=sflag, size = 0x4, scoped, tag = 'scoped memory for tpu_custom_call.1']
    #allocation4 [shape = 's32[1]{0}', space=sflag, size = 0x4, scoped, tag = 'scoped memory for tpu_custom_call.1']
    #allocation5 [shape = 'u8[4096]{0}', space=vmem, size = 0x1000, scoped, tag = 'input window, operand 1, single buffered']
    #allocation6 [shape = 's32[1]{0}', space=sflag, size = 0x4, scoped, tag = 'scoped memory for tpu_custom_call.1']
    #allocation7 [shape = 'u8[262144]{0}', space=vmem, size = 0x40000, scoped, tag = 'input window, operand 2, single buffered']
    #allocation8 [shape = 'u8[4096]{0}', space=vmem, size = 0x1000, scoped, tag = 'input window, operand 3, single buffered']
    #allocation9 [shape = 's32[1]{0}', space=sflag, size = 0x4, scoped, tag = 'scoped memory for tpu_custom_call.1']
    #allocation10 [shape = 'u8[1048576]{0}', space=vmem, size = 0x100000, scoped, tag = 'input window, operand 4, single buffered']
    #allocation11 [shape = 'u8[262144]{0}', space=vmem, size = 0x40000, scoped, tag = 'input window, operand 6, single buffered']
    #allocation12 [shape = 's32[1]{0}', space=sflag, size = 0x4, scoped, tag = 'scoped memory for tpu_custom_call.1']
    #allocation13 [shape = 'u8[1024]{0}', space=vmem, size = 0x400, scoped, tag = 'input window, operand 7, single buffered']
    #allocation14 [shape = 'u8[131072]{0}', space=vmem, size = 0x20000, scoped, tag = 'input window, operand 8, single buffered']
    #allocation15 [shape = 's32[1]{0}', space=sflag, size = 0x4, scoped, tag = 'scoped memory for tpu_custom_call.1']
    #allocation16 [shape = 'u8[1024]{0}', space=vmem, size = 0x400, scoped, tag = 'input window, operand 9, single buffered']
    #allocation17 [shape = 'u8[131072]{0}', space=vmem, size = 0x20000, scoped, tag = 'input window, operand 10, single buffered']
    #allocation18 [shape = 's32[1]{0}', space=sflag, size = 0x4, scoped, tag = 'scoped memory for tpu_custom_call.1']
    #allocation19 [shape = 'u8[1048576]{0}', space=vmem, size = 0x100000, scoped, tag = 'input window, operand 12, single buffered']
    #allocation20 [shape = 'u8[262144]{0}', space=vmem, size = 0x40000, scoped, tag = 'input window, operand 14, single buffered']
    #allocation21 [shape = 's32[1]{0}', space=sflag, size = 0x4, scoped, tag = 'scoped memory for tpu_custom_call.1']
    #allocation22 [shape = 'u8[8192]{0}', space=vmem, size = 0x2000, scoped, tag = 'output window, operand 0, single buffered']
    #allocation23 [shape = 'u8[8192]{0}', space=vmem, size = 0x2000, scoped, tag = 'output window, operand 1, single buffered']
    #allocation24 [shape = 's32[1]{0}', space=sflag, size = 0x4, scoped, tag = 'scoped memory for tpu_custom_call.1']
    #allocation25 [shape = 'u8[8192]{0}', space=vmem, size = 0x2000, scoped, tag = 'output window, operand 2, single buffered']
    %24 = vsyncpa [#allocation3], 0
    %25 = vsyncpa [#allocation6], 0
    %26 = vsyncpa [#allocation9], 0
    %27 = vsyncpa [#allocation12], 0
    %28 = vsyncpa [#allocation15], 0
    %29 = vsyncpa [#allocation18], 0
    %30 = vsyncpa [#allocation21], 0
    %31 = vsyncpa [#allocation4], 0
    %32 = vsyncpa [#allocation24], 0
    // Predicated region
    $region2: #{tpu_custom_call.1} parent=1 // pred_check
      _
    $region3: #{tpu_custom_call.1} parent=1 // pred_check_branch
      %34 = sbr.rel (0) target = $region5
    $region4: #{tpu_custom_call.1} parent=1 // pred_region
      %s36 = ssub.s32 128, 128
      %37 = vsyncadd [#allocation3], %s36
      %s38 = sshll.u32 [#allocation2], 4
      %s39 = int_to_ptr.vmem [resolvable:$true] %s38
      %44 = dma.hbm_to_vmem [thread:$0]  %s0, 128, %s39, [#allocation3], 64, 64, 4
    $region5: #{tpu_custom_call.1} parent=1 // pred_fallthru
      _
    // Predicated region
    $region6: #{tpu_custom_call.1} parent=1 // pred_check
      _
    $region7: #{tpu_custom_call.1} parent=1 // pred_check_branch
      %46 = sbr.rel (0) target = $region9
    $region8: #{tpu_custom_call.1} parent=1 // pred_region
      %s48 = ssub.s32 128, 128
      %49 = vsyncadd [#allocation6], %s48
      %s50 = sshll.u32 [#allocation5], 4
      %s51 = int_to_ptr.vmem [resolvable:$true] %s50
      %56 = dma.hbm_to_vmem [thread:$0]  %s1, 128, %s51, [#allocation6], 64, 64, 4
    $region9: #{tpu_custom_call.1} parent=1 // pred_fallthru
      _
    // Predicated region
    $region10: #{tpu_custom_call.1} parent=1 // pred_check
      _
    $region11: #{tpu_custom_call.1} parent=1 // pred_check_branch
      %58 = sbr.rel (0) target = $region13
    $region12: #{tpu_custom_call.1} parent=1 // pred_region
      %s60 = ssub.s32 8192, 8192
      %61 = vsyncadd [#allocation6], %s60
      %s62 = sshll.u32 [#allocation7], 4
      %s63 = int_to_ptr.vmem [resolvable:$true] %s62
      %68 = dma.hbm_to_vmem [thread:$0]  %s2, 8192, %s63, [#allocation6], 512, 512, 32
    $region13: #{tpu_custom_call.1} parent=1 // pred_fallthru
      _
    // Predicated region
    $region14: #{tpu_custom_call.1} parent=1 // pred_check
      _
    $region15: #{tpu_custom_call.1} parent=1 // pred_check_branch
      %70 = sbr.rel (0) target = $region17
    $region16: #{tpu_custom_call.1} parent=1 // pred_region
      %s72 = ssub.s32 128, 128
      %73 = vsyncadd [#allocation9], %s72
      %s75 = sshll.u32 [#allocation8], 4
      %s76 = int_to_ptr.vmem [resolvable:$true] %s75
      %78 = dma.hbm_to_vmem [thread:$0]  %s3, 128, %s76, [#allocation9]
    $region17: #{tpu_custom_call.1} parent=1 // pred_fallthru
      _
    // Predicated region
    $region18: #{tpu_custom_call.1} parent=1 // pred_check
      _
    $region19: #{tpu_custom_call.1} parent=1 // pred_check_branch
      %80 = sbr.rel (0) target = $region21
    $region20: #{tpu_custom_call.1} parent=1 // pred_region
      %s82 = ssub.s32 32768, 32768
      %83 = vsyncadd [#allocation9], %s82
      %s84 = sshll.u32 [#allocation10], 4
      %s85 = int_to_ptr.vmem [resolvable:$true] %s84
      %90 = dma.hbm_to_vmem [thread:$0]  %s4, 32768, %s85, [#allocation9], 256, 256, 16
    $region21: #{tpu_custom_call.1} parent=1 // pred_fallthru
      _
    // Predicated region
    $region22: #{tpu_custom_call.1} parent=1 // pred_check
      _
    $region23: #{tpu_custom_call.1} parent=1 // pred_check_branch
      %92 = sbr.rel (0) target = $region25
    $region24: #{tpu_custom_call.1} parent=1 // pred_region
      _
    $region25: #{tpu_custom_call.1} parent=1 // pred_fallthru
      _
    // Predicated region
    $region26: #{tpu_custom_call.1} parent=1 // pred_check
      _
    $region27: #{tpu_custom_call.1} parent=1 // pred_check_branch
      %94 = sbr.rel (0) target = $region29
    $region28: #{tpu_custom_call.1} parent=1 // pred_region
      %s96 = ssub.s32 8192, 8192
      %97 = vsyncadd [#allocation12], %s96
      %s98 = sshll.u32 [#allocation11], 4
      %s99 = int_to_ptr.vmem [resolvable:$true] %s98
      %104 = dma.hbm_to_vmem [thread:$0]  %s6, 8192, %s99, [#allocation12], 128, 128, 8
    $region29: #{tpu_custom_call.1} parent=1 // pred_fallthru
      _
    // Predicated region
    $region30: #{tpu_custom_call.1} parent=1 // pred_check
      _
    $region31: #{tpu_custom_call.1} parent=1 // pred_check_branch
      %106 = sbr.rel (0) target = $region33
    $region32: #{tpu_custom_call.1} parent=1 // pred_region
      %s108 = ssub.s32 32, 32
      %109 = vsyncadd [#allocation12], %s108
      %s111 = sshll.u32 [#allocation13], 4
      %s112 = int_to_ptr.vmem [resolvable:$true] %s111
      %114 = dma.hbm_to_vmem [thread:$0]  %s7, 32, %s112, [#allocation12]
    $region33: #{tpu_custom_call.1} parent=1 // pred_fallthru
      _
    // Predicated region
    $region34: #{tpu_custom_call.1} parent=1 // pred_check
      _
    $region35: #{tpu_custom_call.1} parent=1 // pred_check_branch
      %116 = sbr.rel (0) target = $region37
    $region36: #{tpu_custom_call.1} parent=1 // pred_region
      %s118 = ssub.s32 4096, 4096
      %119 = vsyncadd [#allocation15], %s118
      %s120 = sshll.u32 [#allocation14], 4
      %s121 = int_to_ptr.vmem [resolvable:$true] %s120
      %126 = dma.hbm_to_vmem [thread:$0]  %s8, 4096, %s121, [#allocation15], 128, 128, 8
    $region37: #{tpu_custom_call.1} parent=1 // pred_fallthru
      _
    // Predicated region
    $region38: #{tpu_custom_call.1} parent=1 // pred_check
      _
    $region39: #{tpu_custom_call.1} parent=1 // pred_check_branch
      %128 = sbr.rel (0) target = $region41
    $region40: #{tpu_custom_call.1} parent=1 // pred_region
      %s130 = ssub.s32 32, 32
      %131 = vsyncadd [#allocation15], %s130
      %s133 = sshll.u32 [#allocation16], 4
      %s134 = int_to_ptr.vmem [resolvable:$true] %s133
      %136 = dma.hbm_to_vmem [thread:$0]  %s9, 32, %s134, [#allocation15]
    $region41: #{tpu_custom_call.1} parent=1 // pred_fallthru
      _
    // Predicated region
    $region42: #{tpu_custom_call.1} parent=1 // pred_check
      _
    $region43: #{tpu_custom_call.1} parent=1 // pred_check_branch
      %138 = sbr.rel (0) target = $region45
    $region44: #{tpu_custom_call.1} parent=1 // pred_region
      %s140 = ssub.s32 4096, 4096
      %141 = vsyncadd [#allocation18], %s140
      %s142 = sshll.u32 [#allocation17], 4
      %s143 = int_to_ptr.vmem [resolvable:$true] %s142
      %148 = dma.hbm_to_vmem [thread:$0]  %s10, 4096, %s143, [#allocation18], 256, 256, 16
    $region45: #{tpu_custom_call.1} parent=1 // pred_fallthru
      _
    // Predicated region
    $region46: #{tpu_custom_call.1} parent=1 // pred_check
      _
    $region47: #{tpu_custom_call.1} parent=1 // pred_check_branch
      %150 = sbr.rel (0) target = $region49
    $region48: #{tpu_custom_call.1} parent=1 // pred_region
      _
    $region49: #{tpu_custom_call.1} parent=1 // pred_fallthru
      _
    // Predicated region
    $region50: #{tpu_custom_call.1} parent=1 // pred_check
      _
    $region51: #{tpu_custom_call.1} parent=1 // pred_check_branch
      %152 = sbr.rel (0) target = $region53
    $region52: #{tpu_custom_call.1} parent=1 // pred_region
      %s154 = ssub.s32 32768, 32768
      %155 = vsyncadd [#allocation18], %s154
      %s156 = sshll.u32 [#allocation19], 4
      %s157 = int_to_ptr.vmem [resolvable:$true] %s156
      %162 = dma.hbm_to_vmem [thread:$0]  %s12, 32768, %s157, [#allocation18], 512, 512, 32
    $region53: #{tpu_custom_call.1} parent=1 // pred_fallthru
      _
    // Predicated region
    $region54: #{tpu_custom_call.1} parent=1 // pred_check
      _
    $region55: #{tpu_custom_call.1} parent=1 // pred_check_branch
      %164 = sbr.rel (0) target = $region57
    $region56: #{tpu_custom_call.1} parent=1 // pred_region
      _
    $region57: #{tpu_custom_call.1} parent=1 // pred_fallthru
      _
    // Predicated region
    $region58: #{tpu_custom_call.1} parent=1 // pred_check
      _
    $region59: #{tpu_custom_call.1} parent=1 // pred_check_branch
      %166 = sbr.rel (0) target = $region61
    $region60: #{tpu_custom_call.1} parent=1 // pred_region
      %s168 = ssub.s32 8192, 8192
      %169 = vsyncadd [#allocation21], %s168
      %s170 = sshll.u32 [#allocation20], 4
      %s171 = int_to_ptr.vmem [resolvable:$true] %s170
      %176 = dma.hbm_to_vmem [thread:$0]  %s14, 8192, %s171, [#allocation21], 64, 64, 4
    $region61: #{tpu_custom_call.1} parent=1 // pred_fallthru
      _
    // Predicated region
    $region62: #{tpu_custom_call.1} parent=1 // pred_check
      _
    $region63: #{tpu_custom_call.1} parent=1 // pred_check_branch
      %178 = sbr.rel (0) target = $region65
    $region64: #{tpu_custom_call.1} parent=1 // pred_region
      _
    $region65: #{tpu_custom_call.1} parent=1 // pred_fallthru
      _
    // Predicated region
    $region66: #{tpu_custom_call.1} parent=1 // pred_check
      _
    $region67: #{tpu_custom_call.1} parent=1 // pred_check_branch
      %180 = sbr.rel (0) target = $region69
    $region68: #{tpu_custom_call.1} parent=1 // pred_region
      %181 = dma.done [#allocation3], 128
    $region69: #{tpu_custom_call.1} parent=1 // pred_fallthru
      _
    // Predicated region
    $region70: #{tpu_custom_call.1} parent=1 // pred_check
      _
    $region71: #{tpu_custom_call.1} parent=1 // pred_check_branch
      %183 = sbr.rel (0) target = $region73
    $region72: #{tpu_custom_call.1} parent=1 // pred_region
      %184 = dma.done [#allocation6], 128
    $region73: #{tpu_custom_call.1} parent=1 // pred_fallthru
      _
    // Predicated region
    $region74: #{tpu_custom_call.1} parent=1 // pred_check
      _
    $region75: #{tpu_custom_call.1} parent=1 // pred_check_branch
      %186 = sbr.rel (0) target = $region77
    $region76: #{tpu_custom_call.1} parent=1 // pred_region
      %187 = dma.done [#allocation6], 8192
    $region77: #{tpu_custom_call.1} parent=1 // pred_fallthru
      _
    // Predicated region
    $region78: #{tpu_custom_call.1} parent=1 // pred_check
      _
    $region79: #{tpu_custom_call.1} parent=1 // pred_check_branch
      %189 = sbr.rel (0) target = $region81
    $region80: #{tpu_custom_call.1} parent=1 // pred_region
      %190 = dma.done [#allocation9], 128
    $region81: #{tpu_custom_call.1} parent=1 // pred_fallthru
      _
    // Predicated region
    $region82: #{tpu_custom_call.1} parent=1 // pred_check
      _
    $region83: #{tpu_custom_call.1} parent=1 // pred_check_branch
      %192 = sbr.rel (0) target = $region85
    $region84: #{tpu_custom_call.1} parent=1 // pred_region
      %193 = dma.done [#allocation9], 32768
    $region85: #{tpu_custom_call.1} parent=1 // pred_fallthru
      _
    // Predicated region
    $region86: #{tpu_custom_call.1} parent=1 // pred_check
      _
    $region87: #{tpu_custom_call.1} parent=1 // pred_check_branch
      %195 = sbr.rel (0) target = $region89
    $region88: #{tpu_custom_call.1} parent=1 // pred_region
      %196 = dma.done [#allocation12], 8192
    $region89: #{tpu_custom_call.1} parent=1 // pred_fallthru
      _
    // Predicated region
    $region90: #{tpu_custom_call.1} parent=1 // pred_check
      _
    $region91: #{tpu_custom_call.1} parent=1 // pred_check_branch
      %198 = sbr.rel (0) target = $region93
    $region92: #{tpu_custom_call.1} parent=1 // pred_region
      %199 = dma.done [#allocation12], 32
    $region93: #{tpu_custom_call.1} parent=1 // pred_fallthru
      _
    // Predicated region
    $region94: #{tpu_custom_call.1} parent=1 // pred_check
      _
    $region95: #{tpu_custom_call.1} parent=1 // pred_check_branch
      %201 = sbr.rel (0) target = $region97
    $region96: #{tpu_custom_call.1} parent=1 // pred_region
      %202 = dma.done [#allocation15], 4096
    $region97: #{tpu_custom_call.1} parent=1 // pred_fallthru
      _
    // Predicated region
    $region98: #{tpu_custom_call.1} parent=1 // pred_check
      _
    $region99: #{tpu_custom_call.1} parent=1 // pred_check_branch
      %204 = sbr.rel (0) target = $region101
    $region100: #{tpu_custom_call.1} parent=1 // pred_region
      %205 = dma.done [#allocation15], 32
    $region101: #{tpu_custom_call.1} parent=1 // pred_fallthru
      _
    // Predicated region
    $region102: #{tpu_custom_call.1} parent=1 // pred_check
      _
    $region103: #{tpu_custom_call.1} parent=1 // pred_check_branch
      %207 = sbr.rel (0) target = $region105
    $region104: #{tpu_custom_call.1} parent=1 // pred_region
      %208 = dma.done [#allocation18], 4096
    $region105: #{tpu_custom_call.1} parent=1 // pred_fallthru
      _
    // Predicated region
    $region106: #{tpu_custom_call.1} parent=1 // pred_check
      _
    $region107: #{tpu_custom_call.1} parent=1 // pred_check_branch
      %210 = sbr.rel (0) target = $region109
    $region108: #{tpu_custom_call.1} parent=1 // pred_region
      %211 = dma.done [#allocation18], 32768
    $region109: #{tpu_custom_call.1} parent=1 // pred_fallthru
      _
    // Predicated region
    $region110: #{tpu_custom_call.1} parent=1 // pred_check
      _
    $region111: #{tpu_custom_call.1} parent=1 // pred_check_branch
      %213 = sbr.rel (0) target = $region113
    $region112: #{tpu_custom_call.1} parent=1 // pred_region
      %214 = dma.done [#allocation21], 8192
    $region113: #{tpu_custom_call.1} parent=1 // pred_fallthru
      _
    %v216 = vld [vmem:[#allocation2] sm:$0xf]
    %v217 = vld [vmem:[#allocation2 + $0x4] sm:$0xf]
    %v218 = vld [vmem:[#allocation5] sm:$0xf]
    %v219 = vld [vmem:[#allocation5 + $0x4] sm:$0xf]
    %v220 = vld [vmem:[#allocation7] sm:$0xff]
    %v221 = vld [vmem:[#allocation7 + $0x8] sm:$0xff]
    %v222 = vld [vmem:[#allocation7 + $0x10] sm:$0xff]
    %v223 = vld [vmem:[#allocation7 + $0x18] sm:$0xff]
    %v224 = vld [vmem:[#allocation7 + $0x20] sm:$0xff]
    %v225 = vld [vmem:[#allocation7 + $0x28] sm:$0xff]
    %v226 = vld [vmem:[#allocation7 + $0x30] sm:$0xff]
    %v227 = vld [vmem:[#allocation7 + $0x38] sm:$0xff]
    %v228 = vld [vmem:[#allocation7 + $0x40] sm:$0xff]
    %v229 = vld [vmem:[#allocation7 + $0x48] sm:$0xff]
    %v230 = vld [vmem:[#allocation7 + $0x50] sm:$0xff]
    %v231 = vld [vmem:[#allocation7 + $0x58] sm:$0xff]
    %v232 = vld [vmem:[#allocation7 + $0x60] sm:$0xff]
    %v233 = vld [vmem:[#allocation7 + $0x68] sm:$0xff]
    %v234 = vld [vmem:[#allocation7 + $0x70] sm:$0xff]
    %v235 = vld [vmem:[#allocation7 + $0x78] sm:$0xff]
    %v236 = vld [vmem:[#allocation7 + $0x80] sm:$0xff]
    %v237 = vld [vmem:[#allocation7 + $0x88] sm:$0xff]
    %v238 = vld [vmem:[#allocation7 + $0x90] sm:$0xff]
    %v239 = vld [vmem:[#allocation7 + $0x98] sm:$0xff]
    %v240 = vld [vmem:[#allocation7 + $0xa0] sm:$0xff]
    %v241 = vld [vmem:[#allocation7 + $0xa8] sm:$0xff]
    %v242 = vld [vmem:[#allocation7 + $0xb0] sm:$0xff]
    %v243 = vld [vmem:[#allocation7 + $0xb8] sm:$0xff]
    %v244 = vld [vmem:[#allocation7 + $0xc0] sm:$0xff]
    %v245 = vld [vmem:[#allocation7 + $0xc8] sm:$0xff]
    %v246 = vld [vmem:[#allocation7 + $0xd0] sm:$0xff]
    %v247 = vld [vmem:[#allocation7 + $0xd8] sm:$0xff]
    %v248 = vld [vmem:[#allocation7 + $0xe0] sm:$0xff]
    %v249 = vld [vmem:[#allocation7 + $0xe8] sm:$0xff]
    %v250 = vld [vmem:[#allocation7 + $0xf0] sm:$0xff]
    %v251 = vld [vmem:[#allocation7 + $0xf8] sm:$0xff]
    %v252 = vld [vmem:[#allocation7 + $0x100] sm:$0xff]
    %v253 = vld [vmem:[#allocation7 + $0x108] sm:$0xff]
    %v254 = vld [vmem:[#allocation7 + $0x110] sm:$0xff]
    %v255 = vld [vmem:[#allocation7 + $0x118] sm:$0xff]
    %v256 = vld [vmem:[#allocation7 + $0x120] sm:$0xff]
    %v257 = vld [vmem:[#allocation7 + $0x128] sm:$0xff]
    %v258 = vld [vmem:[#allocation7 + $0x130] sm:$0xff]
    %v259 = vld [vmem:[#allocation7 + $0x138] sm:$0xff]
    %v260 = vld [vmem:[#allocation7 + $0x140] sm:$0xff]
    %v261 = vld [vmem:[#allocation7 + $0x148] sm:$0xff]
    %v262 = vld [vmem:[#allocation7 + $0x150] sm:$0xff]
    %v263 = vld [vmem:[#allocation7 + $0x158] sm:$0xff]
    %v264 = vld [vmem:[#allocation7 + $0x160] sm:$0xff]
    %v265 = vld [vmem:[#allocation7 + $0x168] sm:$0xff]
    %v266 = vld [vmem:[#allocation7 + $0x170] sm:$0xff]
    %v267 = vld [vmem:[#allocation7 + $0x178] sm:$0xff]
    %v268 = vld [vmem:[#allocation7 + $0x180] sm:$0xff]
    %v269 = vld [vmem:[#allocation7 + $0x188] sm:$0xff]
    %v270 = vld [vmem:[#allocation7 + $0x190] sm:$0xff]
    %v271 = vld [vmem:[#allocation7 + $0x198] sm:$0xff]
    %v272 = vld [vmem:[#allocation7 + $0x1a0] sm:$0xff]
    %v273 = vld [vmem:[#allocation7 + $0x1a8] sm:$0xff]
    %v274 = vld [vmem:[#allocation7 + $0x1b0] sm:$0xff]
    %v275 = vld [vmem:[#allocation7 + $0x1b8] sm:$0xff]
    %v276 = vld [vmem:[#allocation7 + $0x1c0] sm:$0xff]
    %v277 = vld [vmem:[#allocation7 + $0x1c8] sm:$0xff]
    %v278 = vld [vmem:[#allocation7 + $0x1d0] sm:$0xff]
    %v279 = vld [vmem:[#allocation7 + $0x1d8] sm:$0xff]
    %v280 = vld [vmem:[#allocation7 + $0x1e0] sm:$0xff]
    %v281 = vld [vmem:[#allocation7 + $0x1e8] sm:$0xff]
    %v282 = vld [vmem:[#allocation7 + $0x1f0] sm:$0xff]
    %v283 = vld [vmem:[#allocation7 + $0x1f8] sm:$0xff]
    %v284 = vld [vmem:[#allocation8] sm:$0xff]
    %v286 = vlaneseq
    %v287 = vshrl.u32 %v286, 7
    %v288 = vsub.s32 0, %v287
    %v289 = vrot.slane %v284, %v288
    %v290 = vlaneseq
    %v291 = vshrl.u32 %v290, 7
    %v292 = vsub.s32 1, %v291
    %v293 = vrot.slane %v284, %v292
    %v294 = vlaneseq
    %v295 = vshrl.u32 %v294, 7
    %v296 = vsub.s32 2, %v295
    %v297 = vrot.slane %v284, %v296
    %v298 = vlaneseq
    %v299 = vshrl.u32 %v298, 7
    %v300 = vsub.s32 3, %v299
    %v301 = vrot.slane %v284, %v300
    %v302 = vlaneseq
    %v303 = vshrl.u32 %v302, 7
    %v304 = vsub.s32 4, %v303
    %v305 = vrot.slane %v284, %v304
    %v306 = vlaneseq
    %v307 = vshrl.u32 %v306, 7
    %v308 = vsub.s32 5, %v307
    %v309 = vrot.slane %v284, %v308
    %v310 = vlaneseq
    %v311 = vshrl.u32 %v310, 7
    %v312 = vsub.s32 6, %v311
    %v313 = vrot.slane %v284, %v312
    %v314 = vlaneseq
    %v315 = vshrl.u32 %v314, 7
    %v316 = vsub.s32 7, %v315
    %v317 = vrot.slane %v284, %v316
    %v328 = vunpack.c.l.b16 %v216
    %v329 = vunpack.c.l.b16 %v217
    %v330 = vpack.c.b16 %v329, %v328
    %v396 = vunpack.c.l.b16 %v220
    %v397 = vunpack.c.h.b16 %v220
    %v398 = vunpack.c.l.b16 %v221
    %v399 = vunpack.c.h.b16 %v221
    %v400 = vunpack.c.l.b16 %v222
    %v401 = vunpack.c.h.b16 %v222
    %v402 = vunpack.c.l.b16 %v223
    %v403 = vunpack.c.h.b16 %v223
    %v404 = vunpack.c.l.b16 %v224
    %v405 = vunpack.c.h.b16 %v224
    %v406 = vunpack.c.l.b16 %v225
    %v407 = vunpack.c.h.b16 %v225
    %v408 = vunpack.c.l.b16 %v226
    %v409 = vunpack.c.h.b16 %v226
    %v410 = vunpack.c.l.b16 %v227
    %v411 = vunpack.c.h.b16 %v227
    %v412 = vunpack.c.l.b16 %v228
    %v413 = vunpack.c.h.b16 %v228
    %v414 = vunpack.c.l.b16 %v229
    %v415 = vunpack.c.h.b16 %v229
    %v416 = vunpack.c.l.b16 %v230
    %v417 = vunpack.c.h.b16 %v230
    %v418 = vunpack.c.l.b16 %v231
    %v419 = vunpack.c.h.b16 %v231
    %v420 = vunpack.c.l.b16 %v232
    %v421 = vunpack.c.h.b16 %v232
    %v422 = vunpack.c.l.b16 %v233
    %v423 = vunpack.c.h.b16 %v233
    %v424 = vunpack.c.l.b16 %v234
    %v425 = vunpack.c.h.b16 %v234
    %v426 = vunpack.c.l.b16 %v235
    %v427 = vunpack.c.h.b16 %v235
    %v428 = vunpack.c.l.b16 %v236
    %v429 = vunpack.c.h.b16 %v236
    %v430 = vunpack.c.l.b16 %v237
    %v431 = vunpack.c.h.b16 %v237
    %v432 = vunpack.c.l.b16 %v238
    %v433 = vunpack.c.h.b16 %v238
    %v434 = vunpack.c.l.b16 %v239
    %v435 = vunpack.c.h.b16 %v239
    %v436 = vunpack.c.l.b16 %v240
    %v437 = vunpack.c.h.b16 %v240
    %v438 = vunpack.c.l.b16 %v241
    %v439 = vunpack.c.h.b16 %v241
    %v440 = vunpack.c.l.b16 %v242
    %v441 = vunpack.c.h.b16 %v242
    %v442 = vunpack.c.l.b16 %v243
    %v443 = vunpack.c.h.b16 %v243
    %v444 = vunpack.c.l.b16 %v244
    %v445 = vunpack.c.h.b16 %v244
    %v446 = vunpack.c.l.b16 %v245
    %v447 = vunpack.c.h.b16 %v245
    %v448 = vunpack.c.l.b16 %v246
    %v449 = vunpack.c.h.b16 %v246
    %v450 = vunpack.c.l.b16 %v247
    %v451 = vunpack.c.h.b16 %v247
    %v452 = vunpack.c.l.b16 %v248
    %v453 = vunpack.c.h.b16 %v248
    %v454 = vunpack.c.l.b16 %v249
    %v455 = vunpack.c.h.b16 %v249
    %v456 = vunpack.c.l.b16 %v250
    %v457 = vunpack.c.h.b16 %v250
    %v458 = vunpack.c.l.b16 %v251
    %v459 = vunpack.c.h.b16 %v251
    %v460 = vunpack.c.l.b16 %v252
    %v461 = vunpack.c.h.b16 %v252
    %v462 = vunpack.c.l.b16 %v253
    %v463 = vunpack.c.h.b16 %v253
    %v464 = vunpack.c.l.b16 %v254
    %v465 = vunpack.c.h.b16 %v254
    %v466 = vunpack.c.l.b16 %v255
    %v467 = vunpack.c.h.b16 %v255
    %v468 = vunpack.c.l.b16 %v256
    %v469 = vunpack.c.h.b16 %v256
    %v470 = vunpack.c.l.b16 %v257
    %v471 = vunpack.c.h.b16 %v257
    %v472 = vunpack.c.l.b16 %v258
    %v473 = vunpack.c.h.b16 %v258
    %v474 = vunpack.c.l.b16 %v259
    %v475 = vunpack.c.h.b16 %v259
    %v476 = vunpack.c.l.b16 %v260
    %v477 = vunpack.c.h.b16 %v260
    %v478 = vunpack.c.l.b16 %v261
    %v479 = vunpack.c.h.b16 %v261
    %v480 = vunpack.c.l.b16 %v262
    %v481 = vunpack.c.h.b16 %v262
    %v482 = vunpack.c.l.b16 %v263
    %v483 = vunpack.c.h.b16 %v263
    %v484 = vunpack.c.l.b16 %v264
    %v485 = vunpack.c.h.b16 %v264
    %v486 = vunpack.c.l.b16 %v265
    %v487 = vunpack.c.h.b16 %v265
    %v488 = vunpack.c.l.b16 %v266
    %v489 = vunpack.c.h.b16 %v266
    %v490 = vunpack.c.l.b16 %v267
    %v491 = vunpack.c.h.b16 %v267
    %v492 = vunpack.c.l.b16 %v268
    %v493 = vunpack.c.h.b16 %v268
    %v494 = vunpack.c.l.b16 %v269
    %v495 = vunpack.c.h.b16 %v269
    %v496 = vunpack.c.l.b16 %v270
    %v497 = vunpack.c.h.b16 %v270
    %v498 = vunpack.c.l.b16 %v271
    %v499 = vunpack.c.h.b16 %v271
    %v500 = vunpack.c.l.b16 %v272
    %v501 = vunpack.c.h.b16 %v272
    %v502 = vunpack.c.l.b16 %v273
    %v503 = vunpack.c.h.b16 %v273
    %v504 = vunpack.c.l.b16 %v274
    %v505 = vunpack.c.h.b16 %v274
    %v506 = vunpack.c.l.b16 %v275
    %v507 = vunpack.c.h.b16 %v275
    %v508 = vunpack.c.l.b16 %v276
    %v509 = vunpack.c.h.b16 %v276
    %v510 = vunpack.c.l.b16 %v277
    %v511 = vunpack.c.h.b16 %v277
    %v512 = vunpack.c.l.b16 %v278
    %v513 = vunpack.c.h.b16 %v278
    %v514 = vunpack.c.l.b16 %v279
    %v515 = vunpack.c.h.b16 %v279
    %v516 = vunpack.c.l.b16 %v280
    %v517 = vunpack.c.h.b16 %v280
    %v518 = vunpack.c.l.b16 %v281
    %v519 = vunpack.c.h.b16 %v281
    %v520 = vunpack.c.l.b16 %v282
    %v521 = vunpack.c.h.b16 %v282
    %v522 = vunpack.c.l.b16 %v283
    %v523 = vunpack.c.h.b16 %v283
    %v524 = vpack.c.b16 %v404, %v396
    %v525 = vpack.c.b16 %v405, %v397
    %v526 = vpack.c.b16 %v406, %v398
    %v527 = vpack.c.b16 %v407, %v399
    %v528 = vpack.c.b16 %v408, %v400
    %v529 = vpack.c.b16 %v409, %v401
    %v530 = vpack.c.b16 %v410, %v402
    %v531 = vpack.c.b16 %v411, %v403
    %v532 = vpack.c.b16 %v420, %v412
    %v533 = vpack.c.b16 %v421, %v413
    %v534 = vpack.c.b16 %v422, %v414
    %v535 = vpack.c.b16 %v423, %v415
    %v536 = vpack.c.b16 %v424, %v416
    %v537 = vpack.c.b16 %v425, %v417
    %v538 = vpack.c.b16 %v426, %v418
    %v539 = vpack.c.b16 %v427, %v419
    %v540 = vpack.c.b16 %v436, %v428
    %v541 = vpack.c.b16 %v437, %v429
    %v542 = vpack.c.b16 %v438, %v430
    %v543 = vpack.c.b16 %v439, %v431
    %v544 = vpack.c.b16 %v440, %v432
    %v545 = vpack.c.b16 %v441, %v433
    %v546 = vpack.c.b16 %v442, %v434
    %v547 = vpack.c.b16 %v443, %v435
    %v548 = vpack.c.b16 %v452, %v444
    %v549 = vpack.c.b16 %v453, %v445
    %v550 = vpack.c.b16 %v454, %v446
    %v551 = vpack.c.b16 %v455, %v447
    %v552 = vpack.c.b16 %v456, %v448
    %v553 = vpack.c.b16 %v457, %v449
    %v554 = vpack.c.b16 %v458, %v450
    %v555 = vpack.c.b16 %v459, %v451
    %v556 = vpack.c.b16 %v468, %v460
    %v557 = vpack.c.b16 %v469, %v461
    %v558 = vpack.c.b16 %v470, %v462
    %v559 = vpack.c.b16 %v471, %v463
    %v560 = vpack.c.b16 %v472, %v464
    %v561 = vpack.c.b16 %v473, %v465
    %v562 = vpack.c.b16 %v474, %v466
    %v563 = vpack.c.b16 %v475, %v467
    %v564 = vpack.c.b16 %v484, %v476
    %v565 = vpack.c.b16 %v485, %v477
    %v566 = vpack.c.b16 %v486, %v478
    %v567 = vpack.c.b16 %v487, %v479
    %v568 = vpack.c.b16 %v488, %v480
    %v569 = vpack.c.b16 %v489, %v481
    %v570 = vpack.c.b16 %v490, %v482
    %v571 = vpack.c.b16 %v491, %v483
    %v572 = vpack.c.b16 %v500, %v492
    %v573 = vpack.c.b16 %v501, %v493
    %v574 = vpack.c.b16 %v502, %v494
    %v575 = vpack.c.b16 %v503, %v495
    %v576 = vpack.c.b16 %v504, %v496
    %v577 = vpack.c.b16 %v505, %v497
    %v578 = vpack.c.b16 %v506, %v498
    %v579 = vpack.c.b16 %v507, %v499
    %v580 = vpack.c.b16 %v516, %v508
    %v581 = vpack.c.b16 %v517, %v509
    %v582 = vpack.c.b16 %v518, %v510
    %v583 = vpack.c.b16 %v519, %v511
    %v584 = vpack.c.b16 %v520, %v512
    %v585 = vpack.c.b16 %v521, %v513
    %v586 = vpack.c.b16 %v522, %v514
    %v587 = vpack.c.b16 %v523, %v515
    %652 = vmatprep.subr.bf16.mxu0 %v581
    %653 = vmatpush1.bf16.msra.mxu0 %v580
    %654 = vmatprep.subr.bf16.mxu0 %v573
    %655 = vmatpush1.bf16.msra.mxu0 %v572
    %656 = vmatprep.subr.bf16.mxu0 %v565
    %657 = vmatpush1.bf16.msra.mxu0 %v564
    %658 = vmatprep.subr.bf16.mxu0 %v557
    %659 = vmatpush1.bf16.msra.mxu0 %v556
    %660 = vmatprep.subr.bf16.mxu0 %v549
    %661 = vmatpush1.bf16.msra.mxu0 %v548
    %662 = vmatprep.subr.bf16.mxu0 %v541
    %663 = vmatpush1.bf16.msra.mxu0 %v540
    %664 = vmatprep.subr.bf16.mxu0 %v533
    %665 = vmatpush1.bf16.msra.mxu0 %v532
    %666 = vmatprep.subr.bf16.mxu0 %v525
    %667 = vmatpush1.bf16.msra.mxu0 %v524
    %668 = vmatprep.subr.bf16.mxu0 0
    %669 = vmatpush2.bf16.msra.mxu0 0
    %670 = vmatprep.subr.bf16.mxu0 0
    %671 = vmatpush2.bf16.msra.mxu0 0
    %672 = vmatprep.subr.bf16.mxu0 0
    %673 = vmatpush2.bf16.msra.mxu0 0
    %674 = vmatprep.subr.bf16.mxu0 0
    %675 = vmatpush2.bf16.msra.mxu0 0
    %676 = vmatprep.subr.bf16.mxu0 0
    %677 = vmatpush2.bf16.msra.mxu0 0
    %678 = vmatprep.subr.bf16.mxu0 0
    %679 = vmatpush2.bf16.msra.mxu0 0
    %680 = vmatprep.subr.bf16.mxu0 0
    %681 = vmatpush2.bf16.msra.mxu0 0
    %682 = vmatprep.subr.bf16.mxu0 0
    %683 = vmatpush2.bf16.msra.mxu0 0
    %684 = vmatprep.mubr.bf16.mxu0 0
    %685 = vmatmul.mubr.bf16.gmra.mxu0 %v330
    %v686 = vpop.f32.mrf.mxu0
    %v687 = vadd.f32 %v289, %v686
    %v688 = vpop.f32.mrf.mxu0
    %v689 = vadd.f32 %v293, %v688
    %v690 = vpop.f32.mrf.mxu0
    %v691 = vadd.f32 %v289, %v690
    %v692 = vpop.f32.mrf.mxu0
    %v693 = vadd.f32 %v293, %v692
    %694 = vdwg.mxu0
    %695 = vmatprep.subr.bf16.mxu0 %v583
    %696 = vmatpush1.bf16.msra.mxu0 %v582
    %697 = vmatprep.subr.bf16.mxu0 %v575
    %698 = vmatpush1.bf16.msra.mxu0 %v574
    %699 = vmatprep.subr.bf16.mxu0 %v567
    %700 = vmatpush1.bf16.msra.mxu0 %v566
    %701 = vmatprep.subr.bf16.mxu0 %v559
    %702 = vmatpush1.bf16.msra.mxu0 %v558
    %703 = vmatprep.subr.bf16.mxu0 %v551
    %704 = vmatpush1.bf16.msra.mxu0 %v550
    %705 = vmatprep.subr.bf16.mxu0 %v543
    %706 = vmatpush1.bf16.msra.mxu0 %v542
    %707 = vmatprep.subr.bf16.mxu0 %v535
    %708 = vmatpush1.bf16.msra.mxu0 %v534
    %709 = vmatprep.subr.bf16.mxu0 %v527
    %710 = vmatpush1.bf16.msra.mxu0 %v526
    %711 = vmatprep.subr.bf16.mxu0 0
    %712 = vmatpush2.bf16.msra.mxu0 0
    %713 = vmatprep.subr.bf16.mxu0 0
    %714 = vmatpush2.bf16.msra.mxu0 0
    %715 = vmatprep.subr.bf16.mxu0 0
    %716 = vmatpush2.bf16.msra.mxu0 0
    %717 = vmatprep.subr.bf16.mxu0 0
    %718 = vmatpush2.bf16.msra.mxu0 0
    %719 = vmatprep.subr.bf16.mxu0 0
    %720 = vmatpush2.bf16.msra.mxu0 0
    %721 = vmatprep.subr.bf16.mxu0 0
    %722 = vmatpush2.bf16.msra.mxu0 0
    %723 = vmatprep.subr.bf16.mxu0 0
    %724 = vmatpush2.bf16.msra.mxu0 0
    %725 = vmatprep.subr.bf16.mxu0 0
    %726 = vmatpush2.bf16.msra.mxu0 0
    %727 = vmatprep.mubr.bf16.mxu0 0
    %728 = vmatmul.mubr.bf16.gmra.mxu0 %v330
    %v729 = vpop.f32.mrf.mxu0
    %v730 = vadd.f32 %v297, %v729
    %v731 = vpop.f32.mrf.mxu0
    %v732 = vadd.f32 %v301, %v731
    %v733 = vpop.f32.mrf.mxu0
    %v734 = vadd.f32 %v297, %v733
    %v735 = vpop.f32.mrf.mxu0
    %v736 = vadd.f32 %v301, %v735
    %737 = vdwg.mxu0
    %738 = vmatprep.subr.bf16.mxu0 %v585
    %739 = vmatpush1.bf16.msra.mxu0 %v584
    %740 = vmatprep.subr.bf16.mxu0 %v577
    %741 = vmatpush1.bf16.msra.mxu0 %v576
    %742 = vmatprep.subr.bf16.mxu0 %v569
    %743 = vmatpush1.bf16.msra.mxu0 %v568
    %744 = vmatprep.subr.bf16.mxu0 %v561
    %745 = vmatpush1.bf16.msra.mxu0 %v560
    %746 = vmatprep.subr.bf16.mxu0 %v553
    %747 = vmatpush1.bf16.msra.mxu0 %v552
    %748 = vmatprep.subr.bf16.mxu0 %v545
    %749 = vmatpush1.bf16.msra.mxu0 %v544
    %750 = vmatprep.subr.bf16.mxu0 %v537
    %751 = vmatpush1.bf16.msra.mxu0 %v536
    %752 = vmatprep.subr.bf16.mxu0 %v529
    %753 = vmatpush1.bf16.msra.mxu0 %v528
    %754 = vmatprep.subr.bf16.mxu0 0
    %755 = vmatpush2.bf16.msra.mxu0 0
    %756 = vmatprep.subr.bf16.mxu0 0
    %757 = vmatpush2.bf16.msra.mxu0 0
    %758 = vmatprep.subr.bf16.mxu0 0
    %759 = vmatpush2.bf16.msra.mxu0 0
    %760 = vmatprep.subr.bf16.mxu0 0
    %761 = vmatpush2.bf16.msra.mxu0 0
    %762 = vmatprep.subr.bf16.mxu0 0
    %763 = vmatpush2.bf16.msra.mxu0 0
    %764 = vmatprep.subr.bf16.mxu0 0
    %765 = vmatpush2.bf16.msra.mxu0 0
    %766 = vmatprep.subr.bf16.mxu0 0
    %767 = vmatpush2.bf16.msra.mxu0 0
    %768 = vmatprep.subr.bf16.mxu0 0
    %769 = vmatpush2.bf16.msra.mxu0 0
    %770 = vmatprep.mubr.bf16.mxu0 0
    %771 = vmatmul.mubr.bf16.gmra.mxu0 %v330
    %v772 = vpop.f32.mrf.mxu0
    %v773 = vadd.f32 %v305, %v772
    %v774 = vpop.f32.mrf.mxu0
    %v775 = vadd.f32 %v309, %v774
    %v776 = vpop.f32.mrf.mxu0
    %v777 = vadd.f32 %v305, %v776
    %v778 = vpop.f32.mrf.mxu0
    %v779 = vadd.f32 %v309, %v778
    %780 = vdwg.mxu0
    %781 = vmatprep.subr.bf16.mxu0 %v587
    %782 = vmatpush1.bf16.msra.mxu0 %v586
    %783 = vmatprep.subr.bf16.mxu0 %v579
    %784 = vmatpush1.bf16.msra.mxu0 %v578
    %785 = vmatprep.subr.bf16.mxu0 %v571
    %786 = vmatpush1.bf16.msra.mxu0 %v570
    %787 = vmatprep.subr.bf16.mxu0 %v563
    %788 = vmatpush1.bf16.msra.mxu0 %v562
    %789 = vmatprep.subr.bf16.mxu0 %v555
    %790 = vmatpush1.bf16.msra.mxu0 %v554
    %791 = vmatprep.subr.bf16.mxu0 %v547
    %792 = vmatpush1.bf16.msra.mxu0 %v546
    %793 = vmatprep.subr.bf16.mxu0 %v539
    %794 = vmatpush1.bf16.msra.mxu0 %v538
    %795 = vmatprep.subr.bf16.mxu0 %v531
    %796 = vmatpush1.bf16.msra.mxu0 %v530
    %797 = vmatprep.subr.bf16.mxu0 0
    %798 = vmatpush2.bf16.msra.mxu0 0
    %799 = vmatprep.subr.bf16.mxu0 0
    %800 = vmatpush2.bf16.msra.mxu0 0
    %801 = vmatprep.subr.bf16.mxu0 0
    %802 = vmatpush2.bf16.msra.mxu0 0
    %803 = vmatprep.subr.bf16.mxu0 0
    %804 = vmatpush2.bf16.msra.mxu0 0
    %805 = vmatprep.subr.bf16.mxu0 0
    %806 = vmatpush2.bf16.msra.mxu0 0
    %807 = vmatprep.subr.bf16.mxu0 0
    %808 = vmatpush2.bf16.msra.mxu0 0
    %809 = vmatprep.subr.bf16.mxu0 0
    %810 = vmatpush2.bf16.msra.mxu0 0
    %811 = vmatprep.subr.bf16.mxu0 0
    %812 = vmatpush2.bf16.msra.mxu0 0
    %813 = vmatprep.mubr.bf16.mxu0 0
    %814 = vmatmul.mubr.bf16.gmra.mxu0 %v330
    %v815 = vpop.f32.mrf.mxu0
    %v816 = vadd.f32 %v313, %v815
    %v817 = vpop.f32.mrf.mxu0
    %v818 = vadd.f32 %v317, %v817
    %v819 = vpop.f32.mrf.mxu0
    %v820 = vadd.f32 %v313, %v819
    %v821 = vpop.f32.mrf.mxu0
    %v822 = vadd.f32 %v317, %v821
    %823 = vdwg.mxu0
    %v824 = vtanh.pop %v687
    %v825 = vtanh.pop %v689
    %v826 = vtanh.pop %v730
    %v827 = vtanh.pop %v732
    %v828 = vtanh.pop %v773
    %v829 = vtanh.pop %v775
    %v830 = vtanh.pop %v816
    %v831 = vtanh.pop %v818
    %v832 = vtanh.pop %v691
    %v833 = vtanh.pop %v693
    %v834 = vtanh.pop %v734
    %v835 = vtanh.pop %v736
    %v836 = vtanh.pop %v777
    %v837 = vtanh.pop %v779
    %v838 = vtanh.pop %v820
    %v839 = vtanh.pop %v822
    %v840 = vpack.c.bf16 %v832, %v824
    %v841 = vpack.c.bf16 %v833, %v825
    %v842 = vpack.c.bf16 %v834, %v826
    %v843 = vpack.c.bf16 %v835, %v827
    %v844 = vpack.c.bf16 %v836, %v828
    %v845 = vpack.c.bf16 %v837, %v829
    %v846 = vpack.c.bf16 %v838, %v830
    %v847 = vpack.c.bf16 %v839, %v831
    %v848 = vld [vmem:[#allocation10] sm:$0xff]
    %v849 = vld [vmem:[#allocation10 + $0x8] sm:$0xff]
    %v850 = vld [vmem:[#allocation10 + $0x10] sm:$0xff]
    %v851 = vld [vmem:[#allocation10 + $0x18] sm:$0xff]
    %v852 = vld [vmem:[#allocation10 + $0x20] sm:$0xff]
    %v853 = vld [vmem:[#allocation10 + $0x28] sm:$0xff]
    %v854 = vld [vmem:[#allocation10 + $0x30] sm:$0xff]
    %v855 = vld [vmem:[#allocation10 + $0x38] sm:$0xff]
    %v856 = vld [vmem:[#allocation10 + $0x40] sm:$0xff]
    %v857 = vld [vmem:[#allocation10 + $0x48] sm:$0xff]
    %v858 = vld [vmem:[#allocation10 + $0x50] sm:$0xff]
    %v859 = vld [vmem:[#allocation10 + $0x58] sm:$0xff]
    %v860 = vld [vmem:[#allocation10 + $0x60] sm:$0xff]
    %v861 = vld [vmem:[#allocation10 + $0x68] sm:$0xff]
    %v862 = vld [vmem:[#allocation10 + $0x70] sm:$0xff]
    %v863 = vld [vmem:[#allocation10 + $0x78] sm:$0xff]
    %v864 = vld [vmem:[#allocation10 + $0x80] sm:$0xff]
    %v865 = vld [vmem:[#allocation10 + $0x88] sm:$0xff]
    %v866 = vld [vmem:[#allocation10 + $0x90] sm:$0xff]
    %v867 = vld [vmem:[#allocation10 + $0x98] sm:$0xff]
    %v868 = vld [vmem:[#allocation10 + $0xa0] sm:$0xff]
    %v869 = vld [vmem:[#allocation10 + $0xa8] sm:$0xff]
    %v870 = vld [vmem:[#allocation10 + $0xb0] sm:$0xff]
    %v871 = vld [vmem:[#allocation10 + $0xb8] sm:$0xff]
    %v872 = vld [vmem:[#allocation10 + $0xc0] sm:$0xff]
    %v873 = vld [vmem:[#allocation10 + $0xc8] sm:$0xff]
    %v874 = vld [vmem:[#allocation10 + $0xd0] sm:$0xff]
    %v875 = vld [vmem:[#allocation10 + $0xd8] sm:$0xff]
    %v876 = vld [vmem:[#allocation10 + $0xe0] sm:$0xff]
    %v877 = vld [vmem:[#allocation10 + $0xe8] sm:$0xff]
    %v878 = vld [vmem:[#allocation10 + $0xf0] sm:$0xff]
    %v879 = vld [vmem:[#allocation10 + $0xf8] sm:$0xff]
    %v880 = vld [vmem:[#allocation10 + $0x100] sm:$0xff]
    %v881 = vld [vmem:[#allocation10 + $0x108] sm:$0xff]
    %v882 = vld [vmem:[#allocation10 + $0x110] sm:$0xff]
    %v883 = vld [vmem:[#allocation10 + $0x118] sm:$0xff]
    %v884 = vld [vmem:[#allocation10 + $0x120] sm:$0xff]
    %v885 = vld [vmem:[#allocation10 + $0x128] sm:$0xff]
    %v886 = vld [vmem:[#allocation10 + $0x130] sm:$0xff]
    %v887 = vld [vmem:[#allocation10 + $0x138] sm:$0xff]
    %v888 = vld [vmem:[#allocation10 + $0x140] sm:$0xff]
    %v889 = vld [vmem:[#allocation10 + $0x148] sm:$0xff]
    %v890 = vld [vmem:[#allocation10 + $0x150] sm:$0xff]
    %v891 = vld [vmem:[#allocation10 + $0x158] sm:$0xff]
    %v892 = vld [vmem:[#allocation10 + $0x160] sm:$0xff]
    %v893 = vld [vmem:[#allocation10 + $0x168] sm:$0xff]
    %v894 = vld [vmem:[#allocation10 + $0x170] sm:$0xff]
    %v895 = vld [vmem:[#allocation10 + $0x178] sm:$0xff]
    %v896 = vld [vmem:[#allocation10 + $0x180] sm:$0xff]
    %v897 = vld [vmem:[#allocation10 + $0x188] sm:$0xff]
    %v898 = vld [vmem:[#allocation10 + $0x190] sm:$0xff]
    %v899 = vld [vmem:[#allocation10 + $0x198] sm:$0xff]
    %v900 = vld [vmem:[#allocation10 + $0x1a0] sm:$0xff]
    %v901 = vld [vmem:[#allocation10 + $0x1a8] sm:$0xff]
    %v902 = vld [vmem:[#allocation10 + $0x1b0] sm:$0xff]
    %v903 = vld [vmem:[#allocation10 + $0x1b8] sm:$0xff]
    %v904 = vld [vmem:[#allocation10 + $0x1c0] sm:$0xff]
    %v905 = vld [vmem:[#allocation10 + $0x1c8] sm:$0xff]
    %v906 = vld [vmem:[#allocation10 + $0x1d0] sm:$0xff]
    %v907 = vld [vmem:[#allocation10 + $0x1d8] sm:$0xff]
    %v908 = vld [vmem:[#allocation10 + $0x1e0] sm:$0xff]
    %v909 = vld [vmem:[#allocation10 + $0x1e8] sm:$0xff]
    %v910 = vld [vmem:[#allocation10 + $0x1f0] sm:$0xff]
    %v911 = vld [vmem:[#allocation10 + $0x1f8] sm:$0xff]
    %v912 = vld [vmem:[#allocation10 + $0x200] sm:$0xff]
    %v913 = vld [vmem:[#allocation10 + $0x208] sm:$0xff]
    %v914 = vld [vmem:[#allocation10 + $0x210] sm:$0xff]
    %v915 = vld [vmem:[#allocation10 + $0x218] sm:$0xff]
    %v916 = vld [vmem:[#allocation10 + $0x220] sm:$0xff]
    %v917 = vld [vmem:[#allocation10 + $0x228] sm:$0xff]
    %v918 = vld [vmem:[#allocation10 + $0x230] sm:$0xff]
    %v919 = vld [vmem:[#allocation10 + $0x238] sm:$0xff]
    %v920 = vld [vmem:[#allocation10 + $0x240] sm:$0xff]
    %v921 = vld [vmem:[#allocation10 + $0x248] sm:$0xff]
    %v922 = vld [vmem:[#allocation10 + $0x250] sm:$0xff]
    %v923 = vld [vmem:[#allocation10 + $0x258] sm:$0xff]
    %v924 = vld [vmem:[#allocation10 + $0x260] sm:$0xff]
    %v925 = vld [vmem:[#allocation10 + $0x268] sm:$0xff]
    %v926 = vld [vmem:[#allocation10 + $0x270] sm:$0xff]
    %v927 = vld [vmem:[#allocation10 + $0x278] sm:$0xff]
    %v928 = vld [vmem:[#allocation10 + $0x280] sm:$0xff]
    %v929 = vld [vmem:[#allocation10 + $0x288] sm:$0xff]
    %v930 = vld [vmem:[#allocation10 + $0x290] sm:$0xff]
    %v931 = vld [vmem:[#allocation10 + $0x298] sm:$0xff]
    %v932 = vld [vmem:[#allocation10 + $0x2a0] sm:$0xff]
    %v933 = vld [vmem:[#allocation10 + $0x2a8] sm:$0xff]
    %v934 = vld [vmem:[#allocation10 + $0x2b0] sm:$0xff]
    %v935 = vld [vmem:[#allocation10 + $0x2b8] sm:$0xff]
    %v936 = vld [vmem:[#allocation10 + $0x2c0] sm:$0xff]
    %v937 = vld [vmem:[#allocation10 + $0x2c8] sm:$0xff]
    %v938 = vld [vmem:[#allocation10 + $0x2d0] sm:$0xff]
    %v939 = vld [vmem:[#allocation10 + $0x2d8] sm:$0xff]
    %v940 = vld [vmem:[#allocation10 + $0x2e0] sm:$0xff]
    %v941 = vld [vmem:[#allocation10 + $0x2e8] sm:$0xff]
    %v942 = vld [vmem:[#allocation10 + $0x2f0] sm:$0xff]
    %v943 = vld [vmem:[#allocation10 + $0x2f8] sm:$0xff]
    %v944 = vld [vmem:[#allocation10 + $0x300] sm:$0xff]
    %v945 = vld [vmem:[#allocation10 + $0x308] sm:$0xff]
    %v946 = vld [vmem:[#allocation10 + $0x310] sm:$0xff]
    %v947 = vld [vmem:[#allocation10 + $0x318] sm:$0xff]
    %v948 = vld [vmem:[#allocation10 + $0x320] sm:$0xff]
    %v949 = vld [vmem:[#allocation10 + $0x328] sm:$0xff]
    %v950 = vld [vmem:[#allocation10 + $0x330] sm:$0xff]
    %v951 = vld [vmem:[#allocation10 + $0x338] sm:$0xff]
    %v952 = vld [vmem:[#allocation10 + $0x340] sm:$0xff]
    %v953 = vld [vmem:[#allocation10 + $0x348] sm:$0xff]
    %v954 = vld [vmem:[#allocation10 + $0x350] sm:$0xff]
    %v955 = vld [vmem:[#allocation10 + $0x358] sm:$0xff]
    %v956 = vld [vmem:[#allocation10 + $0x360] sm:$0xff]
    %v957 = vld [vmem:[#allocation10 + $0x368] sm:$0xff]
    %v958 = vld [vmem:[#allocation10 + $0x370] sm:$0xff]
    %v959 = vld [vmem:[#allocation10 + $0x378] sm:$0xff]
    %v960 = vld [vmem:[#allocation10 + $0x380] sm:$0xff]
    %v961 = vld [vmem:[#allocation10 + $0x388] sm:$0xff]
    %v962 = vld [vmem:[#allocation10 + $0x390] sm:$0xff]
    %v963 = vld [vmem:[#allocation10 + $0x398] sm:$0xff]
    %v964 = vld [vmem:[#allocation10 + $0x3a0] sm:$0xff]
    %v965 = vld [vmem:[#allocation10 + $0x3a8] sm:$0xff]
    %v966 = vld [vmem:[#allocation10 + $0x3b0] sm:$0xff]
    %v967 = vld [vmem:[#allocation10 + $0x3b8] sm:$0xff]
    %v968 = vld [vmem:[#allocation10 + $0x3c0] sm:$0xff]
    %v969 = vld [vmem:[#allocation10 + $0x3c8] sm:$0xff]
    %v970 = vld [vmem:[#allocation10 + $0x3d0] sm:$0xff]
    %v971 = vld [vmem:[#allocation10 + $0x3d8] sm:$0xff]
    %v972 = vld [vmem:[#allocation10 + $0x3e0] sm:$0xff]
    %v973 = vld [vmem:[#allocation10 + $0x3e8] sm:$0xff]
    %v974 = vld [vmem:[#allocation10 + $0x3f0] sm:$0xff]
    %v975 = vld [vmem:[#allocation10 + $0x3f8] sm:$0xff]
    %v976 = vld [vmem:[#allocation10 + $0x400] sm:$0xff]
    %v977 = vld [vmem:[#allocation10 + $0x408] sm:$0xff]
    %v978 = vld [vmem:[#allocation10 + $0x410] sm:$0xff]
    %v979 = vld [vmem:[#allocation10 + $0x418] sm:$0xff]
    %v980 = vld [vmem:[#allocation10 + $0x420] sm:$0xff]
    %v981 = vld [vmem:[#allocation10 + $0x428] sm:$0xff]
    %v982 = vld [vmem:[#allocation10 + $0x430] sm:$0xff]
    %v983 = vld [vmem:[#allocation10 + $0x438] sm:$0xff]
    %v984 = vld [vmem:[#allocation10 + $0x440] sm:$0xff]
    %v985 = vld [vmem:[#allocation10 + $0x448] sm:$0xff]
    %v986 = vld [vmem:[#allocation10 + $0x450] sm:$0xff]
    %v987 = vld [vmem:[#allocation10 + $0x458] sm:$0xff]
    %v988 = vld [vmem:[#allocation10 + $0x460] sm:$0xff]
    %v989 = vld [vmem:[#allocation10 + $0x468] sm:$0xff]
    %v990 = vld [vmem:[#allocation10 + $0x470] sm:$0xff]
    %v991 = vld [vmem:[#allocation10 + $0x478] sm:$0xff]
    %v992 = vld [vmem:[#allocation10 + $0x480] sm:$0xff]
    %v993 = vld [vmem:[#allocation10 + $0x488] sm:$0xff]
    %v994 = vld [vmem:[#allocation10 + $0x490] sm:$0xff]
    %v995 = vld [vmem:[#allocation10 + $0x498] sm:$0xff]
    %v996 = vld [vmem:[#allocation10 + $0x4a0] sm:$0xff]
    %v997 = vld [vmem:[#allocation10 + $0x4a8] sm:$0xff]
    %v998 = vld [vmem:[#allocation10 + $0x4b0] sm:$0xff]
    %v999 = vld [vmem:[#allocation10 + $0x4b8] sm:$0xff]
    %v1000 = vld [vmem:[#allocation10 + $0x4c0] sm:$0xff]
    %v1001 = vld [vmem:[#allocation10 + $0x4c8] sm:$0xff]
    %v1002 = vld [vmem:[#allocation10 + $0x4d0] sm:$0xff]
    %v1003 = vld [vmem:[#allocation10 + $0x4d8] sm:$0xff]
    %v1004 = vld [vmem:[#allocation10 + $0x4e0] sm:$0xff]
    %v1005 = vld [vmem:[#allocation10 + $0x4e8] sm:$0xff]
    %v1006 = vld [vmem:[#allocation10 + $0x4f0] sm:$0xff]
    %v1007 = vld [vmem:[#allocation10 + $0x4f8] sm:$0xff]
    %v1008 = vld [vmem:[#allocation10 + $0x500] sm:$0xff]
    %v1009 = vld [vmem:[#allocation10 + $0x508] sm:$0xff]
    %v1010 = vld [vmem:[#allocation10 + $0x510] sm:$0xff]
    %v1011 = vld [vmem:[#allocation10 + $0x518] sm:$0xff]
    %v1012 = vld [vmem:[#allocation10 + $0x520] sm:$0xff]
    %v1013 = vld [vmem:[#allocation10 + $0x528] sm:$0xff]
    %v1014 = vld [vmem:[#allocation10 + $0x530] sm:$0xff]
    %v1015 = vld [vmem:[#allocation10 + $0x538] sm:$0xff]
    %v1016 = vld [vmem:[#allocation10 + $0x540] sm:$0xff]
    %v1017 = vld [vmem:[#allocation10 + $0x548] sm:$0xff]
    %v1018 = vld [vmem:[#allocation10 + $0x550] sm:$0xff]
    %v1019 = vld [vmem:[#allocation10 + $0x558] sm:$0xff]
    %v1020 = vld [vmem:[#allocation10 + $0x560] sm:$0xff]
    %v1021 = vld [vmem:[#allocation10 + $0x568] sm:$0xff]
    %v1022 = vld [vmem:[#allocation10 + $0x570] sm:$0xff]
    %v1023 = vld [vmem:[#allocation10 + $0x578] sm:$0xff]
    %v1024 = vld [vmem:[#allocation10 + $0x580] sm:$0xff]
    %v1025 = vld [vmem:[#allocation10 + $0x588] sm:$0xff]
    %v1026 = vld [vmem:[#allocation10 + $0x590] sm:$0xff]
    %v1027 = vld [vmem:[#allocation10 + $0x598] sm:$0xff]
    %v1028 = vld [vmem:[#allocation10 + $0x5a0] sm:$0xff]
    %v1029 = vld [vmem:[#allocation10 + $0x5a8] sm:$0xff]
    %v1030 = vld [vmem:[#allocation10 + $0x5b0] sm:$0xff]
    %v1031 = vld [vmem:[#allocation10 + $0x5b8] sm:$0xff]
    %v1032 = vld [vmem:[#allocation10 + $0x5c0] sm:$0xff]
    %v1033 = vld [vmem:[#allocation10 + $0x5c8] sm:$0xff]
    %v1034 = vld [vmem:[#allocation10 + $0x5d0] sm:$0xff]
    %v1035 = vld [vmem:[#allocation10 + $0x5d8] sm:$0xff]
    %v1036 = vld [vmem:[#allocation10 + $0x5e0] sm:$0xff]
    %v1037 = vld [vmem:[#allocation10 + $0x5e8] sm:$0xff]
    %v1038 = vld [vmem:[#allocation10 + $0x5f0] sm:$0xff]
    %v1039 = vld [vmem:[#allocation10 + $0x5f8] sm:$0xff]
    %v1040 = vld [vmem:[#allocation10 + $0x600] sm:$0xff]
    %v1041 = vld [vmem:[#allocation10 + $0x608] sm:$0xff]
    %v1042 = vld [vmem:[#allocation10 + $0x610] sm:$0xff]
    %v1043 = vld [vmem:[#allocation10 + $0x618] sm:$0xff]
    %v1044 = vld [vmem:[#allocation10 + $0x620] sm:$0xff]
    %v1045 = vld [vmem:[#allocation10 + $0x628] sm:$0xff]
    %v1046 = vld [vmem:[#allocation10 + $0x630] sm:$0xff]
    %v1047 = vld [vmem:[#allocation10 + $0x638] sm:$0xff]
    %v1048 = vld [vmem:[#allocation10 + $0x640] sm:$0xff]
    %v1049 = vld [vmem:[#allocation10 + $0x648] sm:$0xff]
    %v1050 = vld [vmem:[#allocation10 + $0x650] sm:$0xff]
    %v1051 = vld [vmem:[#allocation10 + $0x658] sm:$0xff]
    %v1052 = vld [vmem:[#allocation10 + $0x660] sm:$0xff]
    %v1053 = vld [vmem:[#allocation10 + $0x668] sm:$0xff]
    %v1054 = vld [vmem:[#allocation10 + $0x670] sm:$0xff]
    %v1055 = vld [vmem:[#allocation10 + $0x678] sm:$0xff]
    %v1056 = vld [vmem:[#allocation10 + $0x680] sm:$0xff]
    %v1057 = vld [vmem:[#allocation10 + $0x688] sm:$0xff]
    %v1058 = vld [vmem:[#allocation10 + $0x690] sm:$0xff]
    %v1059 = vld [vmem:[#allocation10 + $0x698] sm:$0xff]
    %v1060 = vld [vmem:[#allocation10 + $0x6a0] sm:$0xff]
    %v1061 = vld [vmem:[#allocation10 + $0x6a8] sm:$0xff]
    %v1062 = vld [vmem:[#allocation10 + $0x6b0] sm:$0xff]
    %v1063 = vld [vmem:[#allocation10 + $0x6b8] sm:$0xff]
    %v1064 = vld [vmem:[#allocation10 + $0x6c0] sm:$0xff]
    %v1065 = vld [vmem:[#allocation10 + $0x6c8] sm:$0xff]
    %v1066 = vld [vmem:[#allocation10 + $0x6d0] sm:$0xff]
    %v1067 = vld [vmem:[#allocation10 + $0x6d8] sm:$0xff]
    %v1068 = vld [vmem:[#allocation10 + $0x6e0] sm:$0xff]
    %v1069 = vld [vmem:[#allocation10 + $0x6e8] sm:$0xff]
    %v1070 = vld [vmem:[#allocation10 + $0x6f0] sm:$0xff]
    %v1071 = vld [vmem:[#allocation10 + $0x6f8] sm:$0xff]
    %v1072 = vld [vmem:[#allocation10 + $0x700] sm:$0xff]
    %v1073 = vld [vmem:[#allocation10 + $0x708] sm:$0xff]
    %v1074 = vld [vmem:[#allocation10 + $0x710] sm:$0xff]
    %v1075 = vld [vmem:[#allocation10 + $0x718] sm:$0xff]
    %v1076 = vld [vmem:[#allocation10 + $0x720] sm:$0xff]
    %v1077 = vld [vmem:[#allocation10 + $0x728] sm:$0xff]
    %v1078 = vld [vmem:[#allocation10 + $0x730] sm:$0xff]
    %v1079 = vld [vmem:[#allocation10 + $0x738] sm:$0xff]
    %v1080 = vld [vmem:[#allocation10 + $0x740] sm:$0xff]
    %v1081 = vld [vmem:[#allocation10 + $0x748] sm:$0xff]
    %v1082 = vld [vmem:[#allocation10 + $0x750] sm:$0xff]
    %v1083 = vld [vmem:[#allocation10 + $0x758] sm:$0xff]
    %v1084 = vld [vmem:[#allocation10 + $0x760] sm:$0xff]
    %v1085 = vld [vmem:[#allocation10 + $0x768] sm:$0xff]
    %v1086 = vld [vmem:[#allocation10 + $0x770] sm:$0xff]
    %v1087 = vld [vmem:[#allocation10 + $0x778] sm:$0xff]
    %v1088 = vld [vmem:[#allocation10 + $0x780] sm:$0xff]
    %v1089 = vld [vmem:[#allocation10 + $0x788] sm:$0xff]
    %v1090 = vld [vmem:[#allocation10 + $0x790] sm:$0xff]
    %v1091 = vld [vmem:[#allocation10 + $0x798] sm:$0xff]
    %v1092 = vld [vmem:[#allocation10 + $0x7a0] sm:$0xff]
    %v1093 = vld [vmem:[#allocation10 + $0x7a8] sm:$0xff]
    %v1094 = vld [vmem:[#allocation10 + $0x7b0] sm:$0xff]
    %v1095 = vld [vmem:[#allocation10 + $0x7b8] sm:$0xff]
    %v1096 = vld [vmem:[#allocation10 + $0x7c0] sm:$0xff]
    %v1097 = vld [vmem:[#allocation10 + $0x7c8] sm:$0xff]
    %v1098 = vld [vmem:[#allocation10 + $0x7d0] sm:$0xff]
    %v1099 = vld [vmem:[#allocation10 + $0x7d8] sm:$0xff]
    %v1100 = vld [vmem:[#allocation10 + $0x7e0] sm:$0xff]
    %v1101 = vld [vmem:[#allocation10 + $0x7e8] sm:$0xff]
    %v1102 = vld [vmem:[#allocation10 + $0x7f0] sm:$0xff]
    %v1103 = vld [vmem:[#allocation10 + $0x7f8] sm:$0xff]
    %v1104 = vld [vmem:[%s5] sm:$0xf]
    %v1106 = vlaneseq
    %v1107 = vshrl.u32 %v1106, 7
    %v1108 = vsub.s32 0, %v1107
    %v1109 = vrot.slane %v1104, %v1108
    %v1110 = vlaneseq
    %v1111 = vshrl.u32 %v1110, 7
    %v1112 = vsub.s32 1, %v1111
    %v1113 = vrot.slane %v1104, %v1112
    %v1114 = vlaneseq
    %v1115 = vshrl.u32 %v1114, 7
    %v1116 = vsub.s32 2, %v1115
    %v1117 = vrot.slane %v1104, %v1116
    %v1118 = vlaneseq
    %v1119 = vshrl.u32 %v1118, 7
    %v1120 = vsub.s32 3, %v1119
    %v1121 = vrot.slane %v1104, %v1120
    %v1382 = vunpack.c.l.b16 %v848
    %v1383 = vunpack.c.h.b16 %v848
    %v1384 = vunpack.c.l.b16 %v849
    %v1385 = vunpack.c.h.b16 %v849
    %v1386 = vunpack.c.l.b16 %v850
    %v1387 = vunpack.c.h.b16 %v850
    %v1388 = vunpack.c.l.b16 %v851
    %v1389 = vunpack.c.h.b16 %v851
    %v1390 = vunpack.c.l.b16 %v852
    %v1391 = vunpack.c.h.b16 %v852
    %v1392 = vunpack.c.l.b16 %v853
    %v1393 = vunpack.c.h.b16 %v853
    %v1394 = vunpack.c.l.b16 %v854
    %v1395 = vunpack.c.h.b16 %v854
    %v1396 = vunpack.c.l.b16 %v855
    %v1397 = vunpack.c.h.b16 %v855
    %v1398 = vunpack.c.l.b16 %v856
    %v1399 = vunpack.c.h.b16 %v856
    %v1400 = vunpack.c.l.b16 %v857
    %v1401 = vunpack.c.h.b16 %v857
    %v1402 = vunpack.c.l.b16 %v858
    %v1403 = vunpack.c.h.b16 %v858
    %v1404 = vunpack.c.l.b16 %v859
    %v1405 = vunpack.c.h.b16 %v859
    %v1406 = vunpack.c.l.b16 %v860
    %v1407 = vunpack.c.h.b16 %v860
    %v1408 = vunpack.c.l.b16 %v861
    %v1409 = vunpack.c.h.b16 %v861
    %v1410 = vunpack.c.l.b16 %v862
    %v1411 = vunpack.c.h.b16 %v862
    %v1412 = vunpack.c.l.b16 %v863
    %v1413 = vunpack.c.h.b16 %v863
    %v1414 = vunpack.c.l.b16 %v864
    %v1415 = vunpack.c.h.b16 %v864
    %v1416 = vunpack.c.l.b16 %v865
    %v1417 = vunpack.c.h.b16 %v865
    %v1418 = vunpack.c.l.b16 %v866
    %v1419 = vunpack.c.h.b16 %v866
    %v1420 = vunpack.c.l.b16 %v867
    %v1421 = vunpack.c.h.b16 %v867
    %v1422 = vunpack.c.l.b16 %v868
    %v1423 = vunpack.c.h.b16 %v868
    %v1424 = vunpack.c.l.b16 %v869
    %v1425 = vunpack.c.h.b16 %v869
    %v1426 = vunpack.c.l.b16 %v870
    %v1427 = vunpack.c.h.b16 %v870
    %v1428 = vunpack.c.l.b16 %v871
    %v1429 = vunpack.c.h.b16 %v871
    %v1430 = vunpack.c.l.b16 %v872
    %v1431 = vunpack.c.h.b16 %v872
    %v1432 = vunpack.c.l.b16 %v873
    %v1433 = vunpack.c.h.b16 %v873
    %v1434 = vunpack.c.l.b16 %v874
    %v1435 = vunpack.c.h.b16 %v874
    %v1436 = vunpack.c.l.b16 %v875
    %v1437 = vunpack.c.h.b16 %v875
    %v1438 = vunpack.c.l.b16 %v876
    %v1439 = vunpack.c.h.b16 %v876
    %v1440 = vunpack.c.l.b16 %v877
    %v1441 = vunpack.c.h.b16 %v877
    %v1442 = vunpack.c.l.b16 %v878
    %v1443 = vunpack.c.h.b16 %v878
    %v1444 = vunpack.c.l.b16 %v879
    %v1445 = vunpack.c.h.b16 %v879
    %v1446 = vunpack.c.l.b16 %v880
    %v1447 = vunpack.c.h.b16 %v880
    %v1448 = vunpack.c.l.b16 %v881
    %v1449 = vunpack.c.h.b16 %v881
    %v1450 = vunpack.c.l.b16 %v882
    %v1451 = vunpack.c.h.b16 %v882
    %v1452 = vunpack.c.l.b16 %v883
    %v1453 = vunpack.c.h.b16 %v883
    %v1454 = vunpack.c.l.b16 %v884
    %v1455 = vunpack.c.h.b16 %v884
    %v1456 = vunpack.c.l.b16 %v885
    %v1457 = vunpack.c.h.b16 %v885
    %v1458 = vunpack.c.l.b16 %v886
    %v1459 = vunpack.c.h.b16 %v886
    %v1460 = vunpack.c.l.b16 %v887
    %v1461 = vunpack.c.h.b16 %v887
    %v1462 = vunpack.c.l.b16 %v888
    %v1463 = vunpack.c.h.b16 %v888
    %v1464 = vunpack.c.l.b16 %v889
    %v1465 = vunpack.c.h.b16 %v889
    %v1466 = vunpack.c.l.b16 %v890
    %v1467 = vunpack.c.h.b16 %v890
    %v1468 = vunpack.c.l.b16 %v891
    %v1469 = vunpack.c.h.b16 %v891
    %v1470 = vunpack.c.l.b16 %v892
    %v1471 = vunpack.c.h.b16 %v892
    %v1472 = vunpack.c.l.b16 %v893
    %v1473 = vunpack.c.h.b16 %v893
    %v1474 = vunpack.c.l.b16 %v894
    %v1475 = vunpack.c.h.b16 %v894
    %v1476 = vunpack.c.l.b16 %v895
    %v1477 = vunpack.c.h.b16 %v895
    %v1478 = vunpack.c.l.b16 %v896
    %v1479 = vunpack.c.h.b16 %v896
    %v1480 = vunpack.c.l.b16 %v897
    %v1481 = vunpack.c.h.b16 %v897
    %v1482 = vunpack.c.l.b16 %v898
    %v1483 = vunpack.c.h.b16 %v898
    %v1484 = vunpack.c.l.b16 %v899
    %v1485 = vunpack.c.h.b16 %v899
    %v1486 = vunpack.c.l.b16 %v900
    %v1487 = vunpack.c.h.b16 %v900
    %v1488 = vunpack.c.l.b16 %v901
    %v1489 = vunpack.c.h.b16 %v901
    %v1490 = vunpack.c.l.b16 %v902
    %v1491 = vunpack.c.h.b16 %v902
    %v1492 = vunpack.c.l.b16 %v903
    %v1493 = vunpack.c.h.b16 %v903
    %v1494 = vunpack.c.l.b16 %v904
    %v1495 = vunpack.c.h.b16 %v904
    %v1496 = vunpack.c.l.b16 %v905
    %v1497 = vunpack.c.h.b16 %v905
    %v1498 = vunpack.c.l.b16 %v906
    %v1499 = vunpack.c.h.b16 %v906
    %v1500 = vunpack.c.l.b16 %v907
    %v1501 = vunpack.c.h.b16 %v907
    %v1502 = vunpack.c.l.b16 %v908
    %v1503 = vunpack.c.h.b16 %v908
    %v1504 = vunpack.c.l.b16 %v909
    %v1505 = vunpack.c.h.b16 %v909
    %v1506 = vunpack.c.l.b16 %v910
    %v1507 = vunpack.c.h.b16 %v910
    %v1508 = vunpack.c.l.b16 %v911
    %v1509 = vunpack.c.h.b16 %v911
    %v1510 = vunpack.c.l.b16 %v912
    %v1511 = vunpack.c.h.b16 %v912
    %v1512 = vunpack.c.l.b16 %v913
    %v1513 = vunpack.c.h.b16 %v913
    %v1514 = vunpack.c.l.b16 %v914
    %v1515 = vunpack.c.h.b16 %v914
    %v1516 = vunpack.c.l.b16 %v915
    %v1517 = vunpack.c.h.b16 %v915
    %v1518 = vunpack.c.l.b16 %v916
    %v1519 = vunpack.c.h.b16 %v916
    %v1520 = vunpack.c.l.b16 %v917
    %v1521 = vunpack.c.h.b16 %v917
    %v1522 = vunpack.c.l.b16 %v918
    %v1523 = vunpack.c.h.b16 %v918
    %v1524 = vunpack.c.l.b16 %v919
    %v1525 = vunpack.c.h.b16 %v919
    %v1526 = vunpack.c.l.b16 %v920
    %v1527 = vunpack.c.h.b16 %v920
    %v1528 = vunpack.c.l.b16 %v921
    %v1529 = vunpack.c.h.b16 %v921
    %v1530 = vunpack.c.l.b16 %v922
    %v1531 = vunpack.c.h.b16 %v922
    %v1532 = vunpack.c.l.b16 %v923
    %v1533 = vunpack.c.h.b16 %v923
    %v1534 = vunpack.c.l.b16 %v924
    %v1535 = vunpack.c.h.b16 %v924
    %v1536 = vunpack.c.l.b16 %v925
    %v1537 = vunpack.c.h.b16 %v925
    %v1538 = vunpack.c.l.b16 %v926
    %v1539 = vunpack.c.h.b16 %v926
    %v1540 = vunpack.c.l.b16 %v927
    %v1541 = vunpack.c.h.b16 %v927
    %v1542 = vunpack.c.l.b16 %v928
    %v1543 = vunpack.c.h.b16 %v928
    %v1544 = vunpack.c.l.b16 %v929
    %v1545 = vunpack.c.h.b16 %v929
    %v1546 = vunpack.c.l.b16 %v930
    %v1547 = vunpack.c.h.b16 %v930
    %v1548 = vunpack.c.l.b16 %v931
    %v1549 = vunpack.c.h.b16 %v931
    %v1550 = vunpack.c.l.b16 %v932
    %v1551 = vunpack.c.h.b16 %v932
    %v1552 = vunpack.c.l.b16 %v933
    %v1553 = vunpack.c.h.b16 %v933
    %v1554 = vunpack.c.l.b16 %v934
    %v1555 = vunpack.c.h.b16 %v934
    %v1556 = vunpack.c.l.b16 %v935
    %v1557 = vunpack.c.h.b16 %v935
    %v1558 = vunpack.c.l.b16 %v936
    %v1559 = vunpack.c.h.b16 %v936
    %v1560 = vunpack.c.l.b16 %v937
    %v1561 = vunpack.c.h.b16 %v937
    %v1562 = vunpack.c.l.b16 %v938
    %v1563 = vunpack.c.h.b16 %v938
    %v1564 = vunpack.c.l.b16 %v939
    %v1565 = vunpack.c.h.b16 %v939
    %v1566 = vunpack.c.l.b16 %v940
    %v1567 = vunpack.c.h.b16 %v940
    %v1568 = vunpack.c.l.b16 %v941
    %v1569 = vunpack.c.h.b16 %v941
    %v1570 = vunpack.c.l.b16 %v942
    %v1571 = vunpack.c.h.b16 %v942
    %v1572 = vunpack.c.l.b16 %v943
    %v1573 = vunpack.c.h.b16 %v943
    %v1574 = vunpack.c.l.b16 %v944
    %v1575 = vunpack.c.h.b16 %v944
    %v1576 = vunpack.c.l.b16 %v945
    %v1577 = vunpack.c.h.b16 %v945
    %v1578 = vunpack.c.l.b16 %v946
    %v1579 = vunpack.c.h.b16 %v946
    %v1580 = vunpack.c.l.b16 %v947
    %v1581 = vunpack.c.h.b16 %v947
    %v1582 = vunpack.c.l.b16 %v948
    %v1583 = vunpack.c.h.b16 %v948
    %v1584 = vunpack.c.l.b16 %v949
    %v1585 = vunpack.c.h.b16 %v949
    %v1586 = vunpack.c.l.b16 %v950
    %v1587 = vunpack.c.h.b16 %v950
    %v1588 = vunpack.c.l.b16 %v951
    %v1589 = vunpack.c.h.b16 %v951
    %v1590 = vunpack.c.l.b16 %v952
    %v1591 = vunpack.c.h.b16 %v952
    %v1592 = vunpack.c.l.b16 %v953
    %v1593 = vunpack.c.h.b16 %v953
    %v1594 = vunpack.c.l.b16 %v954
    %v1595 = vunpack.c.h.b16 %v954
    %v1596 = vunpack.c.l.b16 %v955
    %v1597 = vunpack.c.h.b16 %v955
    %v1598 = vunpack.c.l.b16 %v956
    %v1599 = vunpack.c.h.b16 %v956
    %v1600 = vunpack.c.l.b16 %v957
    %v1601 = vunpack.c.h.b16 %v957
    %v1602 = vunpack.c.l.b16 %v958
    %v1603 = vunpack.c.h.b16 %v958
    %v1604 = vunpack.c.l.b16 %v959
    %v1605 = vunpack.c.h.b16 %v959
    %v1606 = vunpack.c.l.b16 %v960
    %v1607 = vunpack.c.h.b16 %v960
    %v1608 = vunpack.c.l.b16 %v961
    %v1609 = vunpack.c.h.b16 %v961
    %v1610 = vunpack.c.l.b16 %v962
    %v1611 = vunpack.c.h.b16 %v962
    %v1612 = vunpack.c.l.b16 %v963
    %v1613 = vunpack.c.h.b16 %v963
    %v1614 = vunpack.c.l.b16 %v964
    %v1615 = vunpack.c.h.b16 %v964
    %v1616 = vunpack.c.l.b16 %v965
    %v1617 = vunpack.c.h.b16 %v965
    %v1618 = vunpack.c.l.b16 %v966
    %v1619 = vunpack.c.h.b16 %v966
    %v1620 = vunpack.c.l.b16 %v967
    %v1621 = vunpack.c.h.b16 %v967
    %v1622 = vunpack.c.l.b16 %v968
    %v1623 = vunpack.c.h.b16 %v968
    %v1624 = vunpack.c.l.b16 %v969
    %v1625 = vunpack.c.h.b16 %v969
    %v1626 = vunpack.c.l.b16 %v970
    %v1627 = vunpack.c.h.b16 %v970
    %v1628 = vunpack.c.l.b16 %v971
    %v1629 = vunpack.c.h.b16 %v971
    %v1630 = vunpack.c.l.b16 %v972
    %v1631 = vunpack.c.h.b16 %v972
    %v1632 = vunpack.c.l.b16 %v973
    %v1633 = vunpack.c.h.b16 %v973
    %v1634 = vunpack.c.l.b16 %v974
    %v1635 = vunpack.c.h.b16 %v974
    %v1636 = vunpack.c.l.b16 %v975
    %v1637 = vunpack.c.h.b16 %v975
    %v1638 = vunpack.c.l.b16 %v976
    %v1639 = vunpack.c.h.b16 %v976
    %v1640 = vunpack.c.l.b16 %v977
    %v1641 = vunpack.c.h.b16 %v977
    %v1642 = vunpack.c.l.b16 %v978
    %v1643 = vunpack.c.h.b16 %v978
    %v1644 = vunpack.c.l.b16 %v979
    %v1645 = vunpack.c.h.b16 %v979
    %v1646 = vunpack.c.l.b16 %v980
    %v1647 = vunpack.c.h.b16 %v980
    %v1648 = vunpack.c.l.b16 %v981
    %v1649 = vunpack.c.h.b16 %v981
    %v1650 = vunpack.c.l.b16 %v982
    %v1651 = vunpack.c.h.b16 %v982
    %v1652 = vunpack.c.l.b16 %v983
    %v1653 = vunpack.c.h.b16 %v983
    %v1654 = vunpack.c.l.b16 %v984
    %v1655 = vunpack.c.h.b16 %v984
    %v1656 = vunpack.c.l.b16 %v985
    %v1657 = vunpack.c.h.b16 %v985
    %v1658 = vunpack.c.l.b16 %v986
    %v1659 = vunpack.c.h.b16 %v986
    %v1660 = vunpack.c.l.b16 %v987
    %v1661 = vunpack.c.h.b16 %v987
    %v1662 = vunpack.c.l.b16 %v988
    %v1663 = vunpack.c.h.b16 %v988
    %v1664 = vunpack.c.l.b16 %v989
    %v1665 = vunpack.c.h.b16 %v989
    %v1666 = vunpack.c.l.b16 %v990
    %v1667 = vunpack.c.h.b16 %v990
    %v1668 = vunpack.c.l.b16 %v991
    %v1669 = vunpack.c.h.b16 %v991
    %v1670 = vunpack.c.l.b16 %v992
    %v1671 = vunpack.c.h.b16 %v992
    %v1672 = vunpack.c.l.b16 %v993
    %v1673 = vunpack.c.h.b16 %v993
    %v1674 = vunpack.c.l.b16 %v994
    %v1675 = vunpack.c.h.b16 %v994
    %v1676 = vunpack.c.l.b16 %v995
    %v1677 = vunpack.c.h.b16 %v995
    %v1678 = vunpack.c.l.b16 %v996
    %v1679 = vunpack.c.h.b16 %v996
    %v1680 = vunpack.c.l.b16 %v997
    %v1681 = vunpack.c.h.b16 %v997
    %v1682 = vunpack.c.l.b16 %v998
    %v1683 = vunpack.c.h.b16 %v998
    %v1684 = vunpack.c.l.b16 %v999
    %v1685 = vunpack.c.h.b16 %v999
    %v1686 = vunpack.c.l.b16 %v1000
    %v1687 = vunpack.c.h.b16 %v1000
    %v1688 = vunpack.c.l.b16 %v1001
    %v1689 = vunpack.c.h.b16 %v1001
    %v1690 = vunpack.c.l.b16 %v1002
    %v1691 = vunpack.c.h.b16 %v1002
    %v1692 = vunpack.c.l.b16 %v1003
    %v1693 = vunpack.c.h.b16 %v1003
    %v1694 = vunpack.c.l.b16 %v1004
    %v1695 = vunpack.c.h.b16 %v1004
    %v1696 = vunpack.c.l.b16 %v1005
    %v1697 = vunpack.c.h.b16 %v1005
    %v1698 = vunpack.c.l.b16 %v1006
    %v1699 = vunpack.c.h.b16 %v1006
    %v1700 = vunpack.c.l.b16 %v1007
    %v1701 = vunpack.c.h.b16 %v1007
    %v1702 = vunpack.c.l.b16 %v1008
    %v1703 = vunpack.c.h.b16 %v1008
    %v1704 = vunpack.c.l.b16 %v1009
    %v1705 = vunpack.c.h.b16 %v1009
    %v1706 = vunpack.c.l.b16 %v1010
    %v1707 = vunpack.c.h.b16 %v1010
    %v1708 = vunpack.c.l.b16 %v1011
    %v1709 = vunpack.c.h.b16 %v1011
    %v1710 = vunpack.c.l.b16 %v1012
    %v1711 = vunpack.c.h.b16 %v1012
    %v1712 = vunpack.c.l.b16 %v1013
    %v1713 = vunpack.c.h.b16 %v1013
    %v1714 = vunpack.c.l.b16 %v1014
    %v1715 = vunpack.c.h.b16 %v1014
    %v1716 = vunpack.c.l.b16 %v1015
    %v1717 = vunpack.c.h.b16 %v1015
    %v1718 = vunpack.c.l.b16 %v1016
    %v1719 = vunpack.c.h.b16 %v1016
    %v1720 = vunpack.c.l.b16 %v1017
    %v1721 = vunpack.c.h.b16 %v1017
    %v1722 = vunpack.c.l.b16 %v1018
    %v1723 = vunpack.c.h.b16 %v1018
    %v1724 = vunpack.c.l.b16 %v1019
    %v1725 = vunpack.c.h.b16 %v1019
    %v1726 = vunpack.c.l.b16 %v1020
    %v1727 = vunpack.c.h.b16 %v1020
    %v1728 = vunpack.c.l.b16 %v1021
    %v1729 = vunpack.c.h.b16 %v1021
    %v1730 = vunpack.c.l.b16 %v1022
    %v1731 = vunpack.c.h.b16 %v1022
    %v1732 = vunpack.c.l.b16 %v1023
    %v1733 = vunpack.c.h.b16 %v1023
    %v1734 = vunpack.c.l.b16 %v1024
    %v1735 = vunpack.c.h.b16 %v1024
    %v1736 = vunpack.c.l.b16 %v1025
    %v1737 = vunpack.c.h.b16 %v1025
    %v1738 = vunpack.c.l.b16 %v1026
    %v1739 = vunpack.c.h.b16 %v1026
    %v1740 = vunpack.c.l.b16 %v1027
    %v1741 = vunpack.c.h.b16 %v1027
    %v1742 = vunpack.c.l.b16 %v1028
    %v1743 = vunpack.c.h.b16 %v1028
    %v1744 = vunpack.c.l.b16 %v1029
    %v1745 = vunpack.c.h.b16 %v1029
    %v1746 = vunpack.c.l.b16 %v1030
    %v1747 = vunpack.c.h.b16 %v1030
    %v1748 = vunpack.c.l.b16 %v1031
    %v1749 = vunpack.c.h.b16 %v1031
    %v1750 = vunpack.c.l.b16 %v1032
    %v1751 = vunpack.c.h.b16 %v1032
    %v1752 = vunpack.c.l.b16 %v1033
    %v1753 = vunpack.c.h.b16 %v1033
    %v1754 = vunpack.c.l.b16 %v1034
    %v1755 = vunpack.c.h.b16 %v1034
    %v1756 = vunpack.c.l.b16 %v1035
    %v1757 = vunpack.c.h.b16 %v1035
    %v1758 = vunpack.c.l.b16 %v1036
    %v1759 = vunpack.c.h.b16 %v1036
    %v1760 = vunpack.c.l.b16 %v1037
    %v1761 = vunpack.c.h.b16 %v1037
    %v1762 = vunpack.c.l.b16 %v1038
    %v1763 = vunpack.c.h.b16 %v1038
    %v1764 = vunpack.c.l.b16 %v1039
    %v1765 = vunpack.c.h.b16 %v1039
    %v1766 = vunpack.c.l.b16 %v1040
    %v1767 = vunpack.c.h.b16 %v1040
    %v1768 = vunpack.c.l.b16 %v1041
    %v1769 = vunpack.c.h.b16 %v1041
    %v1770 = vunpack.c.l.b16 %v1042
    %v1771 = vunpack.c.h.b16 %v1042
    %v1772 = vunpack.c.l.b16 %v1043
    %v1773 = vunpack.c.h.b16 %v1043
    %v1774 = vunpack.c.l.b16 %v1044
    %v1775 = vunpack.c.h.b16 %v1044
    %v1776 = vunpack.c.l.b16 %v1045
    %v1777 = vunpack.c.h.b16 %v1045
    %v1778 = vunpack.c.l.b16 %v1046
    %v1779 = vunpack.c.h.b16 %v1046
    %v1780 = vunpack.c.l.b16 %v1047
    %v1781 = vunpack.c.h.b16 %v1047
    %v1782 = vunpack.c.l.b16 %v1048
    %v1783 = vunpack.c.h.b16 %v1048
    %v1784 = vunpack.c.l.b16 %v1049
    %v1785 = vunpack.c.h.b16 %v1049
    %v1786 = vunpack.c.l.b16 %v1050
    %v1787 = vunpack.c.h.b16 %v1050
    %v1788 = vunpack.c.l.b16 %v1051
    %v1789 = vunpack.c.h.b16 %v1051
    %v1790 = vunpack.c.l.b16 %v1052
    %v1791 = vunpack.c.h.b16 %v1052
    %v1792 = vunpack.c.l.b16 %v1053
    %v1793 = vunpack.c.h.b16 %v1053
    %v1794 = vunpack.c.l.b16 %v1054
    %v1795 = vunpack.c.h.b16 %v1054
    %v1796 = vunpack.c.l.b16 %v1055
    %v1797 = vunpack.c.h.b16 %v1055
    %v1798 = vunpack.c.l.b16 %v1056
    %v1799 = vunpack.c.h.b16 %v1056
    %v1800 = vunpack.c.l.b16 %v1057
    %v1801 = vunpack.c.h.b16 %v1057
    %v1802 = vunpack.c.l.b16 %v1058
    %v1803 = vunpack.c.h.b16 %v1058
    %v1804 = vunpack.c.l.b16 %v1059
    %v1805 = vunpack.c.h.b16 %v1059
    %v1806 = vunpack.c.l.b16 %v1060
    %v1807 = vunpack.c.h.b16 %v1060
    %v1808 = vunpack.c.l.b16 %v1061
    %v1809 = vunpack.c.h.b16 %v1061
    %v1810 = vunpack.c.l.b16 %v1062
    %v1811 = vunpack.c.h.b16 %v1062
    %v1812 = vunpack.c.l.b16 %v1063
    %v1813 = vunpack.c.h.b16 %v1063
    %v1814 = vunpack.c.l.b16 %v1064
    %v1815 = vunpack.c.h.b16 %v1064
    %v1816 = vunpack.c.l.b16 %v1065
    %v1817 = vunpack.c.h.b16 %v1065
    %v1818 = vunpack.c.l.b16 %v1066
    %v1819 = vunpack.c.h.b16 %v1066
    %v1820 = vunpack.c.l.b16 %v1067
    %v1821 = vunpack.c.h.b16 %v1067
    %v1822 = vunpack.c.l.b16 %v1068
    %v1823 = vunpack.c.h.b16 %v1068
    %v1824 = vunpack.c.l.b16 %v1069
    %v1825 = vunpack.c.h.b16 %v1069
    %v1826 = vunpack.c.l.b16 %v1070
    %v1827 = vunpack.c.h.b16 %v1070
    %v1828 = vunpack.c.l.b16 %v1071
    %v1829 = vunpack.c.h.b16 %v1071
    %v1830 = vunpack.c.l.b16 %v1072
    %v1831 = vunpack.c.h.b16 %v1072
    %v1832 = vunpack.c.l.b16 %v1073
    %v1833 = vunpack.c.h.b16 %v1073
    %v1834 = vunpack.c.l.b16 %v1074
    %v1835 = vunpack.c.h.b16 %v1074
    %v1836 = vunpack.c.l.b16 %v1075
    %v1837 = vunpack.c.h.b16 %v1075
    %v1838 = vunpack.c.l.b16 %v1076
    %v1839 = vunpack.c.h.b16 %v1076
    %v1840 = vunpack.c.l.b16 %v1077
    %v1841 = vunpack.c.h.b16 %v1077
    %v1842 = vunpack.c.l.b16 %v1078
    %v1843 = vunpack.c.h.b16 %v1078
    %v1844 = vunpack.c.l.b16 %v1079
    %v1845 = vunpack.c.h.b16 %v1079
    %v1846 = vunpack.c.l.b16 %v1080
    %v1847 = vunpack.c.h.b16 %v1080
    %v1848 = vunpack.c.l.b16 %v1081
    %v1849 = vunpack.c.h.b16 %v1081
    %v1850 = vunpack.c.l.b16 %v1082
    %v1851 = vunpack.c.h.b16 %v1082
    %v1852 = vunpack.c.l.b16 %v1083
    %v1853 = vunpack.c.h.b16 %v1083
    %v1854 = vunpack.c.l.b16 %v1084
    %v1855 = vunpack.c.h.b16 %v1084
    %v1856 = vunpack.c.l.b16 %v1085
    %v1857 = vunpack.c.h.b16 %v1085
    %v1858 = vunpack.c.l.b16 %v1086
    %v1859 = vunpack.c.h.b16 %v1086
    %v1860 = vunpack.c.l.b16 %v1087
    %v1861 = vunpack.c.h.b16 %v1087
    %v1862 = vunpack.c.l.b16 %v1088
    %v1863 = vunpack.c.h.b16 %v1088
    %v1864 = vunpack.c.l.b16 %v1089
    %v1865 = vunpack.c.h.b16 %v1089
    %v1866 = vunpack.c.l.b16 %v1090
    %v1867 = vunpack.c.h.b16 %v1090
    %v1868 = vunpack.c.l.b16 %v1091
    %v1869 = vunpack.c.h.b16 %v1091
    %v1870 = vunpack.c.l.b16 %v1092
    %v1871 = vunpack.c.h.b16 %v1092
    %v1872 = vunpack.c.l.b16 %v1093
    %v1873 = vunpack.c.h.b16 %v1093
    %v1874 = vunpack.c.l.b16 %v1094
    %v1875 = vunpack.c.h.b16 %v1094
    %v1876 = vunpack.c.l.b16 %v1095
    %v1877 = vunpack.c.h.b16 %v1095
    %v1878 = vunpack.c.l.b16 %v1096
    %v1879 = vunpack.c.h.b16 %v1096
    %v1880 = vunpack.c.l.b16 %v1097
    %v1881 = vunpack.c.h.b16 %v1097
    %v1882 = vunpack.c.l.b16 %v1098
    %v1883 = vunpack.c.h.b16 %v1098
    %v1884 = vunpack.c.l.b16 %v1099
    %v1885 = vunpack.c.h.b16 %v1099
    %v1886 = vunpack.c.l.b16 %v1100
    %v1887 = vunpack.c.h.b16 %v1100
    %v1888 = vunpack.c.l.b16 %v1101
    %v1889 = vunpack.c.h.b16 %v1101
    %v1890 = vunpack.c.l.b16 %v1102
    %v1891 = vunpack.c.h.b16 %v1102
    %v1892 = vunpack.c.l.b16 %v1103
    %v1893 = vunpack.c.h.b16 %v1103
    %v1894 = vpack.c.b16 %v1386, %v1382
    %v1895 = vpack.c.b16 %v1387, %v1383
    %v1896 = vpack.c.b16 %v1388, %v1384
    %v1897 = vpack.c.b16 %v1389, %v1385
    %v1898 = vpack.c.b16 %v1394, %v1390
    %v1899 = vpack.c.b16 %v1395, %v1391
    %v1900 = vpack.c.b16 %v1396, %v1392
    %v1901 = vpack.c.b16 %v1397, %v1393
    %v1902 = vpack.c.b16 %v1402, %v1398
    %v1903 = vpack.c.b16 %v1403, %v1399
    %v1904 = vpack.c.b16 %v1404, %v1400
    %v1905 = vpack.c.b16 %v1405, %v1401
    %v1906 = vpack.c.b16 %v1410, %v1406
    %v1907 = vpack.c.b16 %v1411, %v1407
    %v1908 = vpack.c.b16 %v1412, %v1408
    %v1909 = vpack.c.b16 %v1413, %v1409
    %v1910 = vpack.c.b16 %v1418, %v1414
    %v1911 = vpack.c.b16 %v1419, %v1415
    %v1912 = vpack.c.b16 %v1420, %v1416
    %v1913 = vpack.c.b16 %v1421, %v1417
    %v1914 = vpack.c.b16 %v1426, %v1422
    %v1915 = vpack.c.b16 %v1427, %v1423
    %v1916 = vpack.c.b16 %v1428, %v1424
    %v1917 = vpack.c.b16 %v1429, %v1425
    %v1918 = vpack.c.b16 %v1434, %v1430
    %v1919 = vpack.c.b16 %v1435, %v1431
    %v1920 = vpack.c.b16 %v1436, %v1432
    %v1921 = vpack.c.b16 %v1437, %v1433
    %v1922 = vpack.c.b16 %v1442, %v1438
    %v1923 = vpack.c.b16 %v1443, %v1439
    %v1924 = vpack.c.b16 %v1444, %v1440
    %v1925 = vpack.c.b16 %v1445, %v1441
    %v1926 = vpack.c.b16 %v1450, %v1446
    %v1927 = vpack.c.b16 %v1451, %v1447
    %v1928 = vpack.c.b16 %v1452, %v1448
    %v1929 = vpack.c.b16 %v1453, %v1449
    %v1930 = vpack.c.b16 %v1458, %v1454
    %v1931 = vpack.c.b16 %v1459, %v1455
    %v1932 = vpack.c.b16 %v1460, %v1456
    %v1933 = vpack.c.b16 %v1461, %v1457
    %v1934 = vpack.c.b16 %v1466, %v1462
    %v1935 = vpack.c.b16 %v1467, %v1463
    %v1936 = vpack.c.b16 %v1468, %v1464
    %v1937 = vpack.c.b16 %v1469, %v1465
    %v1938 = vpack.c.b16 %v1474, %v1470
    %v1939 = vpack.c.b16 %v1475, %v1471
    %v1940 = vpack.c.b16 %v1476, %v1472
    %v1941 = vpack.c.b16 %v1477, %v1473
    %v1942 = vpack.c.b16 %v1482, %v1478
    %v1943 = vpack.c.b16 %v1483, %v1479
    %v1944 = vpack.c.b16 %v1484, %v1480
    %v1945 = vpack.c.b16 %v1485, %v1481
    %v1946 = vpack.c.b16 %v1490, %v1486
    %v1947 = vpack.c.b16 %v1491, %v1487
    %v1948 = vpack.c.b16 %v1492, %v1488
    %v1949 = vpack.c.b16 %v1493, %v1489
    %v1950 = vpack.c.b16 %v1498, %v1494
    %v1951 = vpack.c.b16 %v1499, %v1495
    %v1952 = vpack.c.b16 %v1500, %v1496
    %v1953 = vpack.c.b16 %v1501, %v1497
    %v1954 = vpack.c.b16 %v1506, %v1502
    %v1955 = vpack.c.b16 %v1507, %v1503
    %v1956 = vpack.c.b16 %v1508, %v1504
    %v1957 = vpack.c.b16 %v1509, %v1505
    %v1958 = vpack.c.b16 %v1514, %v1510
    %v1959 = vpack.c.b16 %v1515, %v1511
    %v1960 = vpack.c.b16 %v1516, %v1512
    %v1961 = vpack.c.b16 %v1517, %v1513
    %v1962 = vpack.c.b16 %v1522, %v1518
    %v1963 = vpack.c.b16 %v1523, %v1519
    %v1964 = vpack.c.b16 %v1524, %v1520
    %v1965 = vpack.c.b16 %v1525, %v1521
    %v1966 = vpack.c.b16 %v1530, %v1526
    %v1967 = vpack.c.b16 %v1531, %v1527
    %v1968 = vpack.c.b16 %v1532, %v1528
    %v1969 = vpack.c.b16 %v1533, %v1529
    %v1970 = vpack.c.b16 %v1538, %v1534
    %v1971 = vpack.c.b16 %v1539, %v1535
    %v1972 = vpack.c.b16 %v1540, %v1536
    %v1973 = vpack.c.b16 %v1541, %v1537
    %v1974 = vpack.c.b16 %v1546, %v1542
    %v1975 = vpack.c.b16 %v1547, %v1543
    %v1976 = vpack.c.b16 %v1548, %v1544
    %v1977 = vpack.c.b16 %v1549, %v1545
    %v1978 = vpack.c.b16 %v1554, %v1550
    %v1979 = vpack.c.b16 %v1555, %v1551
    %v1980 = vpack.c.b16 %v1556, %v1552
    %v1981 = vpack.c.b16 %v1557, %v1553
    %v1982 = vpack.c.b16 %v1562, %v1558
    %v1983 = vpack.c.b16 %v1563, %v1559
    %v1984 = vpack.c.b16 %v1564, %v1560
    %v1985 = vpack.c.b16 %v1565, %v1561
    %v1986 = vpack.c.b16 %v1570, %v1566
    %v1987 = vpack.c.b16 %v1571, %v1567
    %v1988 = vpack.c.b16 %v1572, %v1568
    %v1989 = vpack.c.b16 %v1573, %v1569
    %v1990 = vpack.c.b16 %v1578, %v1574
    %v1991 = vpack.c.b16 %v1579, %v1575
    %v1992 = vpack.c.b16 %v1580, %v1576
    %v1993 = vpack.c.b16 %v1581, %v1577
    %v1994 = vpack.c.b16 %v1586, %v1582
    %v1995 = vpack.c.b16 %v1587, %v1583
    %v1996 = vpack.c.b16 %v1588, %v1584
    %v1997 = vpack.c.b16 %v1589, %v1585
    %v1998 = vpack.c.b16 %v1594, %v1590
    %v1999 = vpack.c.b16 %v1595, %v1591
    %v2000 = vpack.c.b16 %v1596, %v1592
    %v2001 = vpack.c.b16 %v1597, %v1593
    %v2002 = vpack.c.b16 %v1602, %v1598
    %v2003 = vpack.c.b16 %v1603, %v1599
    %v2004 = vpack.c.b16 %v1604, %v1600
    %v2005 = vpack.c.b16 %v1605, %v1601
    %v2006 = vpack.c.b16 %v1610, %v1606
    %v2007 = vpack.c.b16 %v1611, %v1607
    %v2008 = vpack.c.b16 %v1612, %v1608
    %v2009 = vpack.c.b16 %v1613, %v1609
    %v2010 = vpack.c.b16 %v1618, %v1614
    %v2011 = vpack.c.b16 %v1619, %v1615
    %v2012 = vpack.c.b16 %v1620, %v1616
    %v2013 = vpack.c.b16 %v1621, %v1617
    %v2014 = vpack.c.b16 %v1626, %v1622
    %v2015 = vpack.c.b16 %v1627, %v1623
    %v2016 = vpack.c.b16 %v1628, %v1624
    %v2017 = vpack.c.b16 %v1629, %v1625
    %v2018 = vpack.c.b16 %v1634, %v1630
    %v2019 = vpack.c.b16 %v1635, %v1631
    %v2020 = vpack.c.b16 %v1636, %v1632
    %v2021 = vpack.c.b16 %v1637, %v1633
    %v2022 = vpack.c.b16 %v1642, %v1638
    %v2023 = vpack.c.b16 %v1643, %v1639
    %v2024 = vpack.c.b16 %v1644, %v1640
    %v2025 = vpack.c.b16 %v1645, %v1641
    %v2026 = vpack.c.b16 %v1650, %v1646
    %v2027 = vpack.c.b16 %v1651, %v1647
    %v2028 = vpack.c.b16 %v1652, %v1648
    %v2029 = vpack.c.b16 %v1653, %v1649
    %v2030 = vpack.c.b16 %v1658, %v1654
    %v2031 = vpack.c.b16 %v1659, %v1655
    %v2032 = vpack.c.b16 %v1660, %v1656
    %v2033 = vpack.c.b16 %v1661, %v1657
    %v2034 = vpack.c.b16 %v1666, %v1662
    %v2035 = vpack.c.b16 %v1667, %v1663
    %v2036 = vpack.c.b16 %v1668, %v1664
    %v2037 = vpack.c.b16 %v1669, %v1665
    %v2038 = vpack.c.b16 %v1674, %v1670
    %v2039 = vpack.c.b16 %v1675, %v1671
    %v2040 = vpack.c.b16 %v1676, %v1672
    %v2041 = vpack.c.b16 %v1677, %v1673
    %v2042 = vpack.c.b16 %v1682, %v1678
    %v2043 = vpack.c.b16 %v1683, %v1679
    %v2044 = vpack.c.b16 %v1684, %v1680
    %v2045 = vpack.c.b16 %v1685, %v1681
    %v2046 = vpack.c.b16 %v1690, %v1686
    %v2047 = vpack.c.b16 %v1691, %v1687
    %v2048 = vpack.c.b16 %v1692, %v1688
    %v2049 = vpack.c.b16 %v1693, %v1689
    %v2050 = vpack.c.b16 %v1698, %v1694
    %v2051 = vpack.c.b16 %v1699, %v1695
    %v2052 = vpack.c.b16 %v1700, %v1696
    %v2053 = vpack.c.b16 %v1701, %v1697
    %v2054 = vpack.c.b16 %v1706, %v1702
    %v2055 = vpack.c.b16 %v1707, %v1703
    %v2056 = vpack.c.b16 %v1708, %v1704
    %v2057 = vpack.c.b16 %v1709, %v1705
    %v2058 = vpack.c.b16 %v1714, %v1710
    %v2059 = vpack.c.b16 %v1715, %v1711
    %v2060 = vpack.c.b16 %v1716, %v1712
    %v2061 = vpack.c.b16 %v1717, %v1713
    %v2062 = vpack.c.b16 %v1722, %v1718
    %v2063 = vpack.c.b16 %v1723, %v1719
    %v2064 = vpack.c.b16 %v1724, %v1720
    %v2065 = vpack.c.b16 %v1725, %v1721
    %v2066 = vpack.c.b16 %v1730, %v1726
    %v2067 = vpack.c.b16 %v1731, %v1727
    %v2068 = vpack.c.b16 %v1732, %v1728
    %v2069 = vpack.c.b16 %v1733, %v1729
    %v2070 = vpack.c.b16 %v1738, %v1734
    %v2071 = vpack.c.b16 %v1739, %v1735
    %v2072 = vpack.c.b16 %v1740, %v1736
    %v2073 = vpack.c.b16 %v1741, %v1737
    %v2074 = vpack.c.b16 %v1746, %v1742
    %v2075 = vpack.c.b16 %v1747, %v1743
    %v2076 = vpack.c.b16 %v1748, %v1744
    %v2077 = vpack.c.b16 %v1749, %v1745
    %v2078 = vpack.c.b16 %v1754, %v1750
    %v2079 = vpack.c.b16 %v1755, %v1751
    %v2080 = vpack.c.b16 %v1756, %v1752
    %v2081 = vpack.c.b16 %v1757, %v1753
    %v2082 = vpack.c.b16 %v1762, %v1758
    %v2083 = vpack.c.b16 %v1763, %v1759
    %v2084 = vpack.c.b16 %v1764, %v1760
    %v2085 = vpack.c.b16 %v1765, %v1761
    %v2086 = vpack.c.b16 %v1770, %v1766
    %v2087 = vpack.c.b16 %v1771, %v1767
    %v2088 = vpack.c.b16 %v1772, %v1768
    %v2089 = vpack.c.b16 %v1773, %v1769
    %v2090 = vpack.c.b16 %v1778, %v1774
    %v2091 = vpack.c.b16 %v1779, %v1775
    %v2092 = vpack.c.b16 %v1780, %v1776
    %v2093 = vpack.c.b16 %v1781, %v1777
    %v2094 = vpack.c.b16 %v1786, %v1782
    %v2095 = vpack.c.b16 %v1787, %v1783
    %v2096 = vpack.c.b16 %v1788, %v1784
    %v2097 = vpack.c.b16 %v1789, %v1785
    %v2098 = vpack.c.b16 %v1794, %v1790
    %v2099 = vpack.c.b16 %v1795, %v1791
    %v2100 = vpack.c.b16 %v1796, %v1792
    %v2101 = vpack.c.b16 %v1797, %v1793
    %v2102 = vpack.c.b16 %v1802, %v1798
    %v2103 = vpack.c.b16 %v1803, %v1799
    %v2104 = vpack.c.b16 %v1804, %v1800
    %v2105 = vpack.c.b16 %v1805, %v1801
    %v2106 = vpack.c.b16 %v1810, %v1806
    %v2107 = vpack.c.b16 %v1811, %v1807
    %v2108 = vpack.c.b16 %v1812, %v1808
    %v2109 = vpack.c.b16 %v1813, %v1809
    %v2110 = vpack.c.b16 %v1818, %v1814
    %v2111 = vpack.c.b16 %v1819, %v1815
    %v2112 = vpack.c.b16 %v1820, %v1816
    %v2113 = vpack.c.b16 %v1821, %v1817
    %v2114 = vpack.c.b16 %v1826, %v1822
    %v2115 = vpack.c.b16 %v1827, %v1823
    %v2116 = vpack.c.b16 %v1828, %v1824
    %v2117 = vpack.c.b16 %v1829, %v1825
    %v2118 = vpack.c.b16 %v1834, %v1830
    %v2119 = vpack.c.b16 %v1835, %v1831
    %v2120 = vpack.c.b16 %v1836, %v1832
    %v2121 = vpack.c.b16 %v1837, %v1833
    %v2122 = vpack.c.b16 %v1842, %v1838
    %v2123 = vpack.c.b16 %v1843, %v1839
    %v2124 = vpack.c.b16 %v1844, %v1840
    %v2125 = vpack.c.b16 %v1845, %v1841
    %v2126 = vpack.c.b16 %v1850, %v1846
    %v2127 = vpack.c.b16 %v1851, %v1847
    %v2128 = vpack.c.b16 %v1852, %v1848
    %v2129 = vpack.c.b16 %v1853, %v1849
    %v2130 = vpack.c.b16 %v1858, %v1854
    %v2131 = vpack.c.b16 %v1859, %v1855
    %v2132 = vpack.c.b16 %v1860, %v1856
    %v2133 = vpack.c.b16 %v1861, %v1857
    %v2134 = vpack.c.b16 %v1866, %v1862
    %v2135 = vpack.c.b16 %v1867, %v1863
    %v2136 = vpack.c.b16 %v1868, %v1864
    %v2137 = vpack.c.b16 %v1869, %v1865
    %v2138 = vpack.c.b16 %v1874, %v1870
    %v2139 = vpack.c.b16 %v1875, %v1871
    %v2140 = vpack.c.b16 %v1876, %v1872
    %v2141 = vpack.c.b16 %v1877, %v1873
    %v2142 = vpack.c.b16 %v1882, %v1878
    %v2143 = vpack.c.b16 %v1883, %v1879
    %v2144 = vpack.c.b16 %v1884, %v1880
    %v2145 = vpack.c.b16 %v1885, %v1881
    %v2146 = vpack.c.b16 %v1890, %v1886
    %v2147 = vpack.c.b16 %v1891, %v1887
    %v2148 = vpack.c.b16 %v1892, %v1888
    %v2149 = vpack.c.b16 %v1893, %v1889
    %2406 = vmatprep.subr.bf16.mxu0 %v1923
    %2407 = vmatpush1.bf16.msra.mxu0 %v1922
    %2408 = vmatprep.subr.bf16.mxu0 %v1919
    %2409 = vmatpush1.bf16.msra.mxu0 %v1918
    %2410 = vmatprep.subr.bf16.mxu0 %v1915
    %2411 = vmatpush1.bf16.msra.mxu0 %v1914
    %2412 = vmatprep.subr.bf16.mxu0 %v1911
    %2413 = vmatpush1.bf16.msra.mxu0 %v1910
    %2414 = vmatprep.subr.bf16.mxu0 %v1907
    %2415 = vmatpush1.bf16.msra.mxu0 %v1906
    %2416 = vmatprep.subr.bf16.mxu0 %v1903
    %2417 = vmatpush1.bf16.msra.mxu0 %v1902
    %2418 = vmatprep.subr.bf16.mxu0 %v1899
    %2419 = vmatpush1.bf16.msra.mxu0 %v1898
    %2420 = vmatprep.subr.bf16.mxu0 %v1895
    %2421 = vmatpush1.bf16.msra.mxu0 %v1894
    %2422 = vmatprep.subr.bf16.mxu0 %v1955
    %2423 = vmatpush2.bf16.msra.mxu0 %v1954
    %2424 = vmatprep.subr.bf16.mxu0 %v1951
    %2425 = vmatpush2.bf16.msra.mxu0 %v1950
    %2426 = vmatprep.subr.bf16.mxu0 %v1947
    %2427 = vmatpush2.bf16.msra.mxu0 %v1946
    %2428 = vmatprep.subr.bf16.mxu0 %v1943
    %2429 = vmatpush2.bf16.msra.mxu0 %v1942
    %2430 = vmatprep.subr.bf16.mxu0 %v1939
    %2431 = vmatpush2.bf16.msra.mxu0 %v1938
    %2432 = vmatprep.subr.bf16.mxu0 %v1935
    %2433 = vmatpush2.bf16.msra.mxu0 %v1934
    %2434 = vmatprep.subr.bf16.mxu0 %v1931
    %2435 = vmatpush2.bf16.msra.mxu0 %v1930
    %2436 = vmatprep.subr.bf16.mxu0 %v1927
    %2437 = vmatpush2.bf16.msra.mxu0 %v1926
    %2438 = vmatprep.mubr.bf16.mxu0 %v841
    %2439 = vmatmul.mubr.bf16.gmra.mxu0 %v840
    %v2440 = vpop.f32.mrf.mxu0
    %v2441 = vadd.f32 %v1109, %v2440
    %v2442 = vpop.f32.mrf.mxu0
    %v2443 = vadd.f32 %v1113, %v2442
    %v2444 = vpop.f32.mrf.mxu0
    %v2445 = vadd.f32 %v1109, %v2444
    %v2446 = vpop.f32.mrf.mxu0
    %v2447 = vadd.f32 %v1113, %v2446
    %2448 = vdwg.mxu0
    %2449 = vmatprep.subr.bf16.mxu0 %v1987
    %2450 = vmatpush1.bf16.msra.mxu0 %v1986
    %2451 = vmatprep.subr.bf16.mxu0 %v1983
    %2452 = vmatpush1.bf16.msra.mxu0 %v1982
    %2453 = vmatprep.subr.bf16.mxu0 %v1979
    %2454 = vmatpush1.bf16.msra.mxu0 %v1978
    %2455 = vmatprep.subr.bf16.mxu0 %v1975
    %2456 = vmatpush1.bf16.msra.mxu0 %v1974
    %2457 = vmatprep.subr.bf16.mxu0 %v1971
    %2458 = vmatpush1.bf16.msra.mxu0 %v1970
    %2459 = vmatprep.subr.bf16.mxu0 %v1967
    %2460 = vmatpush1.bf16.msra.mxu0 %v1966
    %2461 = vmatprep.subr.bf16.mxu0 %v1963
    %2462 = vmatpush1.bf16.msra.mxu0 %v1962
    %2463 = vmatprep.subr.bf16.mxu0 %v1959
    %2464 = vmatpush1.bf16.msra.mxu0 %v1958
    %2465 = vmatprep.subr.bf16.mxu0 %v2019
    %2466 = vmatpush2.bf16.msra.mxu0 %v2018
    %2467 = vmatprep.subr.bf16.mxu0 %v2015
    %2468 = vmatpush2.bf16.msra.mxu0 %v2014
    %2469 = vmatprep.subr.bf16.mxu0 %v2011
    %2470 = vmatpush2.bf16.msra.mxu0 %v2010
    %2471 = vmatprep.subr.bf16.mxu0 %v2007
    %2472 = vmatpush2.bf16.msra.mxu0 %v2006
    %2473 = vmatprep.subr.bf16.mxu0 %v2003
    %2474 = vmatpush2.bf16.msra.mxu0 %v2002
    %2475 = vmatprep.subr.bf16.mxu0 %v1999
    %2476 = vmatpush2.bf16.msra.mxu0 %v1998
    %2477 = vmatprep.subr.bf16.mxu0 %v1995
    %2478 = vmatpush2.bf16.msra.mxu0 %v1994
    %2479 = vmatprep.subr.bf16.mxu0 %v1991
    %2480 = vmatpush2.bf16.msra.mxu0 %v1990
    %2481 = vmatprep.mubr.bf16.mxu0 %v843
    %2482 = vmatmul.mubr.bf16.gmra.mxu0 %v842
    %v2483 = vpop.f32.mrf.mxu0
    %v2484 = vadd.f32 %v2441, %v2483
    %v2485 = vpop.f32.mrf.mxu0
    %v2486 = vadd.f32 %v2443, %v2485
    %v2487 = vpop.f32.mrf.mxu0
    %v2488 = vadd.f32 %v2445, %v2487
    %v2489 = vpop.f32.mrf.mxu0
    %v2490 = vadd.f32 %v2447, %v2489
    %2491 = vdwg.mxu0
    %2492 = vmatprep.subr.bf16.mxu0 %v2051
    %2493 = vmatpush1.bf16.msra.mxu0 %v2050
    %2494 = vmatprep.subr.bf16.mxu0 %v2047
    %2495 = vmatpush1.bf16.msra.mxu0 %v2046
    %2496 = vmatprep.subr.bf16.mxu0 %v2043
    %2497 = vmatpush1.bf16.msra.mxu0 %v2042
    %2498 = vmatprep.subr.bf16.mxu0 %v2039
    %2499 = vmatpush1.bf16.msra.mxu0 %v2038
    %2500 = vmatprep.subr.bf16.mxu0 %v2035
    %2501 = vmatpush1.bf16.msra.mxu0 %v2034
    %2502 = vmatprep.subr.bf16.mxu0 %v2031
    %2503 = vmatpush1.bf16.msra.mxu0 %v2030
    %2504 = vmatprep.subr.bf16.mxu0 %v2027
    %2505 = vmatpush1.bf16.msra.mxu0 %v2026
    %2506 = vmatprep.subr.bf16.mxu0 %v2023
    %2507 = vmatpush1.bf16.msra.mxu0 %v2022
    %2508 = vmatprep.subr.bf16.mxu0 %v2083
    %2509 = vmatpush2.bf16.msra.mxu0 %v2082
    %2510 = vmatprep.subr.bf16.mxu0 %v2079
    %2511 = vmatpush2.bf16.msra.mxu0 %v2078
    %2512 = vmatprep.subr.bf16.mxu0 %v2075
    %2513 = vmatpush2.bf16.msra.mxu0 %v2074
    %2514 = vmatprep.subr.bf16.mxu0 %v2071
    %2515 = vmatpush2.bf16.msra.mxu0 %v2070
    %2516 = vmatprep.subr.bf16.mxu0 %v2067
    %2517 = vmatpush2.bf16.msra.mxu0 %v2066
    %2518 = vmatprep.subr.bf16.mxu0 %v2063
    %2519 = vmatpush2.bf16.msra.mxu0 %v2062
    %2520 = vmatprep.subr.bf16.mxu0 %v2059
    %2521 = vmatpush2.bf16.msra.mxu0 %v2058
    %2522 = vmatprep.subr.bf16.mxu0 %v2055
    %2523 = vmatpush2.bf16.msra.mxu0 %v2054
    %2524 = vmatprep.mubr.bf16.mxu0 %v845
    %2525 = vmatmul.mubr.bf16.gmra.mxu0 %v844
    %v2526 = vpop.f32.mrf.mxu0
    %v2527 = vadd.f32 %v2484, %v2526
    %v2528 = vpop.f32.mrf.mxu0
    %v2529 = vadd.f32 %v2486, %v2528
    %v2530 = vpop.f32.mrf.mxu0
    %v2531 = vadd.f32 %v2488, %v2530
    %v2532 = vpop.f32.mrf.mxu0
    %v2533 = vadd.f32 %v2490, %v2532
    %2534 = vdwg.mxu0
    %2535 = vmatprep.subr.bf16.mxu0 %v2115
    %2536 = vmatpush1.bf16.msra.mxu0 %v2114
    %2537 = vmatprep.subr.bf16.mxu0 %v2111
    %2538 = vmatpush1.bf16.msra.mxu0 %v2110
    %2539 = vmatprep.subr.bf16.mxu0 %v2107
    %2540 = vmatpush1.bf16.msra.mxu0 %v2106
    %2541 = vmatprep.subr.bf16.mxu0 %v2103
    %2542 = vmatpush1.bf16.msra.mxu0 %v2102
    %2543 = vmatprep.subr.bf16.mxu0 %v2099
    %2544 = vmatpush1.bf16.msra.mxu0 %v2098
    %2545 = vmatprep.subr.bf16.mxu0 %v2095
    %2546 = vmatpush1.bf16.msra.mxu0 %v2094
    %2547 = vmatprep.subr.bf16.mxu0 %v2091
    %2548 = vmatpush1.bf16.msra.mxu0 %v2090
    %2549 = vmatprep.subr.bf16.mxu0 %v2087
    %2550 = vmatpush1.bf16.msra.mxu0 %v2086
    %2551 = vmatprep.subr.bf16.mxu0 %v2147
    %2552 = vmatpush2.bf16.msra.mxu0 %v2146
    %2553 = vmatprep.subr.bf16.mxu0 %v2143
    %2554 = vmatpush2.bf16.msra.mxu0 %v2142
    %2555 = vmatprep.subr.bf16.mxu0 %v2139
    %2556 = vmatpush2.bf16.msra.mxu0 %v2138
    %2557 = vmatprep.subr.bf16.mxu0 %v2135
    %2558 = vmatpush2.bf16.msra.mxu0 %v2134
    %2559 = vmatprep.subr.bf16.mxu0 %v2131
    %2560 = vmatpush2.bf16.msra.mxu0 %v2130
    %2561 = vmatprep.subr.bf16.mxu0 %v2127
    %2562 = vmatpush2.bf16.msra.mxu0 %v2126
    %2563 = vmatprep.subr.bf16.mxu0 %v2123
    %2564 = vmatpush2.bf16.msra.mxu0 %v2122
    %2565 = vmatprep.subr.bf16.mxu0 %v2119
    %2566 = vmatpush2.bf16.msra.mxu0 %v2118
    %2567 = vmatprep.mubr.bf16.mxu0 %v847
    %2568 = vmatmul.mubr.bf16.gmra.mxu0 %v846
    %v2569 = vpop.f32.mrf.mxu0
    %v2570 = vadd.f32 %v2527, %v2569
    %v2571 = vpop.f32.mrf.mxu0
    %v2572 = vadd.f32 %v2529, %v2571
    %v2573 = vpop.f32.mrf.mxu0
    %v2574 = vadd.f32 %v2531, %v2573
    %v2575 = vpop.f32.mrf.mxu0
    %v2576 = vadd.f32 %v2533, %v2575
    %2577 = vdwg.mxu0
    %2578 = vmatprep.subr.bf16.mxu0 %v1925
    %2579 = vmatpush1.bf16.msra.mxu0 %v1924
    %2580 = vmatprep.subr.bf16.mxu0 %v1921
    %2581 = vmatpush1.bf16.msra.mxu0 %v1920
    %2582 = vmatprep.subr.bf16.mxu0 %v1917
    %2583 = vmatpush1.bf16.msra.mxu0 %v1916
    %2584 = vmatprep.subr.bf16.mxu0 %v1913
    %2585 = vmatpush1.bf16.msra.mxu0 %v1912
    %2586 = vmatprep.subr.bf16.mxu0 %v1909
    %2587 = vmatpush1.bf16.msra.mxu0 %v1908
    %2588 = vmatprep.subr.bf16.mxu0 %v1905
    %2589 = vmatpush1.bf16.msra.mxu0 %v1904
    %2590 = vmatprep.subr.bf16.mxu0 %v1901
    %2591 = vmatpush1.bf16.msra.mxu0 %v1900
    %2592 = vmatprep.subr.bf16.mxu0 %v1897
    %2593 = vmatpush1.bf16.msra.mxu0 %v1896
    %2594 = vmatprep.subr.bf16.mxu0 %v1957
    %2595 = vmatpush2.bf16.msra.mxu0 %v1956
    %2596 = vmatprep.subr.bf16.mxu0 %v1953
    %2597 = vmatpush2.bf16.msra.mxu0 %v1952
    %2598 = vmatprep.subr.bf16.mxu0 %v1949
    %2599 = vmatpush2.bf16.msra.mxu0 %v1948
    %2600 = vmatprep.subr.bf16.mxu0 %v1945
    %2601 = vmatpush2.bf16.msra.mxu0 %v1944
    %2602 = vmatprep.subr.bf16.mxu0 %v1941
    %2603 = vmatpush2.bf16.msra.mxu0 %v1940
    %2604 = vmatprep.subr.bf16.mxu0 %v1937
    %2605 = vmatpush2.bf16.msra.mxu0 %v1936
    %2606 = vmatprep.subr.bf16.mxu0 %v1933
    %2607 = vmatpush2.bf16.msra.mxu0 %v1932
    %2608 = vmatprep.subr.bf16.mxu0 %v1929
    %2609 = vmatpush2.bf16.msra.mxu0 %v1928
    %2610 = vmatprep.mubr.bf16.mxu0 %v841
    %2611 = vmatmul.mubr.bf16.gmra.mxu0 %v840
    %v2612 = vpop.f32.mrf.mxu0
    %v2613 = vadd.f32 %v1117, %v2612
    %v2614 = vpop.f32.mrf.mxu0
    %v2615 = vadd.f32 %v1121, %v2614
    %v2616 = vpop.f32.mrf.mxu0
    %v2617 = vadd.f32 %v1117, %v2616
    %v2618 = vpop.f32.mrf.mxu0
    %v2619 = vadd.f32 %v1121, %v2618
    %2620 = vdwg.mxu0
    %2621 = vmatprep.subr.bf16.mxu0 %v1989
    %2622 = vmatpush1.bf16.msra.mxu0 %v1988
    %2623 = vmatprep.subr.bf16.mxu0 %v1985
    %2624 = vmatpush1.bf16.msra.mxu0 %v1984
    %2625 = vmatprep.subr.bf16.mxu0 %v1981
    %2626 = vmatpush1.bf16.msra.mxu0 %v1980
    %2627 = vmatprep.subr.bf16.mxu0 %v1977
    %2628 = vmatpush1.bf16.msra.mxu0 %v1976
    %2629 = vmatprep.subr.bf16.mxu0 %v1973
    %2630 = vmatpush1.bf16.msra.mxu0 %v1972
    %2631 = vmatprep.subr.bf16.mxu0 %v1969
    %2632 = vmatpush1.bf16.msra.mxu0 %v1968
    %2633 = vmatprep.subr.bf16.mxu0 %v1965
    %2634 = vmatpush1.bf16.msra.mxu0 %v1964
    %2635 = vmatprep.subr.bf16.mxu0 %v1961
    %2636 = vmatpush1.bf16.msra.mxu0 %v1960
    %2637 = vmatprep.subr.bf16.mxu0 %v2021
    %2638 = vmatpush2.bf16.msra.mxu0 %v2020
    %2639 = vmatprep.subr.bf16.mxu0 %v2017
    %2640 = vmatpush2.bf16.msra.mxu0 %v2016
    %2641 = vmatprep.subr.bf16.mxu0 %v2013
    %2642 = vmatpush2.bf16.msra.mxu0 %v2012
    %2643 = vmatprep.subr.bf16.mxu0 %v2009
    %2644 = vmatpush2.bf16.msra.mxu0 %v2008
    %2645 = vmatprep.subr.bf16.mxu0 %v2005
    %2646 = vmatpush2.bf16.msra.mxu0 %v2004
    %2647 = vmatprep.subr.bf16.mxu0 %v2001
    %2648 = vmatpush2.bf16.msra.mxu0 %v2000
    %2649 = vmatprep.subr.bf16.mxu0 %v1997
    %2650 = vmatpush2.bf16.msra.mxu0 %v1996
    %2651 = vmatprep.subr.bf16.mxu0 %v1993
    %2652 = vmatpush2.bf16.msra.mxu0 %v1992
    %2653 = vmatprep.mubr.bf16.mxu0 %v843
    %2654 = vmatmul.mubr.bf16.gmra.mxu0 %v842
    %v2655 = vpop.f32.mrf.mxu0
    %v2656 = vadd.f32 %v2613, %v2655
    %v2657 = vpop.f32.mrf.mxu0
    %v2658 = vadd.f32 %v2615, %v2657
    %v2659 = vpop.f32.mrf.mxu0
    %v2660 = vadd.f32 %v2617, %v2659
    %v2661 = vpop.f32.mrf.mxu0
    %v2662 = vadd.f32 %v2619, %v2661
    %2663 = vdwg.mxu0
    %2664 = vmatprep.subr.bf16.mxu0 %v2053
    %2665 = vmatpush1.bf16.msra.mxu0 %v2052
    %2666 = vmatprep.subr.bf16.mxu0 %v2049
    %2667 = vmatpush1.bf16.msra.mxu0 %v2048
    %2668 = vmatprep.subr.bf16.mxu0 %v2045
    %2669 = vmatpush1.bf16.msra.mxu0 %v2044
    %2670 = vmatprep.subr.bf16.mxu0 %v2041
    %2671 = vmatpush1.bf16.msra.mxu0 %v2040
    %2672 = vmatprep.subr.bf16.mxu0 %v2037
    %2673 = vmatpush1.bf16.msra.mxu0 %v2036
    %2674 = vmatprep.subr.bf16.mxu0 %v2033
    %2675 = vmatpush1.bf16.msra.mxu0 %v2032
    %2676 = vmatprep.subr.bf16.mxu0 %v2029
    %2677 = vmatpush1.bf16.msra.mxu0 %v2028
    %2678 = vmatprep.subr.bf16.mxu0 %v2025
    %2679 = vmatpush1.bf16.msra.mxu0 %v2024
    %2680 = vmatprep.subr.bf16.mxu0 %v2085
    %2681 = vmatpush2.bf16.msra.mxu0 %v2084
    %2682 = vmatprep.subr.bf16.mxu0 %v2081
    %2683 = vmatpush2.bf16.msra.mxu0 %v2080
    %2684 = vmatprep.subr.bf16.mxu0 %v2077
    %2685 = vmatpush2.bf16.msra.mxu0 %v2076
    %2686 = vmatprep.subr.bf16.mxu0 %v2073
    %2687 = vmatpush2.bf16.msra.mxu0 %v2072
    %2688 = vmatprep.subr.bf16.mxu0 %v2069
    %2689 = vmatpush2.bf16.msra.mxu0 %v2068
    %2690 = vmatprep.subr.bf16.mxu0 %v2065
    %2691 = vmatpush2.bf16.msra.mxu0 %v2064
    %2692 = vmatprep.subr.bf16.mxu0 %v2061
    %2693 = vmatpush2.bf16.msra.mxu0 %v2060
    %2694 = vmatprep.subr.bf16.mxu0 %v2057
    %2695 = vmatpush2.bf16.msra.mxu0 %v2056
    %2696 = vmatprep.mubr.bf16.mxu0 %v845
    %2697 = vmatmul.mubr.bf16.gmra.mxu0 %v844
    %v2698 = vpop.f32.mrf.mxu0
    %v2699 = vadd.f32 %v2656, %v2698
    %v2700 = vpop.f32.mrf.mxu0
    %v2701 = vadd.f32 %v2658, %v2700
    %v2702 = vpop.f32.mrf.mxu0
    %v2703 = vadd.f32 %v2660, %v2702
    %v2704 = vpop.f32.mrf.mxu0
    %v2705 = vadd.f32 %v2662, %v2704
    %2706 = vdwg.mxu0
    %2707 = vmatprep.subr.bf16.mxu0 %v2117
    %2708 = vmatpush1.bf16.msra.mxu0 %v2116
    %2709 = vmatprep.subr.bf16.mxu0 %v2113
    %2710 = vmatpush1.bf16.msra.mxu0 %v2112
    %2711 = vmatprep.subr.bf16.mxu0 %v2109
    %2712 = vmatpush1.bf16.msra.mxu0 %v2108
    %2713 = vmatprep.subr.bf16.mxu0 %v2105
    %2714 = vmatpush1.bf16.msra.mxu0 %v2104
    %2715 = vmatprep.subr.bf16.mxu0 %v2101
    %2716 = vmatpush1.bf16.msra.mxu0 %v2100
    %2717 = vmatprep.subr.bf16.mxu0 %v2097
    %2718 = vmatpush1.bf16.msra.mxu0 %v2096
    %2719 = vmatprep.subr.bf16.mxu0 %v2093
    %2720 = vmatpush1.bf16.msra.mxu0 %v2092
    %2721 = vmatprep.subr.bf16.mxu0 %v2089
    %2722 = vmatpush1.bf16.msra.mxu0 %v2088
    %2723 = vmatprep.subr.bf16.mxu0 %v2149
    %2724 = vmatpush2.bf16.msra.mxu0 %v2148
    %2725 = vmatprep.subr.bf16.mxu0 %v2145
    %2726 = vmatpush2.bf16.msra.mxu0 %v2144
    %2727 = vmatprep.subr.bf16.mxu0 %v2141
    %2728 = vmatpush2.bf16.msra.mxu0 %v2140
    %2729 = vmatprep.subr.bf16.mxu0 %v2137
    %2730 = vmatpush2.bf16.msra.mxu0 %v2136
    %2731 = vmatprep.subr.bf16.mxu0 %v2133
    %2732 = vmatpush2.bf16.msra.mxu0 %v2132
    %2733 = vmatprep.subr.bf16.mxu0 %v2129
    %2734 = vmatpush2.bf16.msra.mxu0 %v2128
    %2735 = vmatprep.subr.bf16.mxu0 %v2125
    %2736 = vmatpush2.bf16.msra.mxu0 %v2124
    %2737 = vmatprep.subr.bf16.mxu0 %v2121
    %2738 = vmatpush2.bf16.msra.mxu0 %v2120
    %2739 = vmatprep.mubr.bf16.mxu0 %v847
    %2740 = vmatmul.mubr.bf16.gmra.mxu0 %v846
    %v2741 = vpop.f32.mrf.mxu0
    %v2742 = vadd.f32 %v2699, %v2741
    %v2743 = vpop.f32.mrf.mxu0
    %v2744 = vadd.f32 %v2701, %v2743
    %v2745 = vpop.f32.mrf.mxu0
    %v2746 = vadd.f32 %v2703, %v2745
    %v2747 = vpop.f32.mrf.mxu0
    %v2748 = vadd.f32 %v2705, %v2747
    %2749 = vdwg.mxu0
    %v2750 = vtanh.pop %v2570
    %v2751 = vtanh.pop %v2572
    %v2752 = vtanh.pop %v2742
    %v2753 = vtanh.pop %v2744
    %v2754 = vtanh.pop %v2574
    %v2755 = vtanh.pop %v2576
    %v2756 = vtanh.pop %v2746
    %v2757 = vtanh.pop %v2748
    %v2758 = vpack.c.bf16 %v2754, %v2750
    %v2759 = vpack.c.bf16 %v2755, %v2751
    %v2760 = vpack.c.bf16 %v2756, %v2752
    %v2761 = vpack.c.bf16 %v2757, %v2753
    %v2762 = vld [vmem:[#allocation11] sm:$0xff]
    %v2763 = vld [vmem:[#allocation11 + $0x8] sm:$0xff]
    %v2764 = vld [vmem:[#allocation11 + $0x10] sm:$0xff]
    %v2765 = vld [vmem:[#allocation11 + $0x18] sm:$0xff]
    %v2766 = vld [vmem:[#allocation11 + $0x20] sm:$0xff]
    %v2767 = vld [vmem:[#allocation11 + $0x28] sm:$0xff]
    %v2768 = vld [vmem:[#allocation11 + $0x30] sm:$0xff]
    %v2769 = vld [vmem:[#allocation11 + $0x38] sm:$0xff]
    %v2770 = vld [vmem:[#allocation11 + $0x40] sm:$0xff]
    %v2771 = vld [vmem:[#allocation11 + $0x48] sm:$0xff]
    %v2772 = vld [vmem:[#allocation11 + $0x50] sm:$0xff]
    %v2773 = vld [vmem:[#allocation11 + $0x58] sm:$0xff]
    %v2774 = vld [vmem:[#allocation11 + $0x60] sm:$0xff]
    %v2775 = vld [vmem:[#allocation11 + $0x68] sm:$0xff]
    %v2776 = vld [vmem:[#allocation11 + $0x70] sm:$0xff]
    %v2777 = vld [vmem:[#allocation11 + $0x78] sm:$0xff]
    %v2778 = vld [vmem:[#allocation11 + $0x80] sm:$0xff]
    %v2779 = vld [vmem:[#allocation11 + $0x88] sm:$0xff]
    %v2780 = vld [vmem:[#allocation11 + $0x90] sm:$0xff]
    %v2781 = vld [vmem:[#allocation11 + $0x98] sm:$0xff]
    %v2782 = vld [vmem:[#allocation11 + $0xa0] sm:$0xff]
    %v2783 = vld [vmem:[#allocation11 + $0xa8] sm:$0xff]
    %v2784 = vld [vmem:[#allocation11 + $0xb0] sm:$0xff]
    %v2785 = vld [vmem:[#allocation11 + $0xb8] sm:$0xff]
    %v2786 = vld [vmem:[#allocation11 + $0xc0] sm:$0xff]
    %v2787 = vld [vmem:[#allocation11 + $0xc8] sm:$0xff]
    %v2788 = vld [vmem:[#allocation11 + $0xd0] sm:$0xff]
    %v2789 = vld [vmem:[#allocation11 + $0xd8] sm:$0xff]
    %v2790 = vld [vmem:[#allocation11 + $0xe0] sm:$0xff]
    %v2791 = vld [vmem:[#allocation11 + $0xe8] sm:$0xff]
    %v2792 = vld [vmem:[#allocation11 + $0xf0] sm:$0xff]
    %v2793 = vld [vmem:[#allocation11 + $0xf8] sm:$0xff]
    %v2794 = vld [vmem:[#allocation11 + $0x100] sm:$0xff]
    %v2795 = vld [vmem:[#allocation11 + $0x108] sm:$0xff]
    %v2796 = vld [vmem:[#allocation11 + $0x110] sm:$0xff]
    %v2797 = vld [vmem:[#allocation11 + $0x118] sm:$0xff]
    %v2798 = vld [vmem:[#allocation11 + $0x120] sm:$0xff]
    %v2799 = vld [vmem:[#allocation11 + $0x128] sm:$0xff]
    %v2800 = vld [vmem:[#allocation11 + $0x130] sm:$0xff]
    %v2801 = vld [vmem:[#allocation11 + $0x138] sm:$0xff]
    %v2802 = vld [vmem:[#allocation11 + $0x140] sm:$0xff]
    %v2803 = vld [vmem:[#allocation11 + $0x148] sm:$0xff]
    %v2804 = vld [vmem:[#allocation11 + $0x150] sm:$0xff]
    %v2805 = vld [vmem:[#allocation11 + $0x158] sm:$0xff]
    %v2806 = vld [vmem:[#allocation11 + $0x160] sm:$0xff]
    %v2807 = vld [vmem:[#allocation11 + $0x168] sm:$0xff]
    %v2808 = vld [vmem:[#allocation11 + $0x170] sm:$0xff]
    %v2809 = vld [vmem:[#allocation11 + $0x178] sm:$0xff]
    %v2810 = vld [vmem:[#allocation11 + $0x180] sm:$0xff]
    %v2811 = vld [vmem:[#allocation11 + $0x188] sm:$0xff]
    %v2812 = vld [vmem:[#allocation11 + $0x190] sm:$0xff]
    %v2813 = vld [vmem:[#allocation11 + $0x198] sm:$0xff]
    %v2814 = vld [vmem:[#allocation11 + $0x1a0] sm:$0xff]
    %v2815 = vld [vmem:[#allocation11 + $0x1a8] sm:$0xff]
    %v2816 = vld [vmem:[#allocation11 + $0x1b0] sm:$0xff]
    %v2817 = vld [vmem:[#allocation11 + $0x1b8] sm:$0xff]
    %v2818 = vld [vmem:[#allocation11 + $0x1c0] sm:$0xff]
    %v2819 = vld [vmem:[#allocation11 + $0x1c8] sm:$0xff]
    %v2820 = vld [vmem:[#allocation11 + $0x1d0] sm:$0xff]
    %v2821 = vld [vmem:[#allocation11 + $0x1d8] sm:$0xff]
    %v2822 = vld [vmem:[#allocation11 + $0x1e0] sm:$0xff]
    %v2823 = vld [vmem:[#allocation11 + $0x1e8] sm:$0xff]
    %v2824 = vld [vmem:[#allocation11 + $0x1f0] sm:$0xff]
    %v2825 = vld [vmem:[#allocation11 + $0x1f8] sm:$0xff]
    %v2826 = vld [vmem:[#allocation13] sm:$0x3]
    %v2828 = vlaneseq
    %v2829 = vshrl.u32 %v2828, 7
    %v2830 = vsub.s32 0, %v2829
    %v2831 = vrot.slane %v2826, %v2830
    %v2832 = vlaneseq
    %v2833 = vshrl.u32 %v2832, 7
    %v2834 = vsub.s32 1, %v2833
    %v2835 = vrot.slane %v2826, %v2834
    %v2902 = vunpack.c.l.b16 %v2762
    %v2903 = vunpack.c.h.b16 %v2762
    %v2904 = vunpack.c.l.b16 %v2763
    %v2905 = vunpack.c.h.b16 %v2763
    %v2906 = vunpack.c.l.b16 %v2764
    %v2907 = vunpack.c.h.b16 %v2764
    %v2908 = vunpack.c.l.b16 %v2765
    %v2909 = vunpack.c.h.b16 %v2765
    %v2910 = vunpack.c.l.b16 %v2766
    %v2911 = vunpack.c.h.b16 %v2766
    %v2912 = vunpack.c.l.b16 %v2767
    %v2913 = vunpack.c.h.b16 %v2767
    %v2914 = vunpack.c.l.b16 %v2768
    %v2915 = vunpack.c.h.b16 %v2768
    %v2916 = vunpack.c.l.b16 %v2769
    %v2917 = vunpack.c.h.b16 %v2769
    %v2918 = vunpack.c.l.b16 %v2770
    %v2919 = vunpack.c.h.b16 %v2770
    %v2920 = vunpack.c.l.b16 %v2771
    %v2921 = vunpack.c.h.b16 %v2771
    %v2922 = vunpack.c.l.b16 %v2772
    %v2923 = vunpack.c.h.b16 %v2772
    %v2924 = vunpack.c.l.b16 %v2773
    %v2925 = vunpack.c.h.b16 %v2773
    %v2926 = vunpack.c.l.b16 %v2774
    %v2927 = vunpack.c.h.b16 %v2774
    %v2928 = vunpack.c.l.b16 %v2775
    %v2929 = vunpack.c.h.b16 %v2775
    %v2930 = vunpack.c.l.b16 %v2776
    %v2931 = vunpack.c.h.b16 %v2776
    %v2932 = vunpack.c.l.b16 %v2777
    %v2933 = vunpack.c.h.b16 %v2777
    %v2934 = vunpack.c.l.b16 %v2778
    %v2935 = vunpack.c.h.b16 %v2778
    %v2936 = vunpack.c.l.b16 %v2779
    %v2937 = vunpack.c.h.b16 %v2779
    %v2938 = vunpack.c.l.b16 %v2780
    %v2939 = vunpack.c.h.b16 %v2780
    %v2940 = vunpack.c.l.b16 %v2781
    %v2941 = vunpack.c.h.b16 %v2781
    %v2942 = vunpack.c.l.b16 %v2782
    %v2943 = vunpack.c.h.b16 %v2782
    %v2944 = vunpack.c.l.b16 %v2783
    %v2945 = vunpack.c.h.b16 %v2783
    %v2946 = vunpack.c.l.b16 %v2784
    %v2947 = vunpack.c.h.b16 %v2784
    %v2948 = vunpack.c.l.b16 %v2785
    %v2949 = vunpack.c.h.b16 %v2785
    %v2950 = vunpack.c.l.b16 %v2786
    %v2951 = vunpack.c.h.b16 %v2786
    %v2952 = vunpack.c.l.b16 %v2787
    %v2953 = vunpack.c.h.b16 %v2787
    %v2954 = vunpack.c.l.b16 %v2788
    %v2955 = vunpack.c.h.b16 %v2788
    %v2956 = vunpack.c.l.b16 %v2789
    %v2957 = vunpack.c.h.b16 %v2789
    %v2958 = vunpack.c.l.b16 %v2790
    %v2959 = vunpack.c.h.b16 %v2790
    %v2960 = vunpack.c.l.b16 %v2791
    %v2961 = vunpack.c.h.b16 %v2791
    %v2962 = vunpack.c.l.b16 %v2792
    %v2963 = vunpack.c.h.b16 %v2792
    %v2964 = vunpack.c.l.b16 %v2793
    %v2965 = vunpack.c.h.b16 %v2793
    %v2966 = vunpack.c.l.b16 %v2794
    %v2967 = vunpack.c.h.b16 %v2794
    %v2968 = vunpack.c.l.b16 %v2795
    %v2969 = vunpack.c.h.b16 %v2795
    %v2970 = vunpack.c.l.b16 %v2796
    %v2971 = vunpack.c.h.b16 %v2796
    %v2972 = vunpack.c.l.b16 %v2797
    %v2973 = vunpack.c.h.b16 %v2797
    %v2974 = vunpack.c.l.b16 %v2798
    %v2975 = vunpack.c.h.b16 %v2798
    %v2976 = vunpack.c.l.b16 %v2799
    %v2977 = vunpack.c.h.b16 %v2799
    %v2978 = vunpack.c.l.b16 %v2800
    %v2979 = vunpack.c.h.b16 %v2800
    %v2980 = vunpack.c.l.b16 %v2801
    %v2981 = vunpack.c.h.b16 %v2801
    %v2982 = vunpack.c.l.b16 %v2802
    %v2983 = vunpack.c.h.b16 %v2802
    %v2984 = vunpack.c.l.b16 %v2803
    %v2985 = vunpack.c.h.b16 %v2803
    %v2986 = vunpack.c.l.b16 %v2804
    %v2987 = vunpack.c.h.b16 %v2804
    %v2988 = vunpack.c.l.b16 %v2805
    %v2989 = vunpack.c.h.b16 %v2805
    %v2990 = vunpack.c.l.b16 %v2806
    %v2991 = vunpack.c.h.b16 %v2806
    %v2992 = vunpack.c.l.b16 %v2807
    %v2993 = vunpack.c.h.b16 %v2807
    %v2994 = vunpack.c.l.b16 %v2808
    %v2995 = vunpack.c.h.b16 %v2808
    %v2996 = vunpack.c.l.b16 %v2809
    %v2997 = vunpack.c.h.b16 %v2809
    %v2998 = vunpack.c.l.b16 %v2810
    %v2999 = vunpack.c.h.b16 %v2810
    %v3000 = vunpack.c.l.b16 %v2811
    %v3001 = vunpack.c.h.b16 %v2811
    %v3002 = vunpack.c.l.b16 %v2812
    %v3003 = vunpack.c.h.b16 %v2812
    %v3004 = vunpack.c.l.b16 %v2813
    %v3005 = vunpack.c.h.b16 %v2813
    %v3006 = vunpack.c.l.b16 %v2814
    %v3007 = vunpack.c.h.b16 %v2814
    %v3008 = vunpack.c.l.b16 %v2815
    %v3009 = vunpack.c.h.b16 %v2815
    %v3010 = vunpack.c.l.b16 %v2816
    %v3011 = vunpack.c.h.b16 %v2816
    %v3012 = vunpack.c.l.b16 %v2817
    %v3013 = vunpack.c.h.b16 %v2817
    %v3014 = vunpack.c.l.b16 %v2818
    %v3015 = vunpack.c.h.b16 %v2818
    %v3016 = vunpack.c.l.b16 %v2819
    %v3017 = vunpack.c.h.b16 %v2819
    %v3018 = vunpack.c.l.b16 %v2820
    %v3019 = vunpack.c.h.b16 %v2820
    %v3020 = vunpack.c.l.b16 %v2821
    %v3021 = vunpack.c.h.b16 %v2821
    %v3022 = vunpack.c.l.b16 %v2822
    %v3023 = vunpack.c.h.b16 %v2822
    %v3024 = vunpack.c.l.b16 %v2823
    %v3025 = vunpack.c.h.b16 %v2823
    %v3026 = vunpack.c.l.b16 %v2824
    %v3027 = vunpack.c.h.b16 %v2824
    %v3028 = vunpack.c.l.b16 %v2825
    %v3029 = vunpack.c.h.b16 %v2825
    %v3030 = vpack.c.b16 %v2904, %v2902
    %v3031 = vpack.c.b16 %v2905, %v2903
    %v3032 = vpack.c.b16 %v2908, %v2906
    %v3033 = vpack.c.b16 %v2909, %v2907
    %v3034 = vpack.c.b16 %v2912, %v2910
    %v3035 = vpack.c.b16 %v2913, %v2911
    %v3036 = vpack.c.b16 %v2916, %v2914
    %v3037 = vpack.c.b16 %v2917, %v2915
    %v3038 = vpack.c.b16 %v2920, %v2918
    %v3039 = vpack.c.b16 %v2921, %v2919
    %v3040 = vpack.c.b16 %v2924, %v2922
    %v3041 = vpack.c.b16 %v2925, %v2923
    %v3042 = vpack.c.b16 %v2928, %v2926
    %v3043 = vpack.c.b16 %v2929, %v2927
    %v3044 = vpack.c.b16 %v2932, %v2930
    %v3045 = vpack.c.b16 %v2933, %v2931
    %v3046 = vpack.c.b16 %v2936, %v2934
    %v3047 = vpack.c.b16 %v2937, %v2935
    %v3048 = vpack.c.b16 %v2940, %v2938
    %v3049 = vpack.c.b16 %v2941, %v2939
    %v3050 = vpack.c.b16 %v2944, %v2942
    %v3051 = vpack.c.b16 %v2945, %v2943
    %v3052 = vpack.c.b16 %v2948, %v2946
    %v3053 = vpack.c.b16 %v2949, %v2947
    %v3054 = vpack.c.b16 %v2952, %v2950
    %v3055 = vpack.c.b16 %v2953, %v2951
    %v3056 = vpack.c.b16 %v2956, %v2954
    %v3057 = vpack.c.b16 %v2957, %v2955
    %v3058 = vpack.c.b16 %v2960, %v2958
    %v3059 = vpack.c.b16 %v2961, %v2959
    %v3060 = vpack.c.b16 %v2964, %v2962
    %v3061 = vpack.c.b16 %v2965, %v2963
    %v3062 = vpack.c.b16 %v2968, %v2966
    %v3063 = vpack.c.b16 %v2969, %v2967
    %v3064 = vpack.c.b16 %v2972, %v2970
    %v3065 = vpack.c.b16 %v2973, %v2971
    %v3066 = vpack.c.b16 %v2976, %v2974
    %v3067 = vpack.c.b16 %v2977, %v2975
    %v3068 = vpack.c.b16 %v2980, %v2978
    %v3069 = vpack.c.b16 %v2981, %v2979
    %v3070 = vpack.c.b16 %v2984, %v2982
    %v3071 = vpack.c.b16 %v2985, %v2983
    %v3072 = vpack.c.b16 %v2988, %v2986
    %v3073 = vpack.c.b16 %v2989, %v2987
    %v3074 = vpack.c.b16 %v2992, %v2990
    %v3075 = vpack.c.b16 %v2993, %v2991
    %v3076 = vpack.c.b16 %v2996, %v2994
    %v3077 = vpack.c.b16 %v2997, %v2995
    %v3078 = vpack.c.b16 %v3000, %v2998
    %v3079 = vpack.c.b16 %v3001, %v2999
    %v3080 = vpack.c.b16 %v3004, %v3002
    %v3081 = vpack.c.b16 %v3005, %v3003
    %v3082 = vpack.c.b16 %v3008, %v3006
    %v3083 = vpack.c.b16 %v3009, %v3007
    %v3084 = vpack.c.b16 %v3012, %v3010
    %v3085 = vpack.c.b16 %v3013, %v3011
    %v3086 = vpack.c.b16 %v3016, %v3014
    %v3087 = vpack.c.b16 %v3017, %v3015
    %v3088 = vpack.c.b16 %v3020, %v3018
    %v3089 = vpack.c.b16 %v3021, %v3019
    %v3090 = vpack.c.b16 %v3024, %v3022
    %v3091 = vpack.c.b16 %v3025, %v3023
    %v3092 = vpack.c.b16 %v3028, %v3026
    %v3093 = vpack.c.b16 %v3029, %v3027
    %3158 = vmatprep.subr.bf16.mxu0 %v3045
    %3159 = vmatpush1.bf16.msra.mxu0 %v3044
    %3160 = vmatprep.subr.bf16.mxu0 %v3043
    %3161 = vmatpush1.bf16.msra.mxu0 %v3042
    %3162 = vmatprep.subr.bf16.mxu0 %v3041
    %3163 = vmatpush1.bf16.msra.mxu0 %v3040
    %3164 = vmatprep.subr.bf16.mxu0 %v3039
    %3165 = vmatpush1.bf16.msra.mxu0 %v3038
    %3166 = vmatprep.subr.bf16.mxu0 %v3037
    %3167 = vmatpush1.bf16.msra.mxu0 %v3036
    %3168 = vmatprep.subr.bf16.mxu0 %v3035
    %3169 = vmatpush1.bf16.msra.mxu0 %v3034
    %3170 = vmatprep.subr.bf16.mxu0 %v3033
    %3171 = vmatpush1.bf16.msra.mxu0 %v3032
    %3172 = vmatprep.subr.bf16.mxu0 %v3031
    %3173 = vmatpush1.bf16.msra.mxu0 %v3030
    %3174 = vmatprep.subr.bf16.mxu0 %v3061
    %3175 = vmatpush2.bf16.msra.mxu0 %v3060
    %3176 = vmatprep.subr.bf16.mxu0 %v3059
    %3177 = vmatpush2.bf16.msra.mxu0 %v3058
    %3178 = vmatprep.subr.bf16.mxu0 %v3057
    %3179 = vmatpush2.bf16.msra.mxu0 %v3056
    %3180 = vmatprep.subr.bf16.mxu0 %v3055
    %3181 = vmatpush2.bf16.msra.mxu0 %v3054
    %3182 = vmatprep.subr.bf16.mxu0 %v3053
    %3183 = vmatpush2.bf16.msra.mxu0 %v3052
    %3184 = vmatprep.subr.bf16.mxu0 %v3051
    %3185 = vmatpush2.bf16.msra.mxu0 %v3050
    %3186 = vmatprep.subr.bf16.mxu0 %v3049
    %3187 = vmatpush2.bf16.msra.mxu0 %v3048
    %3188 = vmatprep.subr.bf16.mxu0 %v3047
    %3189 = vmatpush2.bf16.msra.mxu0 %v3046
    %3190 = vmatprep.mubr.bf16.mxu0 %v2759
    %3191 = vmatmul.mubr.bf16.gmra.mxu0 %v2758
    %v3192 = vpop.f32.mrf.mxu0
    %v3193 = vadd.f32 %v2831, %v3192
    %v3194 = vpop.f32.mrf.mxu0
    %v3195 = vadd.f32 %v2835, %v3194
    %v3196 = vpop.f32.mrf.mxu0
    %v3197 = vadd.f32 %v2831, %v3196
    %v3198 = vpop.f32.mrf.mxu0
    %v3199 = vadd.f32 %v2835, %v3198
    %3200 = vdwg.mxu0
    %3201 = vmatprep.subr.bf16.mxu0 %v3077
    %3202 = vmatpush1.bf16.msra.mxu0 %v3076
    %3203 = vmatprep.subr.bf16.mxu0 %v3075
    %3204 = vmatpush1.bf16.msra.mxu0 %v3074
    %3205 = vmatprep.subr.bf16.mxu0 %v3073
    %3206 = vmatpush1.bf16.msra.mxu0 %v3072
    %3207 = vmatprep.subr.bf16.mxu0 %v3071
    %3208 = vmatpush1.bf16.msra.mxu0 %v3070
    %3209 = vmatprep.subr.bf16.mxu0 %v3069
    %3210 = vmatpush1.bf16.msra.mxu0 %v3068
    %3211 = vmatprep.subr.bf16.mxu0 %v3067
    %3212 = vmatpush1.bf16.msra.mxu0 %v3066
    %3213 = vmatprep.subr.bf16.mxu0 %v3065
    %3214 = vmatpush1.bf16.msra.mxu0 %v3064
    %3215 = vmatprep.subr.bf16.mxu0 %v3063
    %3216 = vmatpush1.bf16.msra.mxu0 %v3062
    %3217 = vmatprep.subr.bf16.mxu0 %v3093
    %3218 = vmatpush2.bf16.msra.mxu0 %v3092
    %3219 = vmatprep.subr.bf16.mxu0 %v3091
    %3220 = vmatpush2.bf16.msra.mxu0 %v3090
    %3221 = vmatprep.subr.bf16.mxu0 %v3089
    %3222 = vmatpush2.bf16.msra.mxu0 %v3088
    %3223 = vmatprep.subr.bf16.mxu0 %v3087
    %3224 = vmatpush2.bf16.msra.mxu0 %v3086
    %3225 = vmatprep.subr.bf16.mxu0 %v3085
    %3226 = vmatpush2.bf16.msra.mxu0 %v3084
    %3227 = vmatprep.subr.bf16.mxu0 %v3083
    %3228 = vmatpush2.bf16.msra.mxu0 %v3082
    %3229 = vmatprep.subr.bf16.mxu0 %v3081
    %3230 = vmatpush2.bf16.msra.mxu0 %v3080
    %3231 = vmatprep.subr.bf16.mxu0 %v3079
    %3232 = vmatpush2.bf16.msra.mxu0 %v3078
    %3233 = vmatprep.mubr.bf16.mxu0 %v2761
    %3234 = vmatmul.mubr.bf16.gmra.mxu0 %v2760
    %v3235 = vpop.f32.mrf.mxu0
    %v3236 = vadd.f32 %v3193, %v3235
    %v3237 = vpop.f32.mrf.mxu0
    %v3238 = vadd.f32 %v3195, %v3237
    %v3239 = vpop.f32.mrf.mxu0
    %v3240 = vadd.f32 %v3197, %v3239
    %v3241 = vpop.f32.mrf.mxu0
    %v3242 = vadd.f32 %v3199, %v3241
    %3243 = vdwg.mxu0
    %v3244 = vtanh.pop %v3236
    %v3245 = vtanh.pop %v3238
    %v3246 = vtanh.pop %v3240
    %v3247 = vtanh.pop %v3242
    %v3248 = vpack.c.bf16 %v3246, %v3244
    %v3249 = vpack.c.bf16 %v3247, %v3245
    %v3250 = vld [vmem:[#allocation14] sm:$0xff]
    %v3251 = vld [vmem:[#allocation14 + $0x8] sm:$0xff]
    %v3252 = vld [vmem:[#allocation14 + $0x10] sm:$0xff]
    %v3253 = vld [vmem:[#allocation14 + $0x18] sm:$0xff]
    %v3254 = vld [vmem:[#allocation14 + $0x20] sm:$0xff]
    %v3255 = vld [vmem:[#allocation14 + $0x28] sm:$0xff]
    %v3256 = vld [vmem:[#allocation14 + $0x30] sm:$0xff]
    %v3257 = vld [vmem:[#allocation14 + $0x38] sm:$0xff]
    %v3258 = vld [vmem:[#allocation14 + $0x40] sm:$0xff]
    %v3259 = vld [vmem:[#allocation14 + $0x48] sm:$0xff]
    %v3260 = vld [vmem:[#allocation14 + $0x50] sm:$0xff]
    %v3261 = vld [vmem:[#allocation14 + $0x58] sm:$0xff]
    %v3262 = vld [vmem:[#allocation14 + $0x60] sm:$0xff]
    %v3263 = vld [vmem:[#allocation14 + $0x68] sm:$0xff]
    %v3264 = vld [vmem:[#allocation14 + $0x70] sm:$0xff]
    %v3265 = vld [vmem:[#allocation14 + $0x78] sm:$0xff]
    %v3266 = vld [vmem:[#allocation14 + $0x80] sm:$0xff]
    %v3267 = vld [vmem:[#allocation14 + $0x88] sm:$0xff]
    %v3268 = vld [vmem:[#allocation14 + $0x90] sm:$0xff]
    %v3269 = vld [vmem:[#allocation14 + $0x98] sm:$0xff]
    %v3270 = vld [vmem:[#allocation14 + $0xa0] sm:$0xff]
    %v3271 = vld [vmem:[#allocation14 + $0xa8] sm:$0xff]
    %v3272 = vld [vmem:[#allocation14 + $0xb0] sm:$0xff]
    %v3273 = vld [vmem:[#allocation14 + $0xb8] sm:$0xff]
    %v3274 = vld [vmem:[#allocation14 + $0xc0] sm:$0xff]
    %v3275 = vld [vmem:[#allocation14 + $0xc8] sm:$0xff]
    %v3276 = vld [vmem:[#allocation14 + $0xd0] sm:$0xff]
    %v3277 = vld [vmem:[#allocation14 + $0xd8] sm:$0xff]
    %v3278 = vld [vmem:[#allocation14 + $0xe0] sm:$0xff]
    %v3279 = vld [vmem:[#allocation14 + $0xe8] sm:$0xff]
    %v3280 = vld [vmem:[#allocation14 + $0xf0] sm:$0xff]
    %v3281 = vld [vmem:[#allocation14 + $0xf8] sm:$0xff]
    %v3282 = vld [vmem:[#allocation16] sm:$0x3]
    %v3284 = vlaneseq
    %v3285 = vshrl.u32 %v3284, 7
    %v3286 = vsub.s32 0, %v3285
    %v3287 = vrot.slane %v3282, %v3286
    %v3288 = vlaneseq
    %v3289 = vshrl.u32 %v3288, 7
    %v3290 = vsub.s32 1, %v3289
    %v3291 = vrot.slane %v3282, %v3290
    %v3326 = vunpack.c.l.b16 %v3250
    %v3327 = vunpack.c.h.b16 %v3250
    %v3328 = vunpack.c.l.b16 %v3251
    %v3329 = vunpack.c.h.b16 %v3251
    %v3330 = vunpack.c.l.b16 %v3252
    %v3331 = vunpack.c.h.b16 %v3252
    %v3332 = vunpack.c.l.b16 %v3253
    %v3333 = vunpack.c.h.b16 %v3253
    %v3334 = vunpack.c.l.b16 %v3254
    %v3335 = vunpack.c.h.b16 %v3254
    %v3336 = vunpack.c.l.b16 %v3255
    %v3337 = vunpack.c.h.b16 %v3255
    %v3338 = vunpack.c.l.b16 %v3256
    %v3339 = vunpack.c.h.b16 %v3256
    %v3340 = vunpack.c.l.b16 %v3257
    %v3341 = vunpack.c.h.b16 %v3257
    %v3342 = vunpack.c.l.b16 %v3258
    %v3343 = vunpack.c.h.b16 %v3258
    %v3344 = vunpack.c.l.b16 %v3259
    %v3345 = vunpack.c.h.b16 %v3259
    %v3346 = vunpack.c.l.b16 %v3260
    %v3347 = vunpack.c.h.b16 %v3260
    %v3348 = vunpack.c.l.b16 %v3261
    %v3349 = vunpack.c.h.b16 %v3261
    %v3350 = vunpack.c.l.b16 %v3262
    %v3351 = vunpack.c.h.b16 %v3262
    %v3352 = vunpack.c.l.b16 %v3263
    %v3353 = vunpack.c.h.b16 %v3263
    %v3354 = vunpack.c.l.b16 %v3264
    %v3355 = vunpack.c.h.b16 %v3264
    %v3356 = vunpack.c.l.b16 %v3265
    %v3357 = vunpack.c.h.b16 %v3265
    %v3358 = vunpack.c.l.b16 %v3266
    %v3359 = vunpack.c.h.b16 %v3266
    %v3360 = vunpack.c.l.b16 %v3267
    %v3361 = vunpack.c.h.b16 %v3267
    %v3362 = vunpack.c.l.b16 %v3268
    %v3363 = vunpack.c.h.b16 %v3268
    %v3364 = vunpack.c.l.b16 %v3269
    %v3365 = vunpack.c.h.b16 %v3269
    %v3366 = vunpack.c.l.b16 %v3270
    %v3367 = vunpack.c.h.b16 %v3270
    %v3368 = vunpack.c.l.b16 %v3271
    %v3369 = vunpack.c.h.b16 %v3271
    %v3370 = vunpack.c.l.b16 %v3272
    %v3371 = vunpack.c.h.b16 %v3272
    %v3372 = vunpack.c.l.b16 %v3273
    %v3373 = vunpack.c.h.b16 %v3273
    %v3374 = vunpack.c.l.b16 %v3274
    %v3375 = vunpack.c.h.b16 %v3274
    %v3376 = vunpack.c.l.b16 %v3275
    %v3377 = vunpack.c.h.b16 %v3275
    %v3378 = vunpack.c.l.b16 %v3276
    %v3379 = vunpack.c.h.b16 %v3276
    %v3380 = vunpack.c.l.b16 %v3277
    %v3381 = vunpack.c.h.b16 %v3277
    %v3382 = vunpack.c.l.b16 %v3278
    %v3383 = vunpack.c.h.b16 %v3278
    %v3384 = vunpack.c.l.b16 %v3279
    %v3385 = vunpack.c.h.b16 %v3279
    %v3386 = vunpack.c.l.b16 %v3280
    %v3387 = vunpack.c.h.b16 %v3280
    %v3388 = vunpack.c.l.b16 %v3281
    %v3389 = vunpack.c.h.b16 %v3281
    %v3390 = vpack.c.b16 %v3328, %v3326
    %v3391 = vpack.c.b16 %v3329, %v3327
    %v3392 = vpack.c.b16 %v3332, %v3330
    %v3393 = vpack.c.b16 %v3333, %v3331
    %v3394 = vpack.c.b16 %v3336, %v3334
    %v3395 = vpack.c.b16 %v3337, %v3335
    %v3396 = vpack.c.b16 %v3340, %v3338
    %v3397 = vpack.c.b16 %v3341, %v3339
    %v3398 = vpack.c.b16 %v3344, %v3342
    %v3399 = vpack.c.b16 %v3345, %v3343
    %v3400 = vpack.c.b16 %v3348, %v3346
    %v3401 = vpack.c.b16 %v3349, %v3347
    %v3402 = vpack.c.b16 %v3352, %v3350
    %v3403 = vpack.c.b16 %v3353, %v3351
    %v3404 = vpack.c.b16 %v3356, %v3354
    %v3405 = vpack.c.b16 %v3357, %v3355
    %v3406 = vpack.c.b16 %v3360, %v3358
    %v3407 = vpack.c.b16 %v3361, %v3359
    %v3408 = vpack.c.b16 %v3364, %v3362
    %v3409 = vpack.c.b16 %v3365, %v3363
    %v3410 = vpack.c.b16 %v3368, %v3366
    %v3411 = vpack.c.b16 %v3369, %v3367
    %v3412 = vpack.c.b16 %v3372, %v3370
    %v3413 = vpack.c.b16 %v3373, %v3371
    %v3414 = vpack.c.b16 %v3376, %v3374
    %v3415 = vpack.c.b16 %v3377, %v3375
    %v3416 = vpack.c.b16 %v3380, %v3378
    %v3417 = vpack.c.b16 %v3381, %v3379
    %v3418 = vpack.c.b16 %v3384, %v3382
    %v3419 = vpack.c.b16 %v3385, %v3383
    %v3420 = vpack.c.b16 %v3388, %v3386
    %v3421 = vpack.c.b16 %v3389, %v3387
    %3454 = vmatprep.subr.bf16.mxu0 %v3405
    %3455 = vmatpush1.bf16.msra.mxu0 %v3404
    %3456 = vmatprep.subr.bf16.mxu0 %v3403
    %3457 = vmatpush1.bf16.msra.mxu0 %v3402
    %3458 = vmatprep.subr.bf16.mxu0 %v3401
    %3459 = vmatpush1.bf16.msra.mxu0 %v3400
    %3460 = vmatprep.subr.bf16.mxu0 %v3399
    %3461 = vmatpush1.bf16.msra.mxu0 %v3398
    %3462 = vmatprep.subr.bf16.mxu0 %v3397
    %3463 = vmatpush1.bf16.msra.mxu0 %v3396
    %3464 = vmatprep.subr.bf16.mxu0 %v3395
    %3465 = vmatpush1.bf16.msra.mxu0 %v3394
    %3466 = vmatprep.subr.bf16.mxu0 %v3393
    %3467 = vmatpush1.bf16.msra.mxu0 %v3392
    %3468 = vmatprep.subr.bf16.mxu0 %v3391
    %3469 = vmatpush1.bf16.msra.mxu0 %v3390
    %3470 = vmatprep.subr.bf16.mxu0 %v3421
    %3471 = vmatpush2.bf16.msra.mxu0 %v3420
    %3472 = vmatprep.subr.bf16.mxu0 %v3419
    %3473 = vmatpush2.bf16.msra.mxu0 %v3418
    %3474 = vmatprep.subr.bf16.mxu0 %v3417
    %3475 = vmatpush2.bf16.msra.mxu0 %v3416
    %3476 = vmatprep.subr.bf16.mxu0 %v3415
    %3477 = vmatpush2.bf16.msra.mxu0 %v3414
    %3478 = vmatprep.subr.bf16.mxu0 %v3413
    %3479 = vmatpush2.bf16.msra.mxu0 %v3412
    %3480 = vmatprep.subr.bf16.mxu0 %v3411
    %3481 = vmatpush2.bf16.msra.mxu0 %v3410
    %3482 = vmatprep.subr.bf16.mxu0 %v3409
    %3483 = vmatpush2.bf16.msra.mxu0 %v3408
    %3484 = vmatprep.subr.bf16.mxu0 %v3407
    %3485 = vmatpush2.bf16.msra.mxu0 %v3406
    %3486 = vmatprep.mubr.bf16.mxu0 %v3249
    %3487 = vmatmul.mubr.bf16.gmra.mxu0 %v3248
    %v3488 = vpop.f32.mrf.mxu0
    %v3489 = vadd.f32 %v3287, %v3488
    %v3490 = vpop.f32.mrf.mxu0
    %v3491 = vadd.f32 %v3291, %v3490
    %v3492 = vpop.f32.mrf.mxu0
    %v3493 = vadd.f32 %v3287, %v3492
    %v3494 = vpop.f32.mrf.mxu0
    %v3495 = vadd.f32 %v3291, %v3494
    %3496 = vdwg.mxu0
    %v3497 = vunpack.c.l.bf16 %v218
    %v3498 = vunpack.c.l.bf16 %v219
    %v3499 = vmul.f32 %v3491, 0.5
    %v3500 = vmul.f32 %v3495, 0.5
    %v3501 = vmul.f32 %v3499, 1.442695
    %v3502 = vpow.pop %v3501
    %v3503 = vmul.f32 %v3500, 1.442695
    %v3504 = vpow.pop %v3503
    %v3505 = vmul.f32 %v3497, %v3502
    %v3506 = vmul.f32 %v3498, %v3504
    %v3507 = vadd.f32 %v3505, %v3489
    %v3508 = vadd.f32 %v3506, %v3493
    %v3509 = vpack.c.bf16 %v3508, %v3507
    %v3510 = vld [vmem:[#allocation17] sm:$0xff]
    %v3511 = vld [vmem:[#allocation17 + $0x8] sm:$0xff]
    %v3512 = vld [vmem:[#allocation17 + $0x10] sm:$0xff]
    %v3513 = vld [vmem:[#allocation17 + $0x18] sm:$0xff]
    %v3514 = vld [vmem:[#allocation17 + $0x20] sm:$0xff]
    %v3515 = vld [vmem:[#allocation17 + $0x28] sm:$0xff]
    %v3516 = vld [vmem:[#allocation17 + $0x30] sm:$0xff]
    %v3517 = vld [vmem:[#allocation17 + $0x38] sm:$0xff]
    %v3518 = vld [vmem:[#allocation17 + $0x40] sm:$0xff]
    %v3519 = vld [vmem:[#allocation17 + $0x48] sm:$0xff]
    %v3520 = vld [vmem:[#allocation17 + $0x50] sm:$0xff]
    %v3521 = vld [vmem:[#allocation17 + $0x58] sm:$0xff]
    %v3522 = vld [vmem:[#allocation17 + $0x60] sm:$0xff]
    %v3523 = vld [vmem:[#allocation17 + $0x68] sm:$0xff]
    %v3524 = vld [vmem:[#allocation17 + $0x70] sm:$0xff]
    %v3525 = vld [vmem:[#allocation17 + $0x78] sm:$0xff]
    %v3526 = vld [vmem:[#allocation17 + $0x80] sm:$0xff]
    %v3527 = vld [vmem:[#allocation17 + $0x88] sm:$0xff]
    %v3528 = vld [vmem:[#allocation17 + $0x90] sm:$0xff]
    %v3529 = vld [vmem:[#allocation17 + $0x98] sm:$0xff]
    %v3530 = vld [vmem:[#allocation17 + $0xa0] sm:$0xff]
    %v3531 = vld [vmem:[#allocation17 + $0xa8] sm:$0xff]
    %v3532 = vld [vmem:[#allocation17 + $0xb0] sm:$0xff]
    %v3533 = vld [vmem:[#allocation17 + $0xb8] sm:$0xff]
    %v3534 = vld [vmem:[#allocation17 + $0xc0] sm:$0xff]
    %v3535 = vld [vmem:[#allocation17 + $0xc8] sm:$0xff]
    %v3536 = vld [vmem:[#allocation17 + $0xd0] sm:$0xff]
    %v3537 = vld [vmem:[#allocation17 + $0xd8] sm:$0xff]
    %v3538 = vld [vmem:[#allocation17 + $0xe0] sm:$0xff]
    %v3539 = vld [vmem:[#allocation17 + $0xe8] sm:$0xff]
    %v3540 = vld [vmem:[#allocation17 + $0xf0] sm:$0xff]
    %v3541 = vld [vmem:[#allocation17 + $0xf8] sm:$0xff]
    %v3542 = vld [vmem:[%s11] sm:$0xf]
    %v3544 = vlaneseq
    %v3545 = vshrl.u32 %v3544, 7
    %v3546 = vsub.s32 0, %v3545
    %v3547 = vrot.slane %v3542, %v3546
    %v3548 = vlaneseq
    %v3549 = vshrl.u32 %v3548, 7
    %v3550 = vsub.s32 1, %v3549
    %v3551 = vrot.slane %v3542, %v3550
    %v3552 = vlaneseq
    %v3553 = vshrl.u32 %v3552, 7
    %v3554 = vsub.s32 2, %v3553
    %v3555 = vrot.slane %v3542, %v3554
    %v3556 = vlaneseq
    %v3557 = vshrl.u32 %v3556, 7
    %v3558 = vsub.s32 3, %v3557
    %v3559 = vrot.slane %v3542, %v3558
    %v3596 = vunpack.c.l.b16 %v3510
    %v3597 = vunpack.c.h.b16 %v3510
    %v3598 = vunpack.c.l.b16 %v3511
    %v3599 = vunpack.c.h.b16 %v3511
    %v3600 = vunpack.c.l.b16 %v3512
    %v3601 = vunpack.c.h.b16 %v3512
    %v3602 = vunpack.c.l.b16 %v3513
    %v3603 = vunpack.c.h.b16 %v3513
    %v3604 = vunpack.c.l.b16 %v3514
    %v3605 = vunpack.c.h.b16 %v3514
    %v3606 = vunpack.c.l.b16 %v3515
    %v3607 = vunpack.c.h.b16 %v3515
    %v3608 = vunpack.c.l.b16 %v3516
    %v3609 = vunpack.c.h.b16 %v3516
    %v3610 = vunpack.c.l.b16 %v3517
    %v3611 = vunpack.c.h.b16 %v3517
    %v3612 = vunpack.c.l.b16 %v3518
    %v3613 = vunpack.c.h.b16 %v3518
    %v3614 = vunpack.c.l.b16 %v3519
    %v3615 = vunpack.c.h.b16 %v3519
    %v3616 = vunpack.c.l.b16 %v3520
    %v3617 = vunpack.c.h.b16 %v3520
    %v3618 = vunpack.c.l.b16 %v3521
    %v3619 = vunpack.c.h.b16 %v3521
    %v3620 = vunpack.c.l.b16 %v3522
    %v3621 = vunpack.c.h.b16 %v3522
    %v3622 = vunpack.c.l.b16 %v3523
    %v3623 = vunpack.c.h.b16 %v3523
    %v3624 = vunpack.c.l.b16 %v3524
    %v3625 = vunpack.c.h.b16 %v3524
    %v3626 = vunpack.c.l.b16 %v3525
    %v3627 = vunpack.c.h.b16 %v3525
    %v3628 = vunpack.c.l.b16 %v3526
    %v3629 = vunpack.c.h.b16 %v3526
    %v3630 = vunpack.c.l.b16 %v3527
    %v3631 = vunpack.c.h.b16 %v3527
    %v3632 = vunpack.c.l.b16 %v3528
    %v3633 = vunpack.c.h.b16 %v3528
    %v3634 = vunpack.c.l.b16 %v3529
    %v3635 = vunpack.c.h.b16 %v3529
    %v3636 = vunpack.c.l.b16 %v3530
    %v3637 = vunpack.c.h.b16 %v3530
    %v3638 = vunpack.c.l.b16 %v3531
    %v3639 = vunpack.c.h.b16 %v3531
    %v3640 = vunpack.c.l.b16 %v3532
    %v3641 = vunpack.c.h.b16 %v3532
    %v3642 = vunpack.c.l.b16 %v3533
    %v3643 = vunpack.c.h.b16 %v3533
    %v3644 = vunpack.c.l.b16 %v3534
    %v3645 = vunpack.c.h.b16 %v3534
    %v3646 = vunpack.c.l.b16 %v3535
    %v3647 = vunpack.c.h.b16 %v3535
    %v3648 = vunpack.c.l.b16 %v3536
    %v3649 = vunpack.c.h.b16 %v3536
    %v3650 = vunpack.c.l.b16 %v3537
    %v3651 = vunpack.c.h.b16 %v3537
    %v3652 = vunpack.c.l.b16 %v3538
    %v3653 = vunpack.c.h.b16 %v3538
    %v3654 = vunpack.c.l.b16 %v3539
    %v3655 = vunpack.c.h.b16 %v3539
    %v3656 = vunpack.c.l.b16 %v3540
    %v3657 = vunpack.c.h.b16 %v3540
    %v3658 = vunpack.c.l.b16 %v3541
    %v3659 = vunpack.c.h.b16 %v3541
    %v3660 = vpack.c.b16 %v3600, %v3596
    %v3661 = vpack.c.b16 %v3601, %v3597
    %v3662 = vpack.c.b16 %v3602, %v3598
    %v3663 = vpack.c.b16 %v3603, %v3599
    %v3664 = vpack.c.b16 %v3608, %v3604
    %v3665 = vpack.c.b16 %v3609, %v3605
    %v3666 = vpack.c.b16 %v3610, %v3606
    %v3667 = vpack.c.b16 %v3611, %v3607
    %v3668 = vpack.c.b16 %v3616, %v3612
    %v3669 = vpack.c.b16 %v3617, %v3613
    %v3670 = vpack.c.b16 %v3618, %v3614
    %v3671 = vpack.c.b16 %v3619, %v3615
    %v3672 = vpack.c.b16 %v3624, %v3620
    %v3673 = vpack.c.b16 %v3625, %v3621
    %v3674 = vpack.c.b16 %v3626, %v3622
    %v3675 = vpack.c.b16 %v3627, %v3623
    %v3676 = vpack.c.b16 %v3632, %v3628
    %v3677 = vpack.c.b16 %v3633, %v3629
    %v3678 = vpack.c.b16 %v3634, %v3630
    %v3679 = vpack.c.b16 %v3635, %v3631
    %v3680 = vpack.c.b16 %v3640, %v3636
    %v3681 = vpack.c.b16 %v3641, %v3637
    %v3682 = vpack.c.b16 %v3642, %v3638
    %v3683 = vpack.c.b16 %v3643, %v3639
    %v3684 = vpack.c.b16 %v3648, %v3644
    %v3685 = vpack.c.b16 %v3649, %v3645
    %v3686 = vpack.c.b16 %v3650, %v3646
    %v3687 = vpack.c.b16 %v3651, %v3647
    %v3688 = vpack.c.b16 %v3656, %v3652
    %v3689 = vpack.c.b16 %v3657, %v3653
    %v3690 = vpack.c.b16 %v3658, %v3654
    %v3691 = vpack.c.b16 %v3659, %v3655
    %3724 = vmatprep.subr.bf16.mxu0 %v3689
    %3725 = vmatpush1.bf16.msra.mxu0 %v3688
    %3726 = vmatprep.subr.bf16.mxu0 %v3685
    %3727 = vmatpush1.bf16.msra.mxu0 %v3684
    %3728 = vmatprep.subr.bf16.mxu0 %v3681
    %3729 = vmatpush1.bf16.msra.mxu0 %v3680
    %3730 = vmatprep.subr.bf16.mxu0 %v3677
    %3731 = vmatpush1.bf16.msra.mxu0 %v3676
    %3732 = vmatprep.subr.bf16.mxu0 %v3673
    %3733 = vmatpush1.bf16.msra.mxu0 %v3672
    %3734 = vmatprep.subr.bf16.mxu0 %v3669
    %3735 = vmatpush1.bf16.msra.mxu0 %v3668
    %3736 = vmatprep.subr.bf16.mxu0 %v3665
    %3737 = vmatpush1.bf16.msra.mxu0 %v3664
    %3738 = vmatprep.subr.bf16.mxu0 %v3661
    %3739 = vmatpush1.bf16.msra.mxu0 %v3660
    %3740 = vmatprep.subr.bf16.mxu0 0
    %3741 = vmatpush2.bf16.msra.mxu0 0
    %3742 = vmatprep.subr.bf16.mxu0 0
    %3743 = vmatpush2.bf16.msra.mxu0 0
    %3744 = vmatprep.subr.bf16.mxu0 0
    %3745 = vmatpush2.bf16.msra.mxu0 0
    %3746 = vmatprep.subr.bf16.mxu0 0
    %3747 = vmatpush2.bf16.msra.mxu0 0
    %3748 = vmatprep.subr.bf16.mxu0 0
    %3749 = vmatpush2.bf16.msra.mxu0 0
    %3750 = vmatprep.subr.bf16.mxu0 0
    %3751 = vmatpush2.bf16.msra.mxu0 0
    %3752 = vmatprep.subr.bf16.mxu0 0
    %3753 = vmatpush2.bf16.msra.mxu0 0
    %3754 = vmatprep.subr.bf16.mxu0 0
    %3755 = vmatpush2.bf16.msra.mxu0 0
    %3756 = vmatprep.mubr.bf16.mxu0 0
    %3757 = vmatmul.mubr.bf16.gmra.mxu0 %v3509
    %v3758 = vpop.f32.mrf.mxu0
    %v3759 = vadd.f32 %v3547, %v3758
    %v3760 = vpop.f32.mrf.mxu0
    %v3761 = vadd.f32 %v3551, %v3760
    %v3762 = vpop.f32.mrf.mxu0
    %v3763 = vadd.f32 %v3547, %v3762
    %v3764 = vpop.f32.mrf.mxu0
    %v3765 = vadd.f32 %v3551, %v3764
    %3766 = vdwg.mxu0
    %3767 = vmatprep.subr.bf16.mxu0 %v3691
    %3768 = vmatpush1.bf16.msra.mxu0 %v3690
    %3769 = vmatprep.subr.bf16.mxu0 %v3687
    %3770 = vmatpush1.bf16.msra.mxu0 %v3686
    %3771 = vmatprep.subr.bf16.mxu0 %v3683
    %3772 = vmatpush1.bf16.msra.mxu0 %v3682
    %3773 = vmatprep.subr.bf16.mxu0 %v3679
    %3774 = vmatpush1.bf16.msra.mxu0 %v3678
    %3775 = vmatprep.subr.bf16.mxu0 %v3675
    %3776 = vmatpush1.bf16.msra.mxu0 %v3674
    %3777 = vmatprep.subr.bf16.mxu0 %v3671
    %3778 = vmatpush1.bf16.msra.mxu0 %v3670
    %3779 = vmatprep.subr.bf16.mxu0 %v3667
    %3780 = vmatpush1.bf16.msra.mxu0 %v3666
    %3781 = vmatprep.subr.bf16.mxu0 %v3663
    %3782 = vmatpush1.bf16.msra.mxu0 %v3662
    %3783 = vmatprep.subr.bf16.mxu0 0
    %3784 = vmatpush2.bf16.msra.mxu0 0
    %3785 = vmatprep.subr.bf16.mxu0 0
    %3786 = vmatpush2.bf16.msra.mxu0 0
    %3787 = vmatprep.subr.bf16.mxu0 0
    %3788 = vmatpush2.bf16.msra.mxu0 0
    %3789 = vmatprep.subr.bf16.mxu0 0
    %3790 = vmatpush2.bf16.msra.mxu0 0
    %3791 = vmatprep.subr.bf16.mxu0 0
    %3792 = vmatpush2.bf16.msra.mxu0 0
    %3793 = vmatprep.subr.bf16.mxu0 0
    %3794 = vmatpush2.bf16.msra.mxu0 0
    %3795 = vmatprep.subr.bf16.mxu0 0
    %3796 = vmatpush2.bf16.msra.mxu0 0
    %3797 = vmatprep.subr.bf16.mxu0 0
    %3798 = vmatpush2.bf16.msra.mxu0 0
    %3799 = vmatprep.mubr.bf16.mxu0 0
    %3800 = vmatmul.mubr.bf16.gmra.mxu0 %v3509
    %v3801 = vpop.f32.mrf.mxu0
    %v3802 = vadd.f32 %v3555, %v3801
    %v3803 = vpop.f32.mrf.mxu0
    %v3804 = vadd.f32 %v3559, %v3803
    %v3805 = vpop.f32.mrf.mxu0
    %v3806 = vadd.f32 %v3555, %v3805
    %v3807 = vpop.f32.mrf.mxu0
    %v3808 = vadd.f32 %v3559, %v3807
    %3809 = vdwg.mxu0
    %v3810 = vtanh.pop %v3759
    %v3811 = vtanh.pop %v3761
    %v3812 = vtanh.pop %v3802
    %v3813 = vtanh.pop %v3804
    %v3814 = vtanh.pop %v3763
    %v3815 = vtanh.pop %v3765
    %v3816 = vtanh.pop %v3806
    %v3817 = vtanh.pop %v3808
    %v3818 = vpack.c.bf16 %v3814, %v3810
    %v3819 = vpack.c.bf16 %v3815, %v3811
    %v3820 = vpack.c.bf16 %v3816, %v3812
    %v3821 = vpack.c.bf16 %v3817, %v3813
    %v3822 = vld [vmem:[#allocation19] sm:$0xff]
    %v3823 = vld [vmem:[#allocation19 + $0x8] sm:$0xff]
    %v3824 = vld [vmem:[#allocation19 + $0x10] sm:$0xff]
    %v3825 = vld [vmem:[#allocation19 + $0x18] sm:$0xff]
    %v3826 = vld [vmem:[#allocation19 + $0x20] sm:$0xff]
    %v3827 = vld [vmem:[#allocation19 + $0x28] sm:$0xff]
    %v3828 = vld [vmem:[#allocation19 + $0x30] sm:$0xff]
    %v3829 = vld [vmem:[#allocation19 + $0x38] sm:$0xff]
    %v3830 = vld [vmem:[#allocation19 + $0x40] sm:$0xff]
    %v3831 = vld [vmem:[#allocation19 + $0x48] sm:$0xff]
    %v3832 = vld [vmem:[#allocation19 + $0x50] sm:$0xff]
    %v3833 = vld [vmem:[#allocation19 + $0x58] sm:$0xff]
    %v3834 = vld [vmem:[#allocation19 + $0x60] sm:$0xff]
    %v3835 = vld [vmem:[#allocation19 + $0x68] sm:$0xff]
    %v3836 = vld [vmem:[#allocation19 + $0x70] sm:$0xff]
    %v3837 = vld [vmem:[#allocation19 + $0x78] sm:$0xff]
    %v3838 = vld [vmem:[#allocation19 + $0x80] sm:$0xff]
    %v3839 = vld [vmem:[#allocation19 + $0x88] sm:$0xff]
    %v3840 = vld [vmem:[#allocation19 + $0x90] sm:$0xff]
    %v3841 = vld [vmem:[#allocation19 + $0x98] sm:$0xff]
    %v3842 = vld [vmem:[#allocation19 + $0xa0] sm:$0xff]
    %v3843 = vld [vmem:[#allocation19 + $0xa8] sm:$0xff]
    %v3844 = vld [vmem:[#allocation19 + $0xb0] sm:$0xff]
    %v3845 = vld [vmem:[#allocation19 + $0xb8] sm:$0xff]
    %v3846 = vld [vmem:[#allocation19 + $0xc0] sm:$0xff]
    %v3847 = vld [vmem:[#allocation19 + $0xc8] sm:$0xff]
    %v3848 = vld [vmem:[#allocation19 + $0xd0] sm:$0xff]
    %v3849 = vld [vmem:[#allocation19 + $0xd8] sm:$0xff]
    %v3850 = vld [vmem:[#allocation19 + $0xe0] sm:$0xff]
    %v3851 = vld [vmem:[#allocation19 + $0xe8] sm:$0xff]
    %v3852 = vld [vmem:[#allocation19 + $0xf0] sm:$0xff]
    %v3853 = vld [vmem:[#allocation19 + $0xf8] sm:$0xff]
    %v3854 = vld [vmem:[#allocation19 + $0x100] sm:$0xff]
    %v3855 = vld [vmem:[#allocation19 + $0x108] sm:$0xff]
    %v3856 = vld [vmem:[#allocation19 + $0x110] sm:$0xff]
    %v3857 = vld [vmem:[#allocation19 + $0x118] sm:$0xff]
    %v3858 = vld [vmem:[#allocation19 + $0x120] sm:$0xff]
    %v3859 = vld [vmem:[#allocation19 + $0x128] sm:$0xff]
    %v3860 = vld [vmem:[#allocation19 + $0x130] sm:$0xff]
    %v3861 = vld [vmem:[#allocation19 + $0x138] sm:$0xff]
    %v3862 = vld [vmem:[#allocation19 + $0x140] sm:$0xff]
    %v3863 = vld [vmem:[#allocation19 + $0x148] sm:$0xff]
    %v3864 = vld [vmem:[#allocation19 + $0x150] sm:$0xff]
    %v3865 = vld [vmem:[#allocation19 + $0x158] sm:$0xff]
    %v3866 = vld [vmem:[#allocation19 + $0x160] sm:$0xff]
    %v3867 = vld [vmem:[#allocation19 + $0x168] sm:$0xff]
    %v3868 = vld [vmem:[#allocation19 + $0x170] sm:$0xff]
    %v3869 = vld [vmem:[#allocation19 + $0x178] sm:$0xff]
    %v3870 = vld [vmem:[#allocation19 + $0x180] sm:$0xff]
    %v3871 = vld [vmem:[#allocation19 + $0x188] sm:$0xff]
    %v3872 = vld [vmem:[#allocation19 + $0x190] sm:$0xff]
    %v3873 = vld [vmem:[#allocation19 + $0x198] sm:$0xff]
    %v3874 = vld [vmem:[#allocation19 + $0x1a0] sm:$0xff]
    %v3875 = vld [vmem:[#allocation19 + $0x1a8] sm:$0xff]
    %v3876 = vld [vmem:[#allocation19 + $0x1b0] sm:$0xff]
    %v3877 = vld [vmem:[#allocation19 + $0x1b8] sm:$0xff]
    %v3878 = vld [vmem:[#allocation19 + $0x1c0] sm:$0xff]
    %v3879 = vld [vmem:[#allocation19 + $0x1c8] sm:$0xff]
    %v3880 = vld [vmem:[#allocation19 + $0x1d0] sm:$0xff]
    %v3881 = vld [vmem:[#allocation19 + $0x1d8] sm:$0xff]
    %v3882 = vld [vmem:[#allocation19 + $0x1e0] sm:$0xff]
    %v3883 = vld [vmem:[#allocation19 + $0x1e8] sm:$0xff]
    %v3884 = vld [vmem:[#allocation19 + $0x1f0] sm:$0xff]
    %v3885 = vld [vmem:[#allocation19 + $0x1f8] sm:$0xff]
    %v3886 = vld [vmem:[#allocation19 + $0x200] sm:$0xff]
    %v3887 = vld [vmem:[#allocation19 + $0x208] sm:$0xff]
    %v3888 = vld [vmem:[#allocation19 + $0x210] sm:$0xff]
    %v3889 = vld [vmem:[#allocation19 + $0x218] sm:$0xff]
    %v3890 = vld [vmem:[#allocation19 + $0x220] sm:$0xff]
    %v3891 = vld [vmem:[#allocation19 + $0x228] sm:$0xff]
    %v3892 = vld [vmem:[#allocation19 + $0x230] sm:$0xff]
    %v3893 = vld [vmem:[#allocation19 + $0x238] sm:$0xff]
    %v3894 = vld [vmem:[#allocation19 + $0x240] sm:$0xff]
    %v3895 = vld [vmem:[#allocation19 + $0x248] sm:$0xff]
    %v3896 = vld [vmem:[#allocation19 + $0x250] sm:$0xff]
    %v3897 = vld [vmem:[#allocation19 + $0x258] sm:$0xff]
    %v3898 = vld [vmem:[#allocation19 + $0x260] sm:$0xff]
    %v3899 = vld [vmem:[#allocation19 + $0x268] sm:$0xff]
    %v3900 = vld [vmem:[#allocation19 + $0x270] sm:$0xff]
    %v3901 = vld [vmem:[#allocation19 + $0x278] sm:$0xff]
    %v3902 = vld [vmem:[#allocation19 + $0x280] sm:$0xff]
    %v3903 = vld [vmem:[#allocation19 + $0x288] sm:$0xff]
    %v3904 = vld [vmem:[#allocation19 + $0x290] sm:$0xff]
    %v3905 = vld [vmem:[#allocation19 + $0x298] sm:$0xff]
    %v3906 = vld [vmem:[#allocation19 + $0x2a0] sm:$0xff]
    %v3907 = vld [vmem:[#allocation19 + $0x2a8] sm:$0xff]
    %v3908 = vld [vmem:[#allocation19 + $0x2b0] sm:$0xff]
    %v3909 = vld [vmem:[#allocation19 + $0x2b8] sm:$0xff]
    %v3910 = vld [vmem:[#allocation19 + $0x2c0] sm:$0xff]
    %v3911 = vld [vmem:[#allocation19 + $0x2c8] sm:$0xff]
    %v3912 = vld [vmem:[#allocation19 + $0x2d0] sm:$0xff]
    %v3913 = vld [vmem:[#allocation19 + $0x2d8] sm:$0xff]
    %v3914 = vld [vmem:[#allocation19 + $0x2e0] sm:$0xff]
    %v3915 = vld [vmem:[#allocation19 + $0x2e8] sm:$0xff]
    %v3916 = vld [vmem:[#allocation19 + $0x2f0] sm:$0xff]
    %v3917 = vld [vmem:[#allocation19 + $0x2f8] sm:$0xff]
    %v3918 = vld [vmem:[#allocation19 + $0x300] sm:$0xff]
    %v3919 = vld [vmem:[#allocation19 + $0x308] sm:$0xff]
    %v3920 = vld [vmem:[#allocation19 + $0x310] sm:$0xff]
    %v3921 = vld [vmem:[#allocation19 + $0x318] sm:$0xff]
    %v3922 = vld [vmem:[#allocation19 + $0x320] sm:$0xff]
    %v3923 = vld [vmem:[#allocation19 + $0x328] sm:$0xff]
    %v3924 = vld [vmem:[#allocation19 + $0x330] sm:$0xff]
    %v3925 = vld [vmem:[#allocation19 + $0x338] sm:$0xff]
    %v3926 = vld [vmem:[#allocation19 + $0x340] sm:$0xff]
    %v3927 = vld [vmem:[#allocation19 + $0x348] sm:$0xff]
    %v3928 = vld [vmem:[#allocation19 + $0x350] sm:$0xff]
    %v3929 = vld [vmem:[#allocation19 + $0x358] sm:$0xff]
    %v3930 = vld [vmem:[#allocation19 + $0x360] sm:$0xff]
    %v3931 = vld [vmem:[#allocation19 + $0x368] sm:$0xff]
    %v3932 = vld [vmem:[#allocation19 + $0x370] sm:$0xff]
    %v3933 = vld [vmem:[#allocation19 + $0x378] sm:$0xff]
    %v3934 = vld [vmem:[#allocation19 + $0x380] sm:$0xff]
    %v3935 = vld [vmem:[#allocation19 + $0x388] sm:$0xff]
    %v3936 = vld [vmem:[#allocation19 + $0x390] sm:$0xff]
    %v3937 = vld [vmem:[#allocation19 + $0x398] sm:$0xff]
    %v3938 = vld [vmem:[#allocation19 + $0x3a0] sm:$0xff]
    %v3939 = vld [vmem:[#allocation19 + $0x3a8] sm:$0xff]
    %v3940 = vld [vmem:[#allocation19 + $0x3b0] sm:$0xff]
    %v3941 = vld [vmem:[#allocation19 + $0x3b8] sm:$0xff]
    %v3942 = vld [vmem:[#allocation19 + $0x3c0] sm:$0xff]
    %v3943 = vld [vmem:[#allocation19 + $0x3c8] sm:$0xff]
    %v3944 = vld [vmem:[#allocation19 + $0x3d0] sm:$0xff]
    %v3945 = vld [vmem:[#allocation19 + $0x3d8] sm:$0xff]
    %v3946 = vld [vmem:[#allocation19 + $0x3e0] sm:$0xff]
    %v3947 = vld [vmem:[#allocation19 + $0x3e8] sm:$0xff]
    %v3948 = vld [vmem:[#allocation19 + $0x3f0] sm:$0xff]
    %v3949 = vld [vmem:[#allocation19 + $0x3f8] sm:$0xff]
    %v3950 = vld [vmem:[#allocation19 + $0x400] sm:$0xff]
    %v3951 = vld [vmem:[#allocation19 + $0x408] sm:$0xff]
    %v3952 = vld [vmem:[#allocation19 + $0x410] sm:$0xff]
    %v3953 = vld [vmem:[#allocation19 + $0x418] sm:$0xff]
    %v3954 = vld [vmem:[#allocation19 + $0x420] sm:$0xff]
    %v3955 = vld [vmem:[#allocation19 + $0x428] sm:$0xff]
    %v3956 = vld [vmem:[#allocation19 + $0x430] sm:$0xff]
    %v3957 = vld [vmem:[#allocation19 + $0x438] sm:$0xff]
    %v3958 = vld [vmem:[#allocation19 + $0x440] sm:$0xff]
    %v3959 = vld [vmem:[#allocation19 + $0x448] sm:$0xff]
    %v3960 = vld [vmem:[#allocation19 + $0x450] sm:$0xff]
    %v3961 = vld [vmem:[#allocation19 + $0x458] sm:$0xff]
    %v3962 = vld [vmem:[#allocation19 + $0x460] sm:$0xff]
    %v3963 = vld [vmem:[#allocation19 + $0x468] sm:$0xff]
    %v3964 = vld [vmem:[#allocation19 + $0x470] sm:$0xff]
    %v3965 = vld [vmem:[#allocation19 + $0x478] sm:$0xff]
    %v3966 = vld [vmem:[#allocation19 + $0x480] sm:$0xff]
    %v3967 = vld [vmem:[#allocation19 + $0x488] sm:$0xff]
    %v3968 = vld [vmem:[#allocation19 + $0x490] sm:$0xff]
    %v3969 = vld [vmem:[#allocation19 + $0x498] sm:$0xff]
    %v3970 = vld [vmem:[#allocation19 + $0x4a0] sm:$0xff]
    %v3971 = vld [vmem:[#allocation19 + $0x4a8] sm:$0xff]
    %v3972 = vld [vmem:[#allocation19 + $0x4b0] sm:$0xff]
    %v3973 = vld [vmem:[#allocation19 + $0x4b8] sm:$0xff]
    %v3974 = vld [vmem:[#allocation19 + $0x4c0] sm:$0xff]
    %v3975 = vld [vmem:[#allocation19 + $0x4c8] sm:$0xff]
    %v3976 = vld [vmem:[#allocation19 + $0x4d0] sm:$0xff]
    %v3977 = vld [vmem:[#allocation19 + $0x4d8] sm:$0xff]
    %v3978 = vld [vmem:[#allocation19 + $0x4e0] sm:$0xff]
    %v3979 = vld [vmem:[#allocation19 + $0x4e8] sm:$0xff]
    %v3980 = vld [vmem:[#allocation19 + $0x4f0] sm:$0xff]
    %v3981 = vld [vmem:[#allocation19 + $0x4f8] sm:$0xff]
    %v3982 = vld [vmem:[#allocation19 + $0x500] sm:$0xff]
    %v3983 = vld [vmem:[#allocation19 + $0x508] sm:$0xff]
    %v3984 = vld [vmem:[#allocation19 + $0x510] sm:$0xff]
    %v3985 = vld [vmem:[#allocation19 + $0x518] sm:$0xff]
    %v3986 = vld [vmem:[#allocation19 + $0x520] sm:$0xff]
    %v3987 = vld [vmem:[#allocation19 + $0x528] sm:$0xff]
    %v3988 = vld [vmem:[#allocation19 + $0x530] sm:$0xff]
    %v3989 = vld [vmem:[#allocation19 + $0x538] sm:$0xff]
    %v3990 = vld [vmem:[#allocation19 + $0x540] sm:$0xff]
    %v3991 = vld [vmem:[#allocation19 + $0x548] sm:$0xff]
    %v3992 = vld [vmem:[#allocation19 + $0x550] sm:$0xff]
    %v3993 = vld [vmem:[#allocation19 + $0x558] sm:$0xff]
    %v3994 = vld [vmem:[#allocation19 + $0x560] sm:$0xff]
    %v3995 = vld [vmem:[#allocation19 + $0x568] sm:$0xff]
    %v3996 = vld [vmem:[#allocation19 + $0x570] sm:$0xff]
    %v3997 = vld [vmem:[#allocation19 + $0x578] sm:$0xff]
    %v3998 = vld [vmem:[#allocation19 + $0x580] sm:$0xff]
    %v3999 = vld [vmem:[#allocation19 + $0x588] sm:$0xff]
    %v4000 = vld [vmem:[#allocation19 + $0x590] sm:$0xff]
    %v4001 = vld [vmem:[#allocation19 + $0x598] sm:$0xff]
    %v4002 = vld [vmem:[#allocation19 + $0x5a0] sm:$0xff]
    %v4003 = vld [vmem:[#allocation19 + $0x5a8] sm:$0xff]
    %v4004 = vld [vmem:[#allocation19 + $0x5b0] sm:$0xff]
    %v4005 = vld [vmem:[#allocation19 + $0x5b8] sm:$0xff]
    %v4006 = vld [vmem:[#allocation19 + $0x5c0] sm:$0xff]
    %v4007 = vld [vmem:[#allocation19 + $0x5c8] sm:$0xff]
    %v4008 = vld [vmem:[#allocation19 + $0x5d0] sm:$0xff]
    %v4009 = vld [vmem:[#allocation19 + $0x5d8] sm:$0xff]
    %v4010 = vld [vmem:[#allocation19 + $0x5e0] sm:$0xff]
    %v4011 = vld [vmem:[#allocation19 + $0x5e8] sm:$0xff]
    %v4012 = vld [vmem:[#allocation19 + $0x5f0] sm:$0xff]
    %v4013 = vld [vmem:[#allocation19 + $0x5f8] sm:$0xff]
    %v4014 = vld [vmem:[#allocation19 + $0x600] sm:$0xff]
    %v4015 = vld [vmem:[#allocation19 + $0x608] sm:$0xff]
    %v4016 = vld [vmem:[#allocation19 + $0x610] sm:$0xff]
    %v4017 = vld [vmem:[#allocation19 + $0x618] sm:$0xff]
    %v4018 = vld [vmem:[#allocation19 + $0x620] sm:$0xff]
    %v4019 = vld [vmem:[#allocation19 + $0x628] sm:$0xff]
    %v4020 = vld [vmem:[#allocation19 + $0x630] sm:$0xff]
    %v4021 = vld [vmem:[#allocation19 + $0x638] sm:$0xff]
    %v4022 = vld [vmem:[#allocation19 + $0x640] sm:$0xff]
    %v4023 = vld [vmem:[#allocation19 + $0x648] sm:$0xff]
    %v4024 = vld [vmem:[#allocation19 + $0x650] sm:$0xff]
    %v4025 = vld [vmem:[#allocation19 + $0x658] sm:$0xff]
    %v4026 = vld [vmem:[#allocation19 + $0x660] sm:$0xff]
    %v4027 = vld [vmem:[#allocation19 + $0x668] sm:$0xff]
    %v4028 = vld [vmem:[#allocation19 + $0x670] sm:$0xff]
    %v4029 = vld [vmem:[#allocation19 + $0x678] sm:$0xff]
    %v4030 = vld [vmem:[#allocation19 + $0x680] sm:$0xff]
    %v4031 = vld [vmem:[#allocation19 + $0x688] sm:$0xff]
    %v4032 = vld [vmem:[#allocation19 + $0x690] sm:$0xff]
    %v4033 = vld [vmem:[#allocation19 + $0x698] sm:$0xff]
    %v4034 = vld [vmem:[#allocation19 + $0x6a0] sm:$0xff]
    %v4035 = vld [vmem:[#allocation19 + $0x6a8] sm:$0xff]
    %v4036 = vld [vmem:[#allocation19 + $0x6b0] sm:$0xff]
    %v4037 = vld [vmem:[#allocation19 + $0x6b8] sm:$0xff]
    %v4038 = vld [vmem:[#allocation19 + $0x6c0] sm:$0xff]
    %v4039 = vld [vmem:[#allocation19 + $0x6c8] sm:$0xff]
    %v4040 = vld [vmem:[#allocation19 + $0x6d0] sm:$0xff]
    %v4041 = vld [vmem:[#allocation19 + $0x6d8] sm:$0xff]
    %v4042 = vld [vmem:[#allocation19 + $0x6e0] sm:$0xff]
    %v4043 = vld [vmem:[#allocation19 + $0x6e8] sm:$0xff]
    %v4044 = vld [vmem:[#allocation19 + $0x6f0] sm:$0xff]
    %v4045 = vld [vmem:[#allocation19 + $0x6f8] sm:$0xff]
    %v4046 = vld [vmem:[#allocation19 + $0x700] sm:$0xff]
    %v4047 = vld [vmem:[#allocation19 + $0x708] sm:$0xff]
    %v4048 = vld [vmem:[#allocation19 + $0x710] sm:$0xff]
    %v4049 = vld [vmem:[#allocation19 + $0x718] sm:$0xff]
    %v4050 = vld [vmem:[#allocation19 + $0x720] sm:$0xff]
    %v4051 = vld [vmem:[#allocation19 + $0x728] sm:$0xff]
    %v4052 = vld [vmem:[#allocation19 + $0x730] sm:$0xff]
    %v4053 = vld [vmem:[#allocation19 + $0x738] sm:$0xff]
    %v4054 = vld [vmem:[#allocation19 + $0x740] sm:$0xff]
    %v4055 = vld [vmem:[#allocation19 + $0x748] sm:$0xff]
    %v4056 = vld [vmem:[#allocation19 + $0x750] sm:$0xff]
    %v4057 = vld [vmem:[#allocation19 + $0x758] sm:$0xff]
    %v4058 = vld [vmem:[#allocation19 + $0x760] sm:$0xff]
    %v4059 = vld [vmem:[#allocation19 + $0x768] sm:$0xff]
    %v4060 = vld [vmem:[#allocation19 + $0x770] sm:$0xff]
    %v4061 = vld [vmem:[#allocation19 + $0x778] sm:$0xff]
    %v4062 = vld [vmem:[#allocation19 + $0x780] sm:$0xff]
    %v4063 = vld [vmem:[#allocation19 + $0x788] sm:$0xff]
    %v4064 = vld [vmem:[#allocation19 + $0x790] sm:$0xff]
    %v4065 = vld [vmem:[#allocation19 + $0x798] sm:$0xff]
    %v4066 = vld [vmem:[#allocation19 + $0x7a0] sm:$0xff]
    %v4067 = vld [vmem:[#allocation19 + $0x7a8] sm:$0xff]
    %v4068 = vld [vmem:[#allocation19 + $0x7b0] sm:$0xff]
    %v4069 = vld [vmem:[#allocation19 + $0x7b8] sm:$0xff]
    %v4070 = vld [vmem:[#allocation19 + $0x7c0] sm:$0xff]
    %v4071 = vld [vmem:[#allocation19 + $0x7c8] sm:$0xff]
    %v4072 = vld [vmem:[#allocation19 + $0x7d0] sm:$0xff]
    %v4073 = vld [vmem:[#allocation19 + $0x7d8] sm:$0xff]
    %v4074 = vld [vmem:[#allocation19 + $0x7e0] sm:$0xff]
    %v4075 = vld [vmem:[#allocation19 + $0x7e8] sm:$0xff]
    %v4076 = vld [vmem:[#allocation19 + $0x7f0] sm:$0xff]
    %v4077 = vld [vmem:[#allocation19 + $0x7f8] sm:$0xff]
    %v4078 = vld [vmem:[%s13] sm:$0xff]
    %v4080 = vlaneseq
    %v4081 = vshrl.u32 %v4080, 7
    %v4082 = vsub.s32 0, %v4081
    %v4083 = vrot.slane %v4078, %v4082
    %v4084 = vlaneseq
    %v4085 = vshrl.u32 %v4084, 7
    %v4086 = vsub.s32 1, %v4085
    %v4087 = vrot.slane %v4078, %v4086
    %v4088 = vlaneseq
    %v4089 = vshrl.u32 %v4088, 7
    %v4090 = vsub.s32 2, %v4089
    %v4091 = vrot.slane %v4078, %v4090
    %v4092 = vlaneseq
    %v4093 = vshrl.u32 %v4092, 7
    %v4094 = vsub.s32 3, %v4093
    %v4095 = vrot.slane %v4078, %v4094
    %v4096 = vlaneseq
    %v4097 = vshrl.u32 %v4096, 7
    %v4098 = vsub.s32 4, %v4097
    %v4099 = vrot.slane %v4078, %v4098
    %v4100 = vlaneseq
    %v4101 = vshrl.u32 %v4100, 7
    %v4102 = vsub.s32 5, %v4101
    %v4103 = vrot.slane %v4078, %v4102
    %v4104 = vlaneseq
    %v4105 = vshrl.u32 %v4104, 7
    %v4106 = vsub.s32 6, %v4105
    %v4107 = vrot.slane %v4078, %v4106
    %v4108 = vlaneseq
    %v4109 = vshrl.u32 %v4108, 7
    %v4110 = vsub.s32 7, %v4109
    %v4111 = vrot.slane %v4078, %v4110
    %v4376 = vunpack.c.l.b16 %v3822
    %v4377 = vunpack.c.h.b16 %v3822
    %v4378 = vunpack.c.l.b16 %v3823
    %v4379 = vunpack.c.h.b16 %v3823
    %v4380 = vunpack.c.l.b16 %v3824
    %v4381 = vunpack.c.h.b16 %v3824
    %v4382 = vunpack.c.l.b16 %v3825
    %v4383 = vunpack.c.h.b16 %v3825
    %v4384 = vunpack.c.l.b16 %v3826
    %v4385 = vunpack.c.h.b16 %v3826
    %v4386 = vunpack.c.l.b16 %v3827
    %v4387 = vunpack.c.h.b16 %v3827
    %v4388 = vunpack.c.l.b16 %v3828
    %v4389 = vunpack.c.h.b16 %v3828
    %v4390 = vunpack.c.l.b16 %v3829
    %v4391 = vunpack.c.h.b16 %v3829
    %v4392 = vunpack.c.l.b16 %v3830
    %v4393 = vunpack.c.h.b16 %v3830
    %v4394 = vunpack.c.l.b16 %v3831
    %v4395 = vunpack.c.h.b16 %v3831
    %v4396 = vunpack.c.l.b16 %v3832
    %v4397 = vunpack.c.h.b16 %v3832
    %v4398 = vunpack.c.l.b16 %v3833
    %v4399 = vunpack.c.h.b16 %v3833
    %v4400 = vunpack.c.l.b16 %v3834
    %v4401 = vunpack.c.h.b16 %v3834
    %v4402 = vunpack.c.l.b16 %v3835
    %v4403 = vunpack.c.h.b16 %v3835
    %v4404 = vunpack.c.l.b16 %v3836
    %v4405 = vunpack.c.h.b16 %v3836
    %v4406 = vunpack.c.l.b16 %v3837
    %v4407 = vunpack.c.h.b16 %v3837
    %v4408 = vunpack.c.l.b16 %v3838
    %v4409 = vunpack.c.h.b16 %v3838
    %v4410 = vunpack.c.l.b16 %v3839
    %v4411 = vunpack.c.h.b16 %v3839
    %v4412 = vunpack.c.l.b16 %v3840
    %v4413 = vunpack.c.h.b16 %v3840
    %v4414 = vunpack.c.l.b16 %v3841
    %v4415 = vunpack.c.h.b16 %v3841
    %v4416 = vunpack.c.l.b16 %v3842
    %v4417 = vunpack.c.h.b16 %v3842
    %v4418 = vunpack.c.l.b16 %v3843
    %v4419 = vunpack.c.h.b16 %v3843
    %v4420 = vunpack.c.l.b16 %v3844
    %v4421 = vunpack.c.h.b16 %v3844
    %v4422 = vunpack.c.l.b16 %v3845
    %v4423 = vunpack.c.h.b16 %v3845
    %v4424 = vunpack.c.l.b16 %v3846
    %v4425 = vunpack.c.h.b16 %v3846
    %v4426 = vunpack.c.l.b16 %v3847
    %v4427 = vunpack.c.h.b16 %v3847
    %v4428 = vunpack.c.l.b16 %v3848
    %v4429 = vunpack.c.h.b16 %v3848
    %v4430 = vunpack.c.l.b16 %v3849
    %v4431 = vunpack.c.h.b16 %v3849
    %v4432 = vunpack.c.l.b16 %v3850
    %v4433 = vunpack.c.h.b16 %v3850
    %v4434 = vunpack.c.l.b16 %v3851
    %v4435 = vunpack.c.h.b16 %v3851
    %v4436 = vunpack.c.l.b16 %v3852
    %v4437 = vunpack.c.h.b16 %v3852
    %v4438 = vunpack.c.l.b16 %v3853
    %v4439 = vunpack.c.h.b16 %v3853
    %v4440 = vunpack.c.l.b16 %v3854
    %v4441 = vunpack.c.h.b16 %v3854
    %v4442 = vunpack.c.l.b16 %v3855
    %v4443 = vunpack.c.h.b16 %v3855
    %v4444 = vunpack.c.l.b16 %v3856
    %v4445 = vunpack.c.h.b16 %v3856
    %v4446 = vunpack.c.l.b16 %v3857
    %v4447 = vunpack.c.h.b16 %v3857
    %v4448 = vunpack.c.l.b16 %v3858
    %v4449 = vunpack.c.h.b16 %v3858
    %v4450 = vunpack.c.l.b16 %v3859
    %v4451 = vunpack.c.h.b16 %v3859
    %v4452 = vunpack.c.l.b16 %v3860
    %v4453 = vunpack.c.h.b16 %v3860
    %v4454 = vunpack.c.l.b16 %v3861
    %v4455 = vunpack.c.h.b16 %v3861
    %v4456 = vunpack.c.l.b16 %v3862
    %v4457 = vunpack.c.h.b16 %v3862
    %v4458 = vunpack.c.l.b16 %v3863
    %v4459 = vunpack.c.h.b16 %v3863
    %v4460 = vunpack.c.l.b16 %v3864
    %v4461 = vunpack.c.h.b16 %v3864
    %v4462 = vunpack.c.l.b16 %v3865
    %v4463 = vunpack.c.h.b16 %v3865
    %v4464 = vunpack.c.l.b16 %v3866
    %v4465 = vunpack.c.h.b16 %v3866
    %v4466 = vunpack.c.l.b16 %v3867
    %v4467 = vunpack.c.h.b16 %v3867
    %v4468 = vunpack.c.l.b16 %v3868
    %v4469 = vunpack.c.h.b16 %v3868
    %v4470 = vunpack.c.l.b16 %v3869
    %v4471 = vunpack.c.h.b16 %v3869
    %v4472 = vunpack.c.l.b16 %v3870
    %v4473 = vunpack.c.h.b16 %v3870
    %v4474 = vunpack.c.l.b16 %v3871
    %v4475 = vunpack.c.h.b16 %v3871
    %v4476 = vunpack.c.l.b16 %v3872
    %v4477 = vunpack.c.h.b16 %v3872
    %v4478 = vunpack.c.l.b16 %v3873
    %v4479 = vunpack.c.h.b16 %v3873
    %v4480 = vunpack.c.l.b16 %v3874
    %v4481 = vunpack.c.h.b16 %v3874
    %v4482 = vunpack.c.l.b16 %v3875
    %v4483 = vunpack.c.h.b16 %v3875
    %v4484 = vunpack.c.l.b16 %v3876
    %v4485 = vunpack.c.h.b16 %v3876
    %v4486 = vunpack.c.l.b16 %v3877
    %v4487 = vunpack.c.h.b16 %v3877
    %v4488 = vunpack.c.l.b16 %v3878
    %v4489 = vunpack.c.h.b16 %v3878
    %v4490 = vunpack.c.l.b16 %v3879
    %v4491 = vunpack.c.h.b16 %v3879
    %v4492 = vunpack.c.l.b16 %v3880
    %v4493 = vunpack.c.h.b16 %v3880
    %v4494 = vunpack.c.l.b16 %v3881
    %v4495 = vunpack.c.h.b16 %v3881
    %v4496 = vunpack.c.l.b16 %v3882
    %v4497 = vunpack.c.h.b16 %v3882
    %v4498 = vunpack.c.l.b16 %v3883
    %v4499 = vunpack.c.h.b16 %v3883
    %v4500 = vunpack.c.l.b16 %v3884
    %v4501 = vunpack.c.h.b16 %v3884
    %v4502 = vunpack.c.l.b16 %v3885
    %v4503 = vunpack.c.h.b16 %v3885
    %v4504 = vunpack.c.l.b16 %v3886
    %v4505 = vunpack.c.h.b16 %v3886
    %v4506 = vunpack.c.l.b16 %v3887
    %v4507 = vunpack.c.h.b16 %v3887
    %v4508 = vunpack.c.l.b16 %v3888
    %v4509 = vunpack.c.h.b16 %v3888
    %v4510 = vunpack.c.l.b16 %v3889
    %v4511 = vunpack.c.h.b16 %v3889
    %v4512 = vunpack.c.l.b16 %v3890
    %v4513 = vunpack.c.h.b16 %v3890
    %v4514 = vunpack.c.l.b16 %v3891
    %v4515 = vunpack.c.h.b16 %v3891
    %v4516 = vunpack.c.l.b16 %v3892
    %v4517 = vunpack.c.h.b16 %v3892
    %v4518 = vunpack.c.l.b16 %v3893
    %v4519 = vunpack.c.h.b16 %v3893
    %v4520 = vunpack.c.l.b16 %v3894
    %v4521 = vunpack.c.h.b16 %v3894
    %v4522 = vunpack.c.l.b16 %v3895
    %v4523 = vunpack.c.h.b16 %v3895
    %v4524 = vunpack.c.l.b16 %v3896
    %v4525 = vunpack.c.h.b16 %v3896
    %v4526 = vunpack.c.l.b16 %v3897
    %v4527 = vunpack.c.h.b16 %v3897
    %v4528 = vunpack.c.l.b16 %v3898
    %v4529 = vunpack.c.h.b16 %v3898
    %v4530 = vunpack.c.l.b16 %v3899
    %v4531 = vunpack.c.h.b16 %v3899
    %v4532 = vunpack.c.l.b16 %v3900
    %v4533 = vunpack.c.h.b16 %v3900
    %v4534 = vunpack.c.l.b16 %v3901
    %v4535 = vunpack.c.h.b16 %v3901
    %v4536 = vunpack.c.l.b16 %v3902
    %v4537 = vunpack.c.h.b16 %v3902
    %v4538 = vunpack.c.l.b16 %v3903
    %v4539 = vunpack.c.h.b16 %v3903
    %v4540 = vunpack.c.l.b16 %v3904
    %v4541 = vunpack.c.h.b16 %v3904
    %v4542 = vunpack.c.l.b16 %v3905
    %v4543 = vunpack.c.h.b16 %v3905
    %v4544 = vunpack.c.l.b16 %v3906
    %v4545 = vunpack.c.h.b16 %v3906
    %v4546 = vunpack.c.l.b16 %v3907
    %v4547 = vunpack.c.h.b16 %v3907
    %v4548 = vunpack.c.l.b16 %v3908
    %v4549 = vunpack.c.h.b16 %v3908
    %v4550 = vunpack.c.l.b16 %v3909
    %v4551 = vunpack.c.h.b16 %v3909
    %v4552 = vunpack.c.l.b16 %v3910
    %v4553 = vunpack.c.h.b16 %v3910
    %v4554 = vunpack.c.l.b16 %v3911
    %v4555 = vunpack.c.h.b16 %v3911
    %v4556 = vunpack.c.l.b16 %v3912
    %v4557 = vunpack.c.h.b16 %v3912
    %v4558 = vunpack.c.l.b16 %v3913
    %v4559 = vunpack.c.h.b16 %v3913
    %v4560 = vunpack.c.l.b16 %v3914
    %v4561 = vunpack.c.h.b16 %v3914
    %v4562 = vunpack.c.l.b16 %v3915
    %v4563 = vunpack.c.h.b16 %v3915
    %v4564 = vunpack.c.l.b16 %v3916
    %v4565 = vunpack.c.h.b16 %v3916
    %v4566 = vunpack.c.l.b16 %v3917
    %v4567 = vunpack.c.h.b16 %v3917
    %v4568 = vunpack.c.l.b16 %v3918
    %v4569 = vunpack.c.h.b16 %v3918
    %v4570 = vunpack.c.l.b16 %v3919
    %v4571 = vunpack.c.h.b16 %v3919
    %v4572 = vunpack.c.l.b16 %v3920
    %v4573 = vunpack.c.h.b16 %v3920
    %v4574 = vunpack.c.l.b16 %v3921
    %v4575 = vunpack.c.h.b16 %v3921
    %v4576 = vunpack.c.l.b16 %v3922
    %v4577 = vunpack.c.h.b16 %v3922
    %v4578 = vunpack.c.l.b16 %v3923
    %v4579 = vunpack.c.h.b16 %v3923
    %v4580 = vunpack.c.l.b16 %v3924
    %v4581 = vunpack.c.h.b16 %v3924
    %v4582 = vunpack.c.l.b16 %v3925
    %v4583 = vunpack.c.h.b16 %v3925
    %v4584 = vunpack.c.l.b16 %v3926
    %v4585 = vunpack.c.h.b16 %v3926
    %v4586 = vunpack.c.l.b16 %v3927
    %v4587 = vunpack.c.h.b16 %v3927
    %v4588 = vunpack.c.l.b16 %v3928
    %v4589 = vunpack.c.h.b16 %v3928
    %v4590 = vunpack.c.l.b16 %v3929
    %v4591 = vunpack.c.h.b16 %v3929
    %v4592 = vunpack.c.l.b16 %v3930
    %v4593 = vunpack.c.h.b16 %v3930
    %v4594 = vunpack.c.l.b16 %v3931
    %v4595 = vunpack.c.h.b16 %v3931
    %v4596 = vunpack.c.l.b16 %v3932
    %v4597 = vunpack.c.h.b16 %v3932
    %v4598 = vunpack.c.l.b16 %v3933
    %v4599 = vunpack.c.h.b16 %v3933
    %v4600 = vunpack.c.l.b16 %v3934
    %v4601 = vunpack.c.h.b16 %v3934
    %v4602 = vunpack.c.l.b16 %v3935
    %v4603 = vunpack.c.h.b16 %v3935
    %v4604 = vunpack.c.l.b16 %v3936
    %v4605 = vunpack.c.h.b16 %v3936
    %v4606 = vunpack.c.l.b16 %v3937
    %v4607 = vunpack.c.h.b16 %v3937
    %v4608 = vunpack.c.l.b16 %v3938
    %v4609 = vunpack.c.h.b16 %v3938
    %v4610 = vunpack.c.l.b16 %v3939
    %v4611 = vunpack.c.h.b16 %v3939
    %v4612 = vunpack.c.l.b16 %v3940
    %v4613 = vunpack.c.h.b16 %v3940
    %v4614 = vunpack.c.l.b16 %v3941
    %v4615 = vunpack.c.h.b16 %v3941
    %v4616 = vunpack.c.l.b16 %v3942
    %v4617 = vunpack.c.h.b16 %v3942
    %v4618 = vunpack.c.l.b16 %v3943
    %v4619 = vunpack.c.h.b16 %v3943
    %v4620 = vunpack.c.l.b16 %v3944
    %v4621 = vunpack.c.h.b16 %v3944
    %v4622 = vunpack.c.l.b16 %v3945
    %v4623 = vunpack.c.h.b16 %v3945
    %v4624 = vunpack.c.l.b16 %v3946
    %v4625 = vunpack.c.h.b16 %v3946
    %v4626 = vunpack.c.l.b16 %v3947
    %v4627 = vunpack.c.h.b16 %v3947
    %v4628 = vunpack.c.l.b16 %v3948
    %v4629 = vunpack.c.h.b16 %v3948
    %v4630 = vunpack.c.l.b16 %v3949
    %v4631 = vunpack.c.h.b16 %v3949
    %v4632 = vunpack.c.l.b16 %v3950
    %v4633 = vunpack.c.h.b16 %v3950
    %v4634 = vunpack.c.l.b16 %v3951
    %v4635 = vunpack.c.h.b16 %v3951
    %v4636 = vunpack.c.l.b16 %v3952
    %v4637 = vunpack.c.h.b16 %v3952
    %v4638 = vunpack.c.l.b16 %v3953
    %v4639 = vunpack.c.h.b16 %v3953
    %v4640 = vunpack.c.l.b16 %v3954
    %v4641 = vunpack.c.h.b16 %v3954
    %v4642 = vunpack.c.l.b16 %v3955
    %v4643 = vunpack.c.h.b16 %v3955
    %v4644 = vunpack.c.l.b16 %v3956
    %v4645 = vunpack.c.h.b16 %v3956
    %v4646 = vunpack.c.l.b16 %v3957
    %v4647 = vunpack.c.h.b16 %v3957
    %v4648 = vunpack.c.l.b16 %v3958
    %v4649 = vunpack.c.h.b16 %v3958
    %v4650 = vunpack.c.l.b16 %v3959
    %v4651 = vunpack.c.h.b16 %v3959
    %v4652 = vunpack.c.l.b16 %v3960
    %v4653 = vunpack.c.h.b16 %v3960
    %v4654 = vunpack.c.l.b16 %v3961
    %v4655 = vunpack.c.h.b16 %v3961
    %v4656 = vunpack.c.l.b16 %v3962
    %v4657 = vunpack.c.h.b16 %v3962
    %v4658 = vunpack.c.l.b16 %v3963
    %v4659 = vunpack.c.h.b16 %v3963
    %v4660 = vunpack.c.l.b16 %v3964
    %v4661 = vunpack.c.h.b16 %v3964
    %v4662 = vunpack.c.l.b16 %v3965
    %v4663 = vunpack.c.h.b16 %v3965
    %v4664 = vunpack.c.l.b16 %v3966
    %v4665 = vunpack.c.h.b16 %v3966
    %v4666 = vunpack.c.l.b16 %v3967
    %v4667 = vunpack.c.h.b16 %v3967
    %v4668 = vunpack.c.l.b16 %v3968
    %v4669 = vunpack.c.h.b16 %v3968
    %v4670 = vunpack.c.l.b16 %v3969
    %v4671 = vunpack.c.h.b16 %v3969
    %v4672 = vunpack.c.l.b16 %v3970
    %v4673 = vunpack.c.h.b16 %v3970
    %v4674 = vunpack.c.l.b16 %v3971
    %v4675 = vunpack.c.h.b16 %v3971
    %v4676 = vunpack.c.l.b16 %v3972
    %v4677 = vunpack.c.h.b16 %v3972
    %v4678 = vunpack.c.l.b16 %v3973
    %v4679 = vunpack.c.h.b16 %v3973
    %v4680 = vunpack.c.l.b16 %v3974
    %v4681 = vunpack.c.h.b16 %v3974
    %v4682 = vunpack.c.l.b16 %v3975
    %v4683 = vunpack.c.h.b16 %v3975
    %v4684 = vunpack.c.l.b16 %v3976
    %v4685 = vunpack.c.h.b16 %v3976
    %v4686 = vunpack.c.l.b16 %v3977
    %v4687 = vunpack.c.h.b16 %v3977
    %v4688 = vunpack.c.l.b16 %v3978
    %v4689 = vunpack.c.h.b16 %v3978
    %v4690 = vunpack.c.l.b16 %v3979
    %v4691 = vunpack.c.h.b16 %v3979
    %v4692 = vunpack.c.l.b16 %v3980
    %v4693 = vunpack.c.h.b16 %v3980
    %v4694 = vunpack.c.l.b16 %v3981
    %v4695 = vunpack.c.h.b16 %v3981
    %v4696 = vunpack.c.l.b16 %v3982
    %v4697 = vunpack.c.h.b16 %v3982
    %v4698 = vunpack.c.l.b16 %v3983
    %v4699 = vunpack.c.h.b16 %v3983
    %v4700 = vunpack.c.l.b16 %v3984
    %v4701 = vunpack.c.h.b16 %v3984
    %v4702 = vunpack.c.l.b16 %v3985
    %v4703 = vunpack.c.h.b16 %v3985
    %v4704 = vunpack.c.l.b16 %v3986
    %v4705 = vunpack.c.h.b16 %v3986
    %v4706 = vunpack.c.l.b16 %v3987
    %v4707 = vunpack.c.h.b16 %v3987
    %v4708 = vunpack.c.l.b16 %v3988
    %v4709 = vunpack.c.h.b16 %v3988
    %v4710 = vunpack.c.l.b16 %v3989
    %v4711 = vunpack.c.h.b16 %v3989
    %v4712 = vunpack.c.l.b16 %v3990
    %v4713 = vunpack.c.h.b16 %v3990
    %v4714 = vunpack.c.l.b16 %v3991
    %v4715 = vunpack.c.h.b16 %v3991
    %v4716 = vunpack.c.l.b16 %v3992
    %v4717 = vunpack.c.h.b16 %v3992
    %v4718 = vunpack.c.l.b16 %v3993
    %v4719 = vunpack.c.h.b16 %v3993
    %v4720 = vunpack.c.l.b16 %v3994
    %v4721 = vunpack.c.h.b16 %v3994
    %v4722 = vunpack.c.l.b16 %v3995
    %v4723 = vunpack.c.h.b16 %v3995
    %v4724 = vunpack.c.l.b16 %v3996
    %v4725 = vunpack.c.h.b16 %v3996
    %v4726 = vunpack.c.l.b16 %v3997
    %v4727 = vunpack.c.h.b16 %v3997
    %v4728 = vunpack.c.l.b16 %v3998
    %v4729 = vunpack.c.h.b16 %v3998
    %v4730 = vunpack.c.l.b16 %v3999
    %v4731 = vunpack.c.h.b16 %v3999
    %v4732 = vunpack.c.l.b16 %v4000
    %v4733 = vunpack.c.h.b16 %v4000
    %v4734 = vunpack.c.l.b16 %v4001
    %v4735 = vunpack.c.h.b16 %v4001
    %v4736 = vunpack.c.l.b16 %v4002
    %v4737 = vunpack.c.h.b16 %v4002
    %v4738 = vunpack.c.l.b16 %v4003
    %v4739 = vunpack.c.h.b16 %v4003
    %v4740 = vunpack.c.l.b16 %v4004
    %v4741 = vunpack.c.h.b16 %v4004
    %v4742 = vunpack.c.l.b16 %v4005
    %v4743 = vunpack.c.h.b16 %v4005
    %v4744 = vunpack.c.l.b16 %v4006
    %v4745 = vunpack.c.h.b16 %v4006
    %v4746 = vunpack.c.l.b16 %v4007
    %v4747 = vunpack.c.h.b16 %v4007
    %v4748 = vunpack.c.l.b16 %v4008
    %v4749 = vunpack.c.h.b16 %v4008
    %v4750 = vunpack.c.l.b16 %v4009
    %v4751 = vunpack.c.h.b16 %v4009
    %v4752 = vunpack.c.l.b16 %v4010
    %v4753 = vunpack.c.h.b16 %v4010
    %v4754 = vunpack.c.l.b16 %v4011
    %v4755 = vunpack.c.h.b16 %v4011
    %v4756 = vunpack.c.l.b16 %v4012
    %v4757 = vunpack.c.h.b16 %v4012
    %v4758 = vunpack.c.l.b16 %v4013
    %v4759 = vunpack.c.h.b16 %v4013
    %v4760 = vunpack.c.l.b16 %v4014
    %v4761 = vunpack.c.h.b16 %v4014
    %v4762 = vunpack.c.l.b16 %v4015
    %v4763 = vunpack.c.h.b16 %v4015
    %v4764 = vunpack.c.l.b16 %v4016
    %v4765 = vunpack.c.h.b16 %v4016
    %v4766 = vunpack.c.l.b16 %v4017
    %v4767 = vunpack.c.h.b16 %v4017
    %v4768 = vunpack.c.l.b16 %v4018
    %v4769 = vunpack.c.h.b16 %v4018
    %v4770 = vunpack.c.l.b16 %v4019
    %v4771 = vunpack.c.h.b16 %v4019
    %v4772 = vunpack.c.l.b16 %v4020
    %v4773 = vunpack.c.h.b16 %v4020
    %v4774 = vunpack.c.l.b16 %v4021
    %v4775 = vunpack.c.h.b16 %v4021
    %v4776 = vunpack.c.l.b16 %v4022
    %v4777 = vunpack.c.h.b16 %v4022
    %v4778 = vunpack.c.l.b16 %v4023
    %v4779 = vunpack.c.h.b16 %v4023
    %v4780 = vunpack.c.l.b16 %v4024
    %v4781 = vunpack.c.h.b16 %v4024
    %v4782 = vunpack.c.l.b16 %v4025
    %v4783 = vunpack.c.h.b16 %v4025
    %v4784 = vunpack.c.l.b16 %v4026
    %v4785 = vunpack.c.h.b16 %v4026
    %v4786 = vunpack.c.l.b16 %v4027
    %v4787 = vunpack.c.h.b16 %v4027
    %v4788 = vunpack.c.l.b16 %v4028
    %v4789 = vunpack.c.h.b16 %v4028
    %v4790 = vunpack.c.l.b16 %v4029
    %v4791 = vunpack.c.h.b16 %v4029
    %v4792 = vunpack.c.l.b16 %v4030
    %v4793 = vunpack.c.h.b16 %v4030
    %v4794 = vunpack.c.l.b16 %v4031
    %v4795 = vunpack.c.h.b16 %v4031
    %v4796 = vunpack.c.l.b16 %v4032
    %v4797 = vunpack.c.h.b16 %v4032
    %v4798 = vunpack.c.l.b16 %v4033
    %v4799 = vunpack.c.h.b16 %v4033
    %v4800 = vunpack.c.l.b16 %v4034
    %v4801 = vunpack.c.h.b16 %v4034
    %v4802 = vunpack.c.l.b16 %v4035
    %v4803 = vunpack.c.h.b16 %v4035
    %v4804 = vunpack.c.l.b16 %v4036
    %v4805 = vunpack.c.h.b16 %v4036
    %v4806 = vunpack.c.l.b16 %v4037
    %v4807 = vunpack.c.h.b16 %v4037
    %v4808 = vunpack.c.l.b16 %v4038
    %v4809 = vunpack.c.h.b16 %v4038
    %v4810 = vunpack.c.l.b16 %v4039
    %v4811 = vunpack.c.h.b16 %v4039
    %v4812 = vunpack.c.l.b16 %v4040
    %v4813 = vunpack.c.h.b16 %v4040
    %v4814 = vunpack.c.l.b16 %v4041
    %v4815 = vunpack.c.h.b16 %v4041
    %v4816 = vunpack.c.l.b16 %v4042
    %v4817 = vunpack.c.h.b16 %v4042
    %v4818 = vunpack.c.l.b16 %v4043
    %v4819 = vunpack.c.h.b16 %v4043
    %v4820 = vunpack.c.l.b16 %v4044
    %v4821 = vunpack.c.h.b16 %v4044
    %v4822 = vunpack.c.l.b16 %v4045
    %v4823 = vunpack.c.h.b16 %v4045
    %v4824 = vunpack.c.l.b16 %v4046
    %v4825 = vunpack.c.h.b16 %v4046
    %v4826 = vunpack.c.l.b16 %v4047
    %v4827 = vunpack.c.h.b16 %v4047
    %v4828 = vunpack.c.l.b16 %v4048
    %v4829 = vunpack.c.h.b16 %v4048
    %v4830 = vunpack.c.l.b16 %v4049
    %v4831 = vunpack.c.h.b16 %v4049
    %v4832 = vunpack.c.l.b16 %v4050
    %v4833 = vunpack.c.h.b16 %v4050
    %v4834 = vunpack.c.l.b16 %v4051
    %v4835 = vunpack.c.h.b16 %v4051
    %v4836 = vunpack.c.l.b16 %v4052
    %v4837 = vunpack.c.h.b16 %v4052
    %v4838 = vunpack.c.l.b16 %v4053
    %v4839 = vunpack.c.h.b16 %v4053
    %v4840 = vunpack.c.l.b16 %v4054
    %v4841 = vunpack.c.h.b16 %v4054
    %v4842 = vunpack.c.l.b16 %v4055
    %v4843 = vunpack.c.h.b16 %v4055
    %v4844 = vunpack.c.l.b16 %v4056
    %v4845 = vunpack.c.h.b16 %v4056
    %v4846 = vunpack.c.l.b16 %v4057
    %v4847 = vunpack.c.h.b16 %v4057
    %v4848 = vunpack.c.l.b16 %v4058
    %v4849 = vunpack.c.h.b16 %v4058
    %v4850 = vunpack.c.l.b16 %v4059
    %v4851 = vunpack.c.h.b16 %v4059
    %v4852 = vunpack.c.l.b16 %v4060
    %v4853 = vunpack.c.h.b16 %v4060
    %v4854 = vunpack.c.l.b16 %v4061
    %v4855 = vunpack.c.h.b16 %v4061
    %v4856 = vunpack.c.l.b16 %v4062
    %v4857 = vunpack.c.h.b16 %v4062
    %v4858 = vunpack.c.l.b16 %v4063
    %v4859 = vunpack.c.h.b16 %v4063
    %v4860 = vunpack.c.l.b16 %v4064
    %v4861 = vunpack.c.h.b16 %v4064
    %v4862 = vunpack.c.l.b16 %v4065
    %v4863 = vunpack.c.h.b16 %v4065
    %v4864 = vunpack.c.l.b16 %v4066
    %v4865 = vunpack.c.h.b16 %v4066
    %v4866 = vunpack.c.l.b16 %v4067
    %v4867 = vunpack.c.h.b16 %v4067
    %v4868 = vunpack.c.l.b16 %v4068
    %v4869 = vunpack.c.h.b16 %v4068
    %v4870 = vunpack.c.l.b16 %v4069
    %v4871 = vunpack.c.h.b16 %v4069
    %v4872 = vunpack.c.l.b16 %v4070
    %v4873 = vunpack.c.h.b16 %v4070
    %v4874 = vunpack.c.l.b16 %v4071
    %v4875 = vunpack.c.h.b16 %v4071
    %v4876 = vunpack.c.l.b16 %v4072
    %v4877 = vunpack.c.h.b16 %v4072
    %v4878 = vunpack.c.l.b16 %v4073
    %v4879 = vunpack.c.h.b16 %v4073
    %v4880 = vunpack.c.l.b16 %v4074
    %v4881 = vunpack.c.h.b16 %v4074
    %v4882 = vunpack.c.l.b16 %v4075
    %v4883 = vunpack.c.h.b16 %v4075
    %v4884 = vunpack.c.l.b16 %v4076
    %v4885 = vunpack.c.h.b16 %v4076
    %v4886 = vunpack.c.l.b16 %v4077
    %v4887 = vunpack.c.h.b16 %v4077
    %v4888 = vpack.c.b16 %v4384, %v4376
    %v4889 = vpack.c.b16 %v4385, %v4377
    %v4890 = vpack.c.b16 %v4386, %v4378
    %v4891 = vpack.c.b16 %v4387, %v4379
    %v4892 = vpack.c.b16 %v4388, %v4380
    %v4893 = vpack.c.b16 %v4389, %v4381
    %v4894 = vpack.c.b16 %v4390, %v4382
    %v4895 = vpack.c.b16 %v4391, %v4383
    %v4896 = vpack.c.b16 %v4400, %v4392
    %v4897 = vpack.c.b16 %v4401, %v4393
    %v4898 = vpack.c.b16 %v4402, %v4394
    %v4899 = vpack.c.b16 %v4403, %v4395
    %v4900 = vpack.c.b16 %v4404, %v4396
    %v4901 = vpack.c.b16 %v4405, %v4397
    %v4902 = vpack.c.b16 %v4406, %v4398
    %v4903 = vpack.c.b16 %v4407, %v4399
    %v4904 = vpack.c.b16 %v4416, %v4408
    %v4905 = vpack.c.b16 %v4417, %v4409
    %v4906 = vpack.c.b16 %v4418, %v4410
    %v4907 = vpack.c.b16 %v4419, %v4411
    %v4908 = vpack.c.b16 %v4420, %v4412
    %v4909 = vpack.c.b16 %v4421, %v4413
    %v4910 = vpack.c.b16 %v4422, %v4414
    %v4911 = vpack.c.b16 %v4423, %v4415
    %v4912 = vpack.c.b16 %v4432, %v4424
    %v4913 = vpack.c.b16 %v4433, %v4425
    %v4914 = vpack.c.b16 %v4434, %v4426
    %v4915 = vpack.c.b16 %v4435, %v4427
    %v4916 = vpack.c.b16 %v4436, %v4428
    %v4917 = vpack.c.b16 %v4437, %v4429
    %v4918 = vpack.c.b16 %v4438, %v4430
    %v4919 = vpack.c.b16 %v4439, %v4431
    %v4920 = vpack.c.b16 %v4448, %v4440
    %v4921 = vpack.c.b16 %v4449, %v4441
    %v4922 = vpack.c.b16 %v4450, %v4442
    %v4923 = vpack.c.b16 %v4451, %v4443
    %v4924 = vpack.c.b16 %v4452, %v4444
    %v4925 = vpack.c.b16 %v4453, %v4445
    %v4926 = vpack.c.b16 %v4454, %v4446
    %v4927 = vpack.c.b16 %v4455, %v4447
    %v4928 = vpack.c.b16 %v4464, %v4456
    %v4929 = vpack.c.b16 %v4465, %v4457
    %v4930 = vpack.c.b16 %v4466, %v4458
    %v4931 = vpack.c.b16 %v4467, %v4459
    %v4932 = vpack.c.b16 %v4468, %v4460
    %v4933 = vpack.c.b16 %v4469, %v4461
    %v4934 = vpack.c.b16 %v4470, %v4462
    %v4935 = vpack.c.b16 %v4471, %v4463
    %v4936 = vpack.c.b16 %v4480, %v4472
    %v4937 = vpack.c.b16 %v4481, %v4473
    %v4938 = vpack.c.b16 %v4482, %v4474
    %v4939 = vpack.c.b16 %v4483, %v4475
    %v4940 = vpack.c.b16 %v4484, %v4476
    %v4941 = vpack.c.b16 %v4485, %v4477
    %v4942 = vpack.c.b16 %v4486, %v4478
    %v4943 = vpack.c.b16 %v4487, %v4479
    %v4944 = vpack.c.b16 %v4496, %v4488
    %v4945 = vpack.c.b16 %v4497, %v4489
    %v4946 = vpack.c.b16 %v4498, %v4490
    %v4947 = vpack.c.b16 %v4499, %v4491
    %v4948 = vpack.c.b16 %v4500, %v4492
    %v4949 = vpack.c.b16 %v4501, %v4493
    %v4950 = vpack.c.b16 %v4502, %v4494
    %v4951 = vpack.c.b16 %v4503, %v4495
    %v4952 = vpack.c.b16 %v4512, %v4504
    %v4953 = vpack.c.b16 %v4513, %v4505
    %v4954 = vpack.c.b16 %v4514, %v4506
    %v4955 = vpack.c.b16 %v4515, %v4507
    %v4956 = vpack.c.b16 %v4516, %v4508
    %v4957 = vpack.c.b16 %v4517, %v4509
    %v4958 = vpack.c.b16 %v4518, %v4510
    %v4959 = vpack.c.b16 %v4519, %v4511
    %v4960 = vpack.c.b16 %v4528, %v4520
    %v4961 = vpack.c.b16 %v4529, %v4521
    %v4962 = vpack.c.b16 %v4530, %v4522
    %v4963 = vpack.c.b16 %v4531, %v4523
    %v4964 = vpack.c.b16 %v4532, %v4524
    %v4965 = vpack.c.b16 %v4533, %v4525
    %v4966 = vpack.c.b16 %v4534, %v4526
    %v4967 = vpack.c.b16 %v4535, %v4527
    %v4968 = vpack.c.b16 %v4544, %v4536
    %v4969 = vpack.c.b16 %v4545, %v4537
    %v4970 = vpack.c.b16 %v4546, %v4538
    %v4971 = vpack.c.b16 %v4547, %v4539
    %v4972 = vpack.c.b16 %v4548, %v4540
    %v4973 = vpack.c.b16 %v4549, %v4541
    %v4974 = vpack.c.b16 %v4550, %v4542
    %v4975 = vpack.c.b16 %v4551, %v4543
    %v4976 = vpack.c.b16 %v4560, %v4552
    %v4977 = vpack.c.b16 %v4561, %v4553
    %v4978 = vpack.c.b16 %v4562, %v4554
    %v4979 = vpack.c.b16 %v4563, %v4555
    %v4980 = vpack.c.b16 %v4564, %v4556
    %v4981 = vpack.c.b16 %v4565, %v4557
    %v4982 = vpack.c.b16 %v4566, %v4558
    %v4983 = vpack.c.b16 %v4567, %v4559
    %v4984 = vpack.c.b16 %v4576, %v4568
    %v4985 = vpack.c.b16 %v4577, %v4569
    %v4986 = vpack.c.b16 %v4578, %v4570
    %v4987 = vpack.c.b16 %v4579, %v4571
    %v4988 = vpack.c.b16 %v4580, %v4572
    %v4989 = vpack.c.b16 %v4581, %v4573
    %v4990 = vpack.c.b16 %v4582, %v4574
    %v4991 = vpack.c.b16 %v4583, %v4575
    %v4992 = vpack.c.b16 %v4592, %v4584
    %v4993 = vpack.c.b16 %v4593, %v4585
    %v4994 = vpack.c.b16 %v4594, %v4586
    %v4995 = vpack.c.b16 %v4595, %v4587
    %v4996 = vpack.c.b16 %v4596, %v4588
    %v4997 = vpack.c.b16 %v4597, %v4589
    %v4998 = vpack.c.b16 %v4598, %v4590
    %v4999 = vpack.c.b16 %v4599, %v4591
    %v5000 = vpack.c.b16 %v4608, %v4600
    %v5001 = vpack.c.b16 %v4609, %v4601
    %v5002 = vpack.c.b16 %v4610, %v4602
    %v5003 = vpack.c.b16 %v4611, %v4603
    %v5004 = vpack.c.b16 %v4612, %v4604
    %v5005 = vpack.c.b16 %v4613, %v4605
    %v5006 = vpack.c.b16 %v4614, %v4606
    %v5007 = vpack.c.b16 %v4615, %v4607
    %v5008 = vpack.c.b16 %v4624, %v4616
    %v5009 = vpack.c.b16 %v4625, %v4617
    %v5010 = vpack.c.b16 %v4626, %v4618
    %v5011 = vpack.c.b16 %v4627, %v4619
    %v5012 = vpack.c.b16 %v4628, %v4620
    %v5013 = vpack.c.b16 %v4629, %v4621
    %v5014 = vpack.c.b16 %v4630, %v4622
    %v5015 = vpack.c.b16 %v4631, %v4623
    %v5016 = vpack.c.b16 %v4640, %v4632
    %v5017 = vpack.c.b16 %v4641, %v4633
    %v5018 = vpack.c.b16 %v4642, %v4634
    %v5019 = vpack.c.b16 %v4643, %v4635
    %v5020 = vpack.c.b16 %v4644, %v4636
    %v5021 = vpack.c.b16 %v4645, %v4637
    %v5022 = vpack.c.b16 %v4646, %v4638
    %v5023 = vpack.c.b16 %v4647, %v4639
    %v5024 = vpack.c.b16 %v4656, %v4648
    %v5025 = vpack.c.b16 %v4657, %v4649
    %v5026 = vpack.c.b16 %v4658, %v4650
    %v5027 = vpack.c.b16 %v4659, %v4651
    %v5028 = vpack.c.b16 %v4660, %v4652
    %v5029 = vpack.c.b16 %v4661, %v4653
    %v5030 = vpack.c.b16 %v4662, %v4654
    %v5031 = vpack.c.b16 %v4663, %v4655
    %v5032 = vpack.c.b16 %v4672, %v4664
    %v5033 = vpack.c.b16 %v4673, %v4665
    %v5034 = vpack.c.b16 %v4674, %v4666
    %v5035 = vpack.c.b16 %v4675, %v4667
    %v5036 = vpack.c.b16 %v4676, %v4668
    %v5037 = vpack.c.b16 %v4677, %v4669
    %v5038 = vpack.c.b16 %v4678, %v4670
    %v5039 = vpack.c.b16 %v4679, %v4671
    %v5040 = vpack.c.b16 %v4688, %v4680
    %v5041 = vpack.c.b16 %v4689, %v4681
    %v5042 = vpack.c.b16 %v4690, %v4682
    %v5043 = vpack.c.b16 %v4691, %v4683
    %v5044 = vpack.c.b16 %v4692, %v4684
    %v5045 = vpack.c.b16 %v4693, %v4685
    %v5046 = vpack.c.b16 %v4694, %v4686
    %v5047 = vpack.c.b16 %v4695, %v4687
    %v5048 = vpack.c.b16 %v4704, %v4696
    %v5049 = vpack.c.b16 %v4705, %v4697
    %v5050 = vpack.c.b16 %v4706, %v4698
    %v5051 = vpack.c.b16 %v4707, %v4699
    %v5052 = vpack.c.b16 %v4708, %v4700
    %v5053 = vpack.c.b16 %v4709, %v4701
    %v5054 = vpack.c.b16 %v4710, %v4702
    %v5055 = vpack.c.b16 %v4711, %v4703
    %v5056 = vpack.c.b16 %v4720, %v4712
    %v5057 = vpack.c.b16 %v4721, %v4713
    %v5058 = vpack.c.b16 %v4722, %v4714
    %v5059 = vpack.c.b16 %v4723, %v4715
    %v5060 = vpack.c.b16 %v4724, %v4716
    %v5061 = vpack.c.b16 %v4725, %v4717
    %v5062 = vpack.c.b16 %v4726, %v4718
    %v5063 = vpack.c.b16 %v4727, %v4719
    %v5064 = vpack.c.b16 %v4736, %v4728
    %v5065 = vpack.c.b16 %v4737, %v4729
    %v5066 = vpack.c.b16 %v4738, %v4730
    %v5067 = vpack.c.b16 %v4739, %v4731
    %v5068 = vpack.c.b16 %v4740, %v4732
    %v5069 = vpack.c.b16 %v4741, %v4733
    %v5070 = vpack.c.b16 %v4742, %v4734
    %v5071 = vpack.c.b16 %v4743, %v4735
    %v5072 = vpack.c.b16 %v4752, %v4744
    %v5073 = vpack.c.b16 %v4753, %v4745
    %v5074 = vpack.c.b16 %v4754, %v4746
    %v5075 = vpack.c.b16 %v4755, %v4747
    %v5076 = vpack.c.b16 %v4756, %v4748
    %v5077 = vpack.c.b16 %v4757, %v4749
    %v5078 = vpack.c.b16 %v4758, %v4750
    %v5079 = vpack.c.b16 %v4759, %v4751
    %v5080 = vpack.c.b16 %v4768, %v4760
    %v5081 = vpack.c.b16 %v4769, %v4761
    %v5082 = vpack.c.b16 %v4770, %v4762
    %v5083 = vpack.c.b16 %v4771, %v4763
    %v5084 = vpack.c.b16 %v4772, %v4764
    %v5085 = vpack.c.b16 %v4773, %v4765
    %v5086 = vpack.c.b16 %v4774, %v4766
    %v5087 = vpack.c.b16 %v4775, %v4767
    %v5088 = vpack.c.b16 %v4784, %v4776
    %v5089 = vpack.c.b16 %v4785, %v4777
    %v5090 = vpack.c.b16 %v4786, %v4778
    %v5091 = vpack.c.b16 %v4787, %v4779
    %v5092 = vpack.c.b16 %v4788, %v4780
    %v5093 = vpack.c.b16 %v4789, %v4781
    %v5094 = vpack.c.b16 %v4790, %v4782
    %v5095 = vpack.c.b16 %v4791, %v4783
    %v5096 = vpack.c.b16 %v4800, %v4792
    %v5097 = vpack.c.b16 %v4801, %v4793
    %v5098 = vpack.c.b16 %v4802, %v4794
    %v5099 = vpack.c.b16 %v4803, %v4795
    %v5100 = vpack.c.b16 %v4804, %v4796
    %v5101 = vpack.c.b16 %v4805, %v4797
    %v5102 = vpack.c.b16 %v4806, %v4798
    %v5103 = vpack.c.b16 %v4807, %v4799
    %v5104 = vpack.c.b16 %v4816, %v4808
    %v5105 = vpack.c.b16 %v4817, %v4809
    %v5106 = vpack.c.b16 %v4818, %v4810
    %v5107 = vpack.c.b16 %v4819, %v4811
    %v5108 = vpack.c.b16 %v4820, %v4812
    %v5109 = vpack.c.b16 %v4821, %v4813
    %v5110 = vpack.c.b16 %v4822, %v4814
    %v5111 = vpack.c.b16 %v4823, %v4815
    %v5112 = vpack.c.b16 %v4832, %v4824
    %v5113 = vpack.c.b16 %v4833, %v4825
    %v5114 = vpack.c.b16 %v4834, %v4826
    %v5115 = vpack.c.b16 %v4835, %v4827
    %v5116 = vpack.c.b16 %v4836, %v4828
    %v5117 = vpack.c.b16 %v4837, %v4829
    %v5118 = vpack.c.b16 %v4838, %v4830
    %v5119 = vpack.c.b16 %v4839, %v4831
    %v5120 = vpack.c.b16 %v4848, %v4840
    %v5121 = vpack.c.b16 %v4849, %v4841
    %v5122 = vpack.c.b16 %v4850, %v4842
    %v5123 = vpack.c.b16 %v4851, %v4843
    %v5124 = vpack.c.b16 %v4852, %v4844
    %v5125 = vpack.c.b16 %v4853, %v4845
    %v5126 = vpack.c.b16 %v4854, %v4846
    %v5127 = vpack.c.b16 %v4855, %v4847
    %v5128 = vpack.c.b16 %v4864, %v4856
    %v5129 = vpack.c.b16 %v4865, %v4857
    %v5130 = vpack.c.b16 %v4866, %v4858
    %v5131 = vpack.c.b16 %v4867, %v4859
    %v5132 = vpack.c.b16 %v4868, %v4860
    %v5133 = vpack.c.b16 %v4869, %v4861
    %v5134 = vpack.c.b16 %v4870, %v4862
    %v5135 = vpack.c.b16 %v4871, %v4863
    %v5136 = vpack.c.b16 %v4880, %v4872
    %v5137 = vpack.c.b16 %v4881, %v4873
    %v5138 = vpack.c.b16 %v4882, %v4874
    %v5139 = vpack.c.b16 %v4883, %v4875
    %v5140 = vpack.c.b16 %v4884, %v4876
    %v5141 = vpack.c.b16 %v4885, %v4877
    %v5142 = vpack.c.b16 %v4886, %v4878
    %v5143 = vpack.c.b16 %v4887, %v4879
    %5400 = vmatprep.subr.bf16.mxu0 %v4945
    %5401 = vmatpush1.bf16.msra.mxu0 %v4944
    %5402 = vmatprep.subr.bf16.mxu0 %v4937
    %5403 = vmatpush1.bf16.msra.mxu0 %v4936
    %5404 = vmatprep.subr.bf16.mxu0 %v4929
    %5405 = vmatpush1.bf16.msra.mxu0 %v4928
    %5406 = vmatprep.subr.bf16.mxu0 %v4921
    %5407 = vmatpush1.bf16.msra.mxu0 %v4920
    %5408 = vmatprep.subr.bf16.mxu0 %v4913
    %5409 = vmatpush1.bf16.msra.mxu0 %v4912
    %5410 = vmatprep.subr.bf16.mxu0 %v4905
    %5411 = vmatpush1.bf16.msra.mxu0 %v4904
    %5412 = vmatprep.subr.bf16.mxu0 %v4897
    %5413 = vmatpush1.bf16.msra.mxu0 %v4896
    %5414 = vmatprep.subr.bf16.mxu0 %v4889
    %5415 = vmatpush1.bf16.msra.mxu0 %v4888
    %5416 = vmatprep.subr.bf16.mxu0 %v5009
    %5417 = vmatpush2.bf16.msra.mxu0 %v5008
    %5418 = vmatprep.subr.bf16.mxu0 %v5001
    %5419 = vmatpush2.bf16.msra.mxu0 %v5000
    %5420 = vmatprep.subr.bf16.mxu0 %v4993
    %5421 = vmatpush2.bf16.msra.mxu0 %v4992
    %5422 = vmatprep.subr.bf16.mxu0 %v4985
    %5423 = vmatpush2.bf16.msra.mxu0 %v4984
    %5424 = vmatprep.subr.bf16.mxu0 %v4977
    %5425 = vmatpush2.bf16.msra.mxu0 %v4976
    %5426 = vmatprep.subr.bf16.mxu0 %v4969
    %5427 = vmatpush2.bf16.msra.mxu0 %v4968
    %5428 = vmatprep.subr.bf16.mxu0 %v4961
    %5429 = vmatpush2.bf16.msra.mxu0 %v4960
    %5430 = vmatprep.subr.bf16.mxu0 %v4953
    %5431 = vmatpush2.bf16.msra.mxu0 %v4952
    %5432 = vmatprep.mubr.bf16.mxu0 %v3819
    %5433 = vmatmul.mubr.bf16.gmra.mxu0 %v3818
    %v5434 = vpop.f32.mrf.mxu0
    %v5435 = vadd.f32 %v4083, %v5434
    %v5436 = vpop.f32.mrf.mxu0
    %v5437 = vadd.f32 %v4087, %v5436
    %v5438 = vpop.f32.mrf.mxu0
    %v5439 = vadd.f32 %v4083, %v5438
    %v5440 = vpop.f32.mrf.mxu0
    %v5441 = vadd.f32 %v4087, %v5440
    %5442 = vdwg.mxu0
    %5443 = vmatprep.subr.bf16.mxu0 %v5073
    %5444 = vmatpush1.bf16.msra.mxu0 %v5072
    %5445 = vmatprep.subr.bf16.mxu0 %v5065
    %5446 = vmatpush1.bf16.msra.mxu0 %v5064
    %5447 = vmatprep.subr.bf16.mxu0 %v5057
    %5448 = vmatpush1.bf16.msra.mxu0 %v5056
    %5449 = vmatprep.subr.bf16.mxu0 %v5049
    %5450 = vmatpush1.bf16.msra.mxu0 %v5048
    %5451 = vmatprep.subr.bf16.mxu0 %v5041
    %5452 = vmatpush1.bf16.msra.mxu0 %v5040
    %5453 = vmatprep.subr.bf16.mxu0 %v5033
    %5454 = vmatpush1.bf16.msra.mxu0 %v5032
    %5455 = vmatprep.subr.bf16.mxu0 %v5025
    %5456 = vmatpush1.bf16.msra.mxu0 %v5024
    %5457 = vmatprep.subr.bf16.mxu0 %v5017
    %5458 = vmatpush1.bf16.msra.mxu0 %v5016
    %5459 = vmatprep.subr.bf16.mxu0 %v5137
    %5460 = vmatpush2.bf16.msra.mxu0 %v5136
    %5461 = vmatprep.subr.bf16.mxu0 %v5129
    %5462 = vmatpush2.bf16.msra.mxu0 %v5128
    %5463 = vmatprep.subr.bf16.mxu0 %v5121
    %5464 = vmatpush2.bf16.msra.mxu0 %v5120
    %5465 = vmatprep.subr.bf16.mxu0 %v5113
    %5466 = vmatpush2.bf16.msra.mxu0 %v5112
    %5467 = vmatprep.subr.bf16.mxu0 %v5105
    %5468 = vmatpush2.bf16.msra.mxu0 %v5104
    %5469 = vmatprep.subr.bf16.mxu0 %v5097
    %5470 = vmatpush2.bf16.msra.mxu0 %v5096
    %5471 = vmatprep.subr.bf16.mxu0 %v5089
    %5472 = vmatpush2.bf16.msra.mxu0 %v5088
    %5473 = vmatprep.subr.bf16.mxu0 %v5081
    %5474 = vmatpush2.bf16.msra.mxu0 %v5080
    %5475 = vmatprep.mubr.bf16.mxu0 %v3821
    %5476 = vmatmul.mubr.bf16.gmra.mxu0 %v3820
    %v5477 = vpop.f32.mrf.mxu0
    %v5478 = vadd.f32 %v5435, %v5477
    %v5479 = vpop.f32.mrf.mxu0
    %v5480 = vadd.f32 %v5437, %v5479
    %v5481 = vpop.f32.mrf.mxu0
    %v5482 = vadd.f32 %v5439, %v5481
    %v5483 = vpop.f32.mrf.mxu0
    %v5484 = vadd.f32 %v5441, %v5483
    %5485 = vdwg.mxu0
    %5486 = vmatprep.subr.bf16.mxu0 %v4947
    %5487 = vmatpush1.bf16.msra.mxu0 %v4946
    %5488 = vmatprep.subr.bf16.mxu0 %v4939
    %5489 = vmatpush1.bf16.msra.mxu0 %v4938
    %5490 = vmatprep.subr.bf16.mxu0 %v4931
    %5491 = vmatpush1.bf16.msra.mxu0 %v4930
    %5492 = vmatprep.subr.bf16.mxu0 %v4923
    %5493 = vmatpush1.bf16.msra.mxu0 %v4922
    %5494 = vmatprep.subr.bf16.mxu0 %v4915
    %5495 = vmatpush1.bf16.msra.mxu0 %v4914
    %5496 = vmatprep.subr.bf16.mxu0 %v4907
    %5497 = vmatpush1.bf16.msra.mxu0 %v4906
    %5498 = vmatprep.subr.bf16.mxu0 %v4899
    %5499 = vmatpush1.bf16.msra.mxu0 %v4898
    %5500 = vmatprep.subr.bf16.mxu0 %v4891
    %5501 = vmatpush1.bf16.msra.mxu0 %v4890
    %5502 = vmatprep.subr.bf16.mxu0 %v5011
    %5503 = vmatpush2.bf16.msra.mxu0 %v5010
    %5504 = vmatprep.subr.bf16.mxu0 %v5003
    %5505 = vmatpush2.bf16.msra.mxu0 %v5002
    %5506 = vmatprep.subr.bf16.mxu0 %v4995
    %5507 = vmatpush2.bf16.msra.mxu0 %v4994
    %5508 = vmatprep.subr.bf16.mxu0 %v4987
    %5509 = vmatpush2.bf16.msra.mxu0 %v4986
    %5510 = vmatprep.subr.bf16.mxu0 %v4979
    %5511 = vmatpush2.bf16.msra.mxu0 %v4978
    %5512 = vmatprep.subr.bf16.mxu0 %v4971
    %5513 = vmatpush2.bf16.msra.mxu0 %v4970
    %5514 = vmatprep.subr.bf16.mxu0 %v4963
    %5515 = vmatpush2.bf16.msra.mxu0 %v4962
    %5516 = vmatprep.subr.bf16.mxu0 %v4955
    %5517 = vmatpush2.bf16.msra.mxu0 %v4954
    %5518 = vmatprep.mubr.bf16.mxu0 %v3819
    %5519 = vmatmul.mubr.bf16.gmra.mxu0 %v3818
    %v5520 = vpop.f32.mrf.mxu0
    %v5521 = vadd.f32 %v4091, %v5520
    %v5522 = vpop.f32.mrf.mxu0
    %v5523 = vadd.f32 %v4095, %v5522
    %v5524 = vpop.f32.mrf.mxu0
    %v5525 = vadd.f32 %v4091, %v5524
    %v5526 = vpop.f32.mrf.mxu0
    %v5527 = vadd.f32 %v4095, %v5526
    %5528 = vdwg.mxu0
    %5529 = vmatprep.subr.bf16.mxu0 %v5075
    %5530 = vmatpush1.bf16.msra.mxu0 %v5074
    %5531 = vmatprep.subr.bf16.mxu0 %v5067
    %5532 = vmatpush1.bf16.msra.mxu0 %v5066
    %5533 = vmatprep.subr.bf16.mxu0 %v5059
    %5534 = vmatpush1.bf16.msra.mxu0 %v5058
    %5535 = vmatprep.subr.bf16.mxu0 %v5051
    %5536 = vmatpush1.bf16.msra.mxu0 %v5050
    %5537 = vmatprep.subr.bf16.mxu0 %v5043
    %5538 = vmatpush1.bf16.msra.mxu0 %v5042
    %5539 = vmatprep.subr.bf16.mxu0 %v5035
    %5540 = vmatpush1.bf16.msra.mxu0 %v5034
    %5541 = vmatprep.subr.bf16.mxu0 %v5027
    %5542 = vmatpush1.bf16.msra.mxu0 %v5026
    %5543 = vmatprep.subr.bf16.mxu0 %v5019
    %5544 = vmatpush1.bf16.msra.mxu0 %v5018
    %5545 = vmatprep.subr.bf16.mxu0 %v5139
    %5546 = vmatpush2.bf16.msra.mxu0 %v5138
    %5547 = vmatprep.subr.bf16.mxu0 %v5131
    %5548 = vmatpush2.bf16.msra.mxu0 %v5130
    %5549 = vmatprep.subr.bf16.mxu0 %v5123
    %5550 = vmatpush2.bf16.msra.mxu0 %v5122
    %5551 = vmatprep.subr.bf16.mxu0 %v5115
    %5552 = vmatpush2.bf16.msra.mxu0 %v5114
    %5553 = vmatprep.subr.bf16.mxu0 %v5107
    %5554 = vmatpush2.bf16.msra.mxu0 %v5106
    %5555 = vmatprep.subr.bf16.mxu0 %v5099
    %5556 = vmatpush2.bf16.msra.mxu0 %v5098
    %5557 = vmatprep.subr.bf16.mxu0 %v5091
    %5558 = vmatpush2.bf16.msra.mxu0 %v5090
    %5559 = vmatprep.subr.bf16.mxu0 %v5083
    %5560 = vmatpush2.bf16.msra.mxu0 %v5082
    %5561 = vmatprep.mubr.bf16.mxu0 %v3821
    %5562 = vmatmul.mubr.bf16.gmra.mxu0 %v3820
    %v5563 = vpop.f32.mrf.mxu0
    %v5564 = vadd.f32 %v5521, %v5563
    %v5565 = vpop.f32.mrf.mxu0
    %v5566 = vadd.f32 %v5523, %v5565
    %v5567 = vpop.f32.mrf.mxu0
    %v5568 = vadd.f32 %v5525, %v5567
    %v5569 = vpop.f32.mrf.mxu0
    %v5570 = vadd.f32 %v5527, %v5569
    %5571 = vdwg.mxu0
    %5572 = vmatprep.subr.bf16.mxu0 %v4949
    %5573 = vmatpush1.bf16.msra.mxu0 %v4948
    %5574 = vmatprep.subr.bf16.mxu0 %v4941
    %5575 = vmatpush1.bf16.msra.mxu0 %v4940
    %5576 = vmatprep.subr.bf16.mxu0 %v4933
    %5577 = vmatpush1.bf16.msra.mxu0 %v4932
    %5578 = vmatprep.subr.bf16.mxu0 %v4925
    %5579 = vmatpush1.bf16.msra.mxu0 %v4924
    %5580 = vmatprep.subr.bf16.mxu0 %v4917
    %5581 = vmatpush1.bf16.msra.mxu0 %v4916
    %5582 = vmatprep.subr.bf16.mxu0 %v4909
    %5583 = vmatpush1.bf16.msra.mxu0 %v4908
    %5584 = vmatprep.subr.bf16.mxu0 %v4901
    %5585 = vmatpush1.bf16.msra.mxu0 %v4900
    %5586 = vmatprep.subr.bf16.mxu0 %v4893
    %5587 = vmatpush1.bf16.msra.mxu0 %v4892
    %5588 = vmatprep.subr.bf16.mxu0 %v5013
    %5589 = vmatpush2.bf16.msra.mxu0 %v5012
    %5590 = vmatprep.subr.bf16.mxu0 %v5005
    %5591 = vmatpush2.bf16.msra.mxu0 %v5004
    %5592 = vmatprep.subr.bf16.mxu0 %v4997
    %5593 = vmatpush2.bf16.msra.mxu0 %v4996
    %5594 = vmatprep.subr.bf16.mxu0 %v4989
    %5595 = vmatpush2.bf16.msra.mxu0 %v4988
    %5596 = vmatprep.subr.bf16.mxu0 %v4981
    %5597 = vmatpush2.bf16.msra.mxu0 %v4980
    %5598 = vmatprep.subr.bf16.mxu0 %v4973
    %5599 = vmatpush2.bf16.msra.mxu0 %v4972
    %5600 = vmatprep.subr.bf16.mxu0 %v4965
    %5601 = vmatpush2.bf16.msra.mxu0 %v4964
    %5602 = vmatprep.subr.bf16.mxu0 %v4957
    %5603 = vmatpush2.bf16.msra.mxu0 %v4956
    %5604 = vmatprep.mubr.bf16.mxu0 %v3819
    %5605 = vmatmul.mubr.bf16.gmra.mxu0 %v3818
    %v5606 = vpop.f32.mrf.mxu0
    %v5607 = vadd.f32 %v4099, %v5606
    %v5608 = vpop.f32.mrf.mxu0
    %v5609 = vadd.f32 %v4103, %v5608
    %v5610 = vpop.f32.mrf.mxu0
    %v5611 = vadd.f32 %v4099, %v5610
    %v5612 = vpop.f32.mrf.mxu0
    %v5613 = vadd.f32 %v4103, %v5612
    %5614 = vdwg.mxu0
    %5615 = vmatprep.subr.bf16.mxu0 %v5077
    %5616 = vmatpush1.bf16.msra.mxu0 %v5076
    %5617 = vmatprep.subr.bf16.mxu0 %v5069
    %5618 = vmatpush1.bf16.msra.mxu0 %v5068
    %5619 = vmatprep.subr.bf16.mxu0 %v5061
    %5620 = vmatpush1.bf16.msra.mxu0 %v5060
    %5621 = vmatprep.subr.bf16.mxu0 %v5053
    %5622 = vmatpush1.bf16.msra.mxu0 %v5052
    %5623 = vmatprep.subr.bf16.mxu0 %v5045
    %5624 = vmatpush1.bf16.msra.mxu0 %v5044
    %5625 = vmatprep.subr.bf16.mxu0 %v5037
    %5626 = vmatpush1.bf16.msra.mxu0 %v5036
    %5627 = vmatprep.subr.bf16.mxu0 %v5029
    %5628 = vmatpush1.bf16.msra.mxu0 %v5028
    %5629 = vmatprep.subr.bf16.mxu0 %v5021
    %5630 = vmatpush1.bf16.msra.mxu0 %v5020
    %5631 = vmatprep.subr.bf16.mxu0 %v5141
    %5632 = vmatpush2.bf16.msra.mxu0 %v5140
    %5633 = vmatprep.subr.bf16.mxu0 %v5133
    %5634 = vmatpush2.bf16.msra.mxu0 %v5132
    %5635 = vmatprep.subr.bf16.mxu0 %v5125
    %5636 = vmatpush2.bf16.msra.mxu0 %v5124
    %5637 = vmatprep.subr.bf16.mxu0 %v5117
    %5638 = vmatpush2.bf16.msra.mxu0 %v5116
    %5639 = vmatprep.subr.bf16.mxu0 %v5109
    %5640 = vmatpush2.bf16.msra.mxu0 %v5108
    %5641 = vmatprep.subr.bf16.mxu0 %v5101
    %5642 = vmatpush2.bf16.msra.mxu0 %v5100
    %5643 = vmatprep.subr.bf16.mxu0 %v5093
    %5644 = vmatpush2.bf16.msra.mxu0 %v5092
    %5645 = vmatprep.subr.bf16.mxu0 %v5085
    %5646 = vmatpush2.bf16.msra.mxu0 %v5084
    %5647 = vmatprep.mubr.bf16.mxu0 %v3821
    %5648 = vmatmul.mubr.bf16.gmra.mxu0 %v3820
    %v5649 = vpop.f32.mrf.mxu0
    %v5650 = vadd.f32 %v5607, %v5649
    %v5651 = vpop.f32.mrf.mxu0
    %v5652 = vadd.f32 %v5609, %v5651
    %v5653 = vpop.f32.mrf.mxu0
    %v5654 = vadd.f32 %v5611, %v5653
    %v5655 = vpop.f32.mrf.mxu0
    %v5656 = vadd.f32 %v5613, %v5655
    %5657 = vdwg.mxu0
    %5658 = vmatprep.subr.bf16.mxu0 %v4951
    %5659 = vmatpush1.bf16.msra.mxu0 %v4950
    %5660 = vmatprep.subr.bf16.mxu0 %v4943
    %5661 = vmatpush1.bf16.msra.mxu0 %v4942
    %5662 = vmatprep.subr.bf16.mxu0 %v4935
    %5663 = vmatpush1.bf16.msra.mxu0 %v4934
    %5664 = vmatprep.subr.bf16.mxu0 %v4927
    %5665 = vmatpush1.bf16.msra.mxu0 %v4926
    %5666 = vmatprep.subr.bf16.mxu0 %v4919
    %5667 = vmatpush1.bf16.msra.mxu0 %v4918
    %5668 = vmatprep.subr.bf16.mxu0 %v4911
    %5669 = vmatpush1.bf16.msra.mxu0 %v4910
    %5670 = vmatprep.subr.bf16.mxu0 %v4903
    %5671 = vmatpush1.bf16.msra.mxu0 %v4902
    %5672 = vmatprep.subr.bf16.mxu0 %v4895
    %5673 = vmatpush1.bf16.msra.mxu0 %v4894
    %5674 = vmatprep.subr.bf16.mxu0 %v5015
    %5675 = vmatpush2.bf16.msra.mxu0 %v5014
    %5676 = vmatprep.subr.bf16.mxu0 %v5007
    %5677 = vmatpush2.bf16.msra.mxu0 %v5006
    %5678 = vmatprep.subr.bf16.mxu0 %v4999
    %5679 = vmatpush2.bf16.msra.mxu0 %v4998
    %5680 = vmatprep.subr.bf16.mxu0 %v4991
    %5681 = vmatpush2.bf16.msra.mxu0 %v4990
    %5682 = vmatprep.subr.bf16.mxu0 %v4983
    %5683 = vmatpush2.bf16.msra.mxu0 %v4982
    %5684 = vmatprep.subr.bf16.mxu0 %v4975
    %5685 = vmatpush2.bf16.msra.mxu0 %v4974
    %5686 = vmatprep.subr.bf16.mxu0 %v4967
    %5687 = vmatpush2.bf16.msra.mxu0 %v4966
    %5688 = vmatprep.subr.bf16.mxu0 %v4959
    %5689 = vmatpush2.bf16.msra.mxu0 %v4958
    %5690 = vmatprep.mubr.bf16.mxu0 %v3819
    %5691 = vmatmul.mubr.bf16.gmra.mxu0 %v3818
    %v5692 = vpop.f32.mrf.mxu0
    %v5693 = vadd.f32 %v4107, %v5692
    %v5694 = vpop.f32.mrf.mxu0
    %v5695 = vadd.f32 %v4111, %v5694
    %v5696 = vpop.f32.mrf.mxu0
    %v5697 = vadd.f32 %v4107, %v5696
    %v5698 = vpop.f32.mrf.mxu0
    %v5699 = vadd.f32 %v4111, %v5698
    %5700 = vdwg.mxu0
    %5701 = vmatprep.subr.bf16.mxu0 %v5079
    %5702 = vmatpush1.bf16.msra.mxu0 %v5078
    %5703 = vmatprep.subr.bf16.mxu0 %v5071
    %5704 = vmatpush1.bf16.msra.mxu0 %v5070
    %5705 = vmatprep.subr.bf16.mxu0 %v5063
    %5706 = vmatpush1.bf16.msra.mxu0 %v5062
    %5707 = vmatprep.subr.bf16.mxu0 %v5055
    %5708 = vmatpush1.bf16.msra.mxu0 %v5054
    %5709 = vmatprep.subr.bf16.mxu0 %v5047
    %5710 = vmatpush1.bf16.msra.mxu0 %v5046
    %5711 = vmatprep.subr.bf16.mxu0 %v5039
    %5712 = vmatpush1.bf16.msra.mxu0 %v5038
    %5713 = vmatprep.subr.bf16.mxu0 %v5031
    %5714 = vmatpush1.bf16.msra.mxu0 %v5030
    %5715 = vmatprep.subr.bf16.mxu0 %v5023
    %5716 = vmatpush1.bf16.msra.mxu0 %v5022
    %5717 = vmatprep.subr.bf16.mxu0 %v5143
    %5718 = vmatpush2.bf16.msra.mxu0 %v5142
    %5719 = vmatprep.subr.bf16.mxu0 %v5135
    %5720 = vmatpush2.bf16.msra.mxu0 %v5134
    %5721 = vmatprep.subr.bf16.mxu0 %v5127
    %5722 = vmatpush2.bf16.msra.mxu0 %v5126
    %5723 = vmatprep.subr.bf16.mxu0 %v5119
    %5724 = vmatpush2.bf16.msra.mxu0 %v5118
    %5725 = vmatprep.subr.bf16.mxu0 %v5111
    %5726 = vmatpush2.bf16.msra.mxu0 %v5110
    %5727 = vmatprep.subr.bf16.mxu0 %v5103
    %5728 = vmatpush2.bf16.msra.mxu0 %v5102
    %5729 = vmatprep.subr.bf16.mxu0 %v5095
    %5730 = vmatpush2.bf16.msra.mxu0 %v5094
    %5731 = vmatprep.subr.bf16.mxu0 %v5087
    %5732 = vmatpush2.bf16.msra.mxu0 %v5086
    %5733 = vmatprep.mubr.bf16.mxu0 %v3821
    %5734 = vmatmul.mubr.bf16.gmra.mxu0 %v3820
    %v5735 = vpop.f32.mrf.mxu0
    %v5736 = vadd.f32 %v5693, %v5735
    %v5737 = vpop.f32.mrf.mxu0
    %v5738 = vadd.f32 %v5695, %v5737
    %v5739 = vpop.f32.mrf.mxu0
    %v5740 = vadd.f32 %v5697, %v5739
    %v5741 = vpop.f32.mrf.mxu0
    %v5742 = vadd.f32 %v5699, %v5741
    %5743 = vdwg.mxu0
    %v5744 = vtanh.pop %v5478
    %v5745 = vtanh.pop %v5480
    %v5746 = vtanh.pop %v5564
    %v5747 = vtanh.pop %v5566
    %v5748 = vtanh.pop %v5650
    %v5749 = vtanh.pop %v5652
    %v5750 = vtanh.pop %v5736
    %v5751 = vtanh.pop %v5738
    %v5752 = vtanh.pop %v5482
    %v5753 = vtanh.pop %v5484
    %v5754 = vtanh.pop %v5568
    %v5755 = vtanh.pop %v5570
    %v5756 = vtanh.pop %v5654
    %v5757 = vtanh.pop %v5656
    %v5758 = vtanh.pop %v5740
    %v5759 = vtanh.pop %v5742
    %v5760 = vpack.c.bf16 %v5752, %v5744
    %v5761 = vpack.c.bf16 %v5753, %v5745
    %v5762 = vpack.c.bf16 %v5754, %v5746
    %v5763 = vpack.c.bf16 %v5755, %v5747
    %v5764 = vpack.c.bf16 %v5756, %v5748
    %v5765 = vpack.c.bf16 %v5757, %v5749
    %v5766 = vpack.c.bf16 %v5758, %v5750
    %v5767 = vpack.c.bf16 %v5759, %v5751
    %v5768 = vld [vmem:[#allocation20] sm:$0xf]
    %v5769 = vld [vmem:[#allocation20 + $0x4] sm:$0xf]
    %v5770 = vld [vmem:[#allocation20 + $0x8] sm:$0xf]
    %v5771 = vld [vmem:[#allocation20 + $0xc] sm:$0xf]
    %v5772 = vld [vmem:[#allocation20 + $0x10] sm:$0xf]
    %v5773 = vld [vmem:[#allocation20 + $0x14] sm:$0xf]
    %v5774 = vld [vmem:[#allocation20 + $0x18] sm:$0xf]
    %v5775 = vld [vmem:[#allocation20 + $0x1c] sm:$0xf]
    %v5776 = vld [vmem:[#allocation20 + $0x20] sm:$0xf]
    %v5777 = vld [vmem:[#allocation20 + $0x24] sm:$0xf]
    %v5778 = vld [vmem:[#allocation20 + $0x28] sm:$0xf]
    %v5779 = vld [vmem:[#allocation20 + $0x2c] sm:$0xf]
    %v5780 = vld [vmem:[#allocation20 + $0x30] sm:$0xf]
    %v5781 = vld [vmem:[#allocation20 + $0x34] sm:$0xf]
    %v5782 = vld [vmem:[#allocation20 + $0x38] sm:$0xf]
    %v5783 = vld [vmem:[#allocation20 + $0x3c] sm:$0xf]
    %v5784 = vld [vmem:[#allocation20 + $0x40] sm:$0xf]
    %v5785 = vld [vmem:[#allocation20 + $0x44] sm:$0xf]
    %v5786 = vld [vmem:[#allocation20 + $0x48] sm:$0xf]
    %v5787 = vld [vmem:[#allocation20 + $0x4c] sm:$0xf]
    %v5788 = vld [vmem:[#allocation20 + $0x50] sm:$0xf]
    %v5789 = vld [vmem:[#allocation20 + $0x54] sm:$0xf]
    %v5790 = vld [vmem:[#allocation20 + $0x58] sm:$0xf]
    %v5791 = vld [vmem:[#allocation20 + $0x5c] sm:$0xf]
    %v5792 = vld [vmem:[#allocation20 + $0x60] sm:$0xf]
    %v5793 = vld [vmem:[#allocation20 + $0x64] sm:$0xf]
    %v5794 = vld [vmem:[#allocation20 + $0x68] sm:$0xf]
    %v5795 = vld [vmem:[#allocation20 + $0x6c] sm:$0xf]
    %v5796 = vld [vmem:[#allocation20 + $0x70] sm:$0xf]
    %v5797 = vld [vmem:[#allocation20 + $0x74] sm:$0xf]
    %v5798 = vld [vmem:[#allocation20 + $0x78] sm:$0xf]
    %v5799 = vld [vmem:[#allocation20 + $0x7c] sm:$0xf]
    %v5800 = vld [vmem:[#allocation20 + $0x80] sm:$0xf]
    %v5801 = vld [vmem:[#allocation20 + $0x84] sm:$0xf]
    %v5802 = vld [vmem:[#allocation20 + $0x88] sm:$0xf]
    %v5803 = vld [vmem:[#allocation20 + $0x8c] sm:$0xf]
    %v5804 = vld [vmem:[#allocation20 + $0x90] sm:$0xf]
    %v5805 = vld [vmem:[#allocation20 + $0x94] sm:$0xf]
    %v5806 = vld [vmem:[#allocation20 + $0x98] sm:$0xf]
    %v5807 = vld [vmem:[#allocation20 + $0x9c] sm:$0xf]
    %v5808 = vld [vmem:[#allocation20 + $0xa0] sm:$0xf]
    %v5809 = vld [vmem:[#allocation20 + $0xa4] sm:$0xf]
    %v5810 = vld [vmem:[#allocation20 + $0xa8] sm:$0xf]
    %v5811 = vld [vmem:[#allocation20 + $0xac] sm:$0xf]
    %v5812 = vld [vmem:[#allocation20 + $0xb0] sm:$0xf]
    %v5813 = vld [vmem:[#allocation20 + $0xb4] sm:$0xf]
    %v5814 = vld [vmem:[#allocation20 + $0xb8] sm:$0xf]
    %v5815 = vld [vmem:[#allocation20 + $0xbc] sm:$0xf]
    %v5816 = vld [vmem:[#allocation20 + $0xc0] sm:$0xf]
    %v5817 = vld [vmem:[#allocation20 + $0xc4] sm:$0xf]
    %v5818 = vld [vmem:[#allocation20 + $0xc8] sm:$0xf]
    %v5819 = vld [vmem:[#allocation20 + $0xcc] sm:$0xf]
    %v5820 = vld [vmem:[#allocation20 + $0xd0] sm:$0xf]
    %v5821 = vld [vmem:[#allocation20 + $0xd4] sm:$0xf]
    %v5822 = vld [vmem:[#allocation20 + $0xd8] sm:$0xf]
    %v5823 = vld [vmem:[#allocation20 + $0xdc] sm:$0xf]
    %v5824 = vld [vmem:[#allocation20 + $0xe0] sm:$0xf]
    %v5825 = vld [vmem:[#allocation20 + $0xe4] sm:$0xf]
    %v5826 = vld [vmem:[#allocation20 + $0xe8] sm:$0xf]
    %v5827 = vld [vmem:[#allocation20 + $0xec] sm:$0xf]
    %v5828 = vld [vmem:[#allocation20 + $0xf0] sm:$0xf]
    %v5829 = vld [vmem:[#allocation20 + $0xf4] sm:$0xf]
    %v5830 = vld [vmem:[#allocation20 + $0xf8] sm:$0xf]
    %v5831 = vld [vmem:[#allocation20 + $0xfc] sm:$0xf]
    %v5832 = vld [vmem:[#allocation20 + $0x100] sm:$0xf]
    %v5833 = vld [vmem:[#allocation20 + $0x104] sm:$0xf]
    %v5834 = vld [vmem:[#allocation20 + $0x108] sm:$0xf]
    %v5835 = vld [vmem:[#allocation20 + $0x10c] sm:$0xf]
    %v5836 = vld [vmem:[#allocation20 + $0x110] sm:$0xf]
    %v5837 = vld [vmem:[#allocation20 + $0x114] sm:$0xf]
    %v5838 = vld [vmem:[#allocation20 + $0x118] sm:$0xf]
    %v5839 = vld [vmem:[#allocation20 + $0x11c] sm:$0xf]
    %v5840 = vld [vmem:[#allocation20 + $0x120] sm:$0xf]
    %v5841 = vld [vmem:[#allocation20 + $0x124] sm:$0xf]
    %v5842 = vld [vmem:[#allocation20 + $0x128] sm:$0xf]
    %v5843 = vld [vmem:[#allocation20 + $0x12c] sm:$0xf]
    %v5844 = vld [vmem:[#allocation20 + $0x130] sm:$0xf]
    %v5845 = vld [vmem:[#allocation20 + $0x134] sm:$0xf]
    %v5846 = vld [vmem:[#allocation20 + $0x138] sm:$0xf]
    %v5847 = vld [vmem:[#allocation20 + $0x13c] sm:$0xf]
    %v5848 = vld [vmem:[#allocation20 + $0x140] sm:$0xf]
    %v5849 = vld [vmem:[#allocation20 + $0x144] sm:$0xf]
    %v5850 = vld [vmem:[#allocation20 + $0x148] sm:$0xf]
    %v5851 = vld [vmem:[#allocation20 + $0x14c] sm:$0xf]
    %v5852 = vld [vmem:[#allocation20 + $0x150] sm:$0xf]
    %v5853 = vld [vmem:[#allocation20 + $0x154] sm:$0xf]
    %v5854 = vld [vmem:[#allocation20 + $0x158] sm:$0xf]
    %v5855 = vld [vmem:[#allocation20 + $0x15c] sm:$0xf]
    %v5856 = vld [vmem:[#allocation20 + $0x160] sm:$0xf]
    %v5857 = vld [vmem:[#allocation20 + $0x164] sm:$0xf]
    %v5858 = vld [vmem:[#allocation20 + $0x168] sm:$0xf]
    %v5859 = vld [vmem:[#allocation20 + $0x16c] sm:$0xf]
    %v5860 = vld [vmem:[#allocation20 + $0x170] sm:$0xf]
    %v5861 = vld [vmem:[#allocation20 + $0x174] sm:$0xf]
    %v5862 = vld [vmem:[#allocation20 + $0x178] sm:$0xf]
    %v5863 = vld [vmem:[#allocation20 + $0x17c] sm:$0xf]
    %v5864 = vld [vmem:[#allocation20 + $0x180] sm:$0xf]
    %v5865 = vld [vmem:[#allocation20 + $0x184] sm:$0xf]
    %v5866 = vld [vmem:[#allocation20 + $0x188] sm:$0xf]
    %v5867 = vld [vmem:[#allocation20 + $0x18c] sm:$0xf]
    %v5868 = vld [vmem:[#allocation20 + $0x190] sm:$0xf]
    %v5869 = vld [vmem:[#allocation20 + $0x194] sm:$0xf]
    %v5870 = vld [vmem:[#allocation20 + $0x198] sm:$0xf]
    %v5871 = vld [vmem:[#allocation20 + $0x19c] sm:$0xf]
    %v5872 = vld [vmem:[#allocation20 + $0x1a0] sm:$0xf]
    %v5873 = vld [vmem:[#allocation20 + $0x1a4] sm:$0xf]
    %v5874 = vld [vmem:[#allocation20 + $0x1a8] sm:$0xf]
    %v5875 = vld [vmem:[#allocation20 + $0x1ac] sm:$0xf]
    %v5876 = vld [vmem:[#allocation20 + $0x1b0] sm:$0xf]
    %v5877 = vld [vmem:[#allocation20 + $0x1b4] sm:$0xf]
    %v5878 = vld [vmem:[#allocation20 + $0x1b8] sm:$0xf]
    %v5879 = vld [vmem:[#allocation20 + $0x1bc] sm:$0xf]
    %v5880 = vld [vmem:[#allocation20 + $0x1c0] sm:$0xf]
    %v5881 = vld [vmem:[#allocation20 + $0x1c4] sm:$0xf]
    %v5882 = vld [vmem:[#allocation20 + $0x1c8] sm:$0xf]
    %v5883 = vld [vmem:[#allocation20 + $0x1cc] sm:$0xf]
    %v5884 = vld [vmem:[#allocation20 + $0x1d0] sm:$0xf]
    %v5885 = vld [vmem:[#allocation20 + $0x1d4] sm:$0xf]
    %v5886 = vld [vmem:[#allocation20 + $0x1d8] sm:$0xf]
    %v5887 = vld [vmem:[#allocation20 + $0x1dc] sm:$0xf]
    %v5888 = vld [vmem:[#allocation20 + $0x1e0] sm:$0xf]
    %v5889 = vld [vmem:[#allocation20 + $0x1e4] sm:$0xf]
    %v5890 = vld [vmem:[#allocation20 + $0x1e8] sm:$0xf]
    %v5891 = vld [vmem:[#allocation20 + $0x1ec] sm:$0xf]
    %v5892 = vld [vmem:[#allocation20 + $0x1f0] sm:$0xf]
    %v5893 = vld [vmem:[#allocation20 + $0x1f4] sm:$0xf]
    %v5894 = vld [vmem:[#allocation20 + $0x1f8] sm:$0xf]
    %v5895 = vld [vmem:[#allocation20 + $0x1fc] sm:$0xf]
    %v5896 = vld [vmem:[%s15] sm:$0x1]
    %v5898 = vlaneseq
    %v5899 = vshrl.u32 %v5898, 7
    %v5900 = vsub.s32 0, %v5899
    %v5901 = vrot.slane %v5896, %v5900
    %v6031 = vunpack.c.l.b16 %v5768
    %v6032 = vunpack.c.l.b16 %v5769
    %v6033 = vunpack.c.l.b16 %v5770
    %v6034 = vunpack.c.l.b16 %v5771
    %v6035 = vunpack.c.l.b16 %v5772
    %v6036 = vunpack.c.l.b16 %v5773
    %v6037 = vunpack.c.l.b16 %v5774
    %v6038 = vunpack.c.l.b16 %v5775
    %v6039 = vunpack.c.l.b16 %v5776
    %v6040 = vunpack.c.l.b16 %v5777
    %v6041 = vunpack.c.l.b16 %v5778
    %v6042 = vunpack.c.l.b16 %v5779
    %v6043 = vunpack.c.l.b16 %v5780
    %v6044 = vunpack.c.l.b16 %v5781
    %v6045 = vunpack.c.l.b16 %v5782
    %v6046 = vunpack.c.l.b16 %v5783
    %v6047 = vunpack.c.l.b16 %v5784
    %v6048 = vunpack.c.l.b16 %v5785
    %v6049 = vunpack.c.l.b16 %v5786
    %v6050 = vunpack.c.l.b16 %v5787
    %v6051 = vunpack.c.l.b16 %v5788
    %v6052 = vunpack.c.l.b16 %v5789
    %v6053 = vunpack.c.l.b16 %v5790
    %v6054 = vunpack.c.l.b16 %v5791
    %v6055 = vunpack.c.l.b16 %v5792
    %v6056 = vunpack.c.l.b16 %v5793
    %v6057 = vunpack.c.l.b16 %v5794
    %v6058 = vunpack.c.l.b16 %v5795
    %v6059 = vunpack.c.l.b16 %v5796
    %v6060 = vunpack.c.l.b16 %v5797
    %v6061 = vunpack.c.l.b16 %v5798
    %v6062 = vunpack.c.l.b16 %v5799
    %v6063 = vunpack.c.l.b16 %v5800
    %v6064 = vunpack.c.l.b16 %v5801
    %v6065 = vunpack.c.l.b16 %v5802
    %v6066 = vunpack.c.l.b16 %v5803
    %v6067 = vunpack.c.l.b16 %v5804
    %v6068 = vunpack.c.l.b16 %v5805
    %v6069 = vunpack.c.l.b16 %v5806
    %v6070 = vunpack.c.l.b16 %v5807
    %v6071 = vunpack.c.l.b16 %v5808
    %v6072 = vunpack.c.l.b16 %v5809
    %v6073 = vunpack.c.l.b16 %v5810
    %v6074 = vunpack.c.l.b16 %v5811
    %v6075 = vunpack.c.l.b16 %v5812
    %v6076 = vunpack.c.l.b16 %v5813
    %v6077 = vunpack.c.l.b16 %v5814
    %v6078 = vunpack.c.l.b16 %v5815
    %v6079 = vunpack.c.l.b16 %v5816
    %v6080 = vunpack.c.l.b16 %v5817
    %v6081 = vunpack.c.l.b16 %v5818
    %v6082 = vunpack.c.l.b16 %v5819
    %v6083 = vunpack.c.l.b16 %v5820
    %v6084 = vunpack.c.l.b16 %v5821
    %v6085 = vunpack.c.l.b16 %v5822
    %v6086 = vunpack.c.l.b16 %v5823
    %v6087 = vunpack.c.l.b16 %v5824
    %v6088 = vunpack.c.l.b16 %v5825
    %v6089 = vunpack.c.l.b16 %v5826
    %v6090 = vunpack.c.l.b16 %v5827
    %v6091 = vunpack.c.l.b16 %v5828
    %v6092 = vunpack.c.l.b16 %v5829
    %v6093 = vunpack.c.l.b16 %v5830
    %v6094 = vunpack.c.l.b16 %v5831
    %v6095 = vunpack.c.l.b16 %v5832
    %v6096 = vunpack.c.l.b16 %v5833
    %v6097 = vunpack.c.l.b16 %v5834
    %v6098 = vunpack.c.l.b16 %v5835
    %v6099 = vunpack.c.l.b16 %v5836
    %v6100 = vunpack.c.l.b16 %v5837
    %v6101 = vunpack.c.l.b16 %v5838
    %v6102 = vunpack.c.l.b16 %v5839
    %v6103 = vunpack.c.l.b16 %v5840
    %v6104 = vunpack.c.l.b16 %v5841
    %v6105 = vunpack.c.l.b16 %v5842
    %v6106 = vunpack.c.l.b16 %v5843
    %v6107 = vunpack.c.l.b16 %v5844
    %v6108 = vunpack.c.l.b16 %v5845
    %v6109 = vunpack.c.l.b16 %v5846
    %v6110 = vunpack.c.l.b16 %v5847
    %v6111 = vunpack.c.l.b16 %v5848
    %v6112 = vunpack.c.l.b16 %v5849
    %v6113 = vunpack.c.l.b16 %v5850
    %v6114 = vunpack.c.l.b16 %v5851
    %v6115 = vunpack.c.l.b16 %v5852
    %v6116 = vunpack.c.l.b16 %v5853
    %v6117 = vunpack.c.l.b16 %v5854
    %v6118 = vunpack.c.l.b16 %v5855
    %v6119 = vunpack.c.l.b16 %v5856
    %v6120 = vunpack.c.l.b16 %v5857
    %v6121 = vunpack.c.l.b16 %v5858
    %v6122 = vunpack.c.l.b16 %v5859
    %v6123 = vunpack.c.l.b16 %v5860
    %v6124 = vunpack.c.l.b16 %v5861
    %v6125 = vunpack.c.l.b16 %v5862
    %v6126 = vunpack.c.l.b16 %v5863
    %v6127 = vunpack.c.l.b16 %v5864
    %v6128 = vunpack.c.l.b16 %v5865
    %v6129 = vunpack.c.l.b16 %v5866
    %v6130 = vunpack.c.l.b16 %v5867
    %v6131 = vunpack.c.l.b16 %v5868
    %v6132 = vunpack.c.l.b16 %v5869
    %v6133 = vunpack.c.l.b16 %v5870
    %v6134 = vunpack.c.l.b16 %v5871
    %v6135 = vunpack.c.l.b16 %v5872
    %v6136 = vunpack.c.l.b16 %v5873
    %v6137 = vunpack.c.l.b16 %v5874
    %v6138 = vunpack.c.l.b16 %v5875
    %v6139 = vunpack.c.l.b16 %v5876
    %v6140 = vunpack.c.l.b16 %v5877
    %v6141 = vunpack.c.l.b16 %v5878
    %v6142 = vunpack.c.l.b16 %v5879
    %v6143 = vunpack.c.l.b16 %v5880
    %v6144 = vunpack.c.l.b16 %v5881
    %v6145 = vunpack.c.l.b16 %v5882
    %v6146 = vunpack.c.l.b16 %v5883
    %v6147 = vunpack.c.l.b16 %v5884
    %v6148 = vunpack.c.l.b16 %v5885
    %v6149 = vunpack.c.l.b16 %v5886
    %v6150 = vunpack.c.l.b16 %v5887
    %v6151 = vunpack.c.l.b16 %v5888
    %v6152 = vunpack.c.l.b16 %v5889
    %v6153 = vunpack.c.l.b16 %v5890
    %v6154 = vunpack.c.l.b16 %v5891
    %v6155 = vunpack.c.l.b16 %v5892
    %v6156 = vunpack.c.l.b16 %v5893
    %v6157 = vunpack.c.l.b16 %v5894
    %v6158 = vunpack.c.l.b16 %v5895
    %v6159 = vpack.c.b16 %v6032, %v6031
    %v6160 = vpack.c.b16 %v6034, %v6033
    %v6161 = vpack.c.b16 %v6036, %v6035
    %v6162 = vpack.c.b16 %v6038, %v6037
    %v6163 = vpack.c.b16 %v6040, %v6039
    %v6164 = vpack.c.b16 %v6042, %v6041
    %v6165 = vpack.c.b16 %v6044, %v6043
    %v6166 = vpack.c.b16 %v6046, %v6045
    %v6167 = vpack.c.b16 %v6048, %v6047
    %v6168 = vpack.c.b16 %v6050, %v6049
    %v6169 = vpack.c.b16 %v6052, %v6051
    %v6170 = vpack.c.b16 %v6054, %v6053
    %v6171 = vpack.c.b16 %v6056, %v6055
    %v6172 = vpack.c.b16 %v6058, %v6057
    %v6173 = vpack.c.b16 %v6060, %v6059
    %v6174 = vpack.c.b16 %v6062, %v6061
    %v6175 = vpack.c.b16 %v6064, %v6063
    %v6176 = vpack.c.b16 %v6066, %v6065
    %v6177 = vpack.c.b16 %v6068, %v6067
    %v6178 = vpack.c.b16 %v6070, %v6069
    %v6179 = vpack.c.b16 %v6072, %v6071
    %v6180 = vpack.c.b16 %v6074, %v6073
    %v6181 = vpack.c.b16 %v6076, %v6075
    %v6182 = vpack.c.b16 %v6078, %v6077
    %v6183 = vpack.c.b16 %v6080, %v6079
    %v6184 = vpack.c.b16 %v6082, %v6081
    %v6185 = vpack.c.b16 %v6084, %v6083
    %v6186 = vpack.c.b16 %v6086, %v6085
    %v6187 = vpack.c.b16 %v6088, %v6087
    %v6188 = vpack.c.b16 %v6090, %v6089
    %v6189 = vpack.c.b16 %v6092, %v6091
    %v6190 = vpack.c.b16 %v6094, %v6093
    %v6191 = vpack.c.b16 %v6096, %v6095
    %v6192 = vpack.c.b16 %v6098, %v6097
    %v6193 = vpack.c.b16 %v6100, %v6099
    %v6194 = vpack.c.b16 %v6102, %v6101
    %v6195 = vpack.c.b16 %v6104, %v6103
    %v6196 = vpack.c.b16 %v6106, %v6105
    %v6197 = vpack.c.b16 %v6108, %v6107
    %v6198 = vpack.c.b16 %v6110, %v6109
    %v6199 = vpack.c.b16 %v6112, %v6111
    %v6200 = vpack.c.b16 %v6114, %v6113
    %v6201 = vpack.c.b16 %v6116, %v6115
    %v6202 = vpack.c.b16 %v6118, %v6117
    %v6203 = vpack.c.b16 %v6120, %v6119
    %v6204 = vpack.c.b16 %v6122, %v6121
    %v6205 = vpack.c.b16 %v6124, %v6123
    %v6206 = vpack.c.b16 %v6126, %v6125
    %v6207 = vpack.c.b16 %v6128, %v6127
    %v6208 = vpack.c.b16 %v6130, %v6129
    %v6209 = vpack.c.b16 %v6132, %v6131
    %v6210 = vpack.c.b16 %v6134, %v6133
    %v6211 = vpack.c.b16 %v6136, %v6135
    %v6212 = vpack.c.b16 %v6138, %v6137
    %v6213 = vpack.c.b16 %v6140, %v6139
    %v6214 = vpack.c.b16 %v6142, %v6141
    %v6215 = vpack.c.b16 %v6144, %v6143
    %v6216 = vpack.c.b16 %v6146, %v6145
    %v6217 = vpack.c.b16 %v6148, %v6147
    %v6218 = vpack.c.b16 %v6150, %v6149
    %v6219 = vpack.c.b16 %v6152, %v6151
    %v6220 = vpack.c.b16 %v6154, %v6153
    %v6221 = vpack.c.b16 %v6156, %v6155
    %v6222 = vpack.c.b16 %v6158, %v6157
    %6287 = vmatprep.subr.bf16.mxu0 0
    %6288 = vmatpush1.bf16.msra.mxu0 %v6166
    %6289 = vmatprep.subr.bf16.mxu0 0
    %6290 = vmatpush1.bf16.msra.mxu0 %v6165
    %6291 = vmatprep.subr.bf16.mxu0 0
    %6292 = vmatpush1.bf16.msra.mxu0 %v6164
    %6293 = vmatprep.subr.bf16.mxu0 0
    %6294 = vmatpush1.bf16.msra.mxu0 %v6163
    %6295 = vmatprep.subr.bf16.mxu0 0
    %6296 = vmatpush1.bf16.msra.mxu0 %v6162
    %6297 = vmatprep.subr.bf16.mxu0 0
    %6298 = vmatpush1.bf16.msra.mxu0 %v6161
    %6299 = vmatprep.subr.bf16.mxu0 0
    %6300 = vmatpush1.bf16.msra.mxu0 %v6160
    %6301 = vmatprep.subr.bf16.mxu0 0
    %6302 = vmatpush1.bf16.msra.mxu0 %v6159
    %6303 = vmatprep.subr.bf16.mxu0 0
    %6304 = vmatpush2.bf16.msra.mxu0 %v6174
    %6305 = vmatprep.subr.bf16.mxu0 0
    %6306 = vmatpush2.bf16.msra.mxu0 %v6173
    %6307 = vmatprep.subr.bf16.mxu0 0
    %6308 = vmatpush2.bf16.msra.mxu0 %v6172
    %6309 = vmatprep.subr.bf16.mxu0 0
    %6310 = vmatpush2.bf16.msra.mxu0 %v6171
    %6311 = vmatprep.subr.bf16.mxu0 0
    %6312 = vmatpush2.bf16.msra.mxu0 %v6170
    %6313 = vmatprep.subr.bf16.mxu0 0
    %6314 = vmatpush2.bf16.msra.mxu0 %v6169
    %6315 = vmatprep.subr.bf16.mxu0 0
    %6316 = vmatpush2.bf16.msra.mxu0 %v6168
    %6317 = vmatprep.subr.bf16.mxu0 0
    %6318 = vmatpush2.bf16.msra.mxu0 %v6167
    %6319 = vmatprep.mubr.bf16.mxu0 %v5761
    %6320 = vmatmul.mubr.bf16.gmra.mxu0 %v5760
    %v6321 = vpop.f32.mrf.mxu0
    %v6322 = vadd.f32 %v5901, %v6321
    %v6323 = vpop.f32.mrf.mxu0
    %v6324 = vpop.f32.mrf.mxu0
    %v6325 = vadd.f32 %v5901, %v6324
    %v6326 = vpop.f32.mrf.mxu0
    %6327 = vdwg.mxu0
    %6328 = vmatprep.subr.bf16.mxu0 0
    %6329 = vmatpush1.bf16.msra.mxu0 %v6182
    %6330 = vmatprep.subr.bf16.mxu0 0
    %6331 = vmatpush1.bf16.msra.mxu0 %v6181
    %6332 = vmatprep.subr.bf16.mxu0 0
    %6333 = vmatpush1.bf16.msra.mxu0 %v6180
    %6334 = vmatprep.subr.bf16.mxu0 0
    %6335 = vmatpush1.bf16.msra.mxu0 %v6179
    %6336 = vmatprep.subr.bf16.mxu0 0
    %6337 = vmatpush1.bf16.msra.mxu0 %v6178
    %6338 = vmatprep.subr.bf16.mxu0 0
    %6339 = vmatpush1.bf16.msra.mxu0 %v6177
    %6340 = vmatprep.subr.bf16.mxu0 0
    %6341 = vmatpush1.bf16.msra.mxu0 %v6176
    %6342 = vmatprep.subr.bf16.mxu0 0
    %6343 = vmatpush1.bf16.msra.mxu0 %v6175
    %6344 = vmatprep.subr.bf16.mxu0 0
    %6345 = vmatpush2.bf16.msra.mxu0 %v6190
    %6346 = vmatprep.subr.bf16.mxu0 0
    %6347 = vmatpush2.bf16.msra.mxu0 %v6189
    %6348 = vmatprep.subr.bf16.mxu0 0
    %6349 = vmatpush2.bf16.msra.mxu0 %v6188
    %6350 = vmatprep.subr.bf16.mxu0 0
    %6351 = vmatpush2.bf16.msra.mxu0 %v6187
    %6352 = vmatprep.subr.bf16.mxu0 0
    %6353 = vmatpush2.bf16.msra.mxu0 %v6186
    %6354 = vmatprep.subr.bf16.mxu0 0
    %6355 = vmatpush2.bf16.msra.mxu0 %v6185
    %6356 = vmatprep.subr.bf16.mxu0 0
    %6357 = vmatpush2.bf16.msra.mxu0 %v6184
    %6358 = vmatprep.subr.bf16.mxu0 0
    %6359 = vmatpush2.bf16.msra.mxu0 %v6183
    %6360 = vmatprep.mubr.bf16.mxu0 %v5763
    %6361 = vmatmul.mubr.bf16.gmra.mxu0 %v5762
    %v6362 = vpop.f32.mrf.mxu0
    %v6363 = vadd.f32 %v6322, %v6362
    %v6364 = vpop.f32.mrf.mxu0
    %v6365 = vpop.f32.mrf.mxu0
    %v6366 = vadd.f32 %v6325, %v6365
    %v6367 = vpop.f32.mrf.mxu0
    %6368 = vdwg.mxu0
    %6369 = vmatprep.subr.bf16.mxu0 0
    %6370 = vmatpush1.bf16.msra.mxu0 %v6198
    %6371 = vmatprep.subr.bf16.mxu0 0
    %6372 = vmatpush1.bf16.msra.mxu0 %v6197
    %6373 = vmatprep.subr.bf16.mxu0 0
    %6374 = vmatpush1.bf16.msra.mxu0 %v6196
    %6375 = vmatprep.subr.bf16.mxu0 0
    %6376 = vmatpush1.bf16.msra.mxu0 %v6195
    %6377 = vmatprep.subr.bf16.mxu0 0
    %6378 = vmatpush1.bf16.msra.mxu0 %v6194
    %6379 = vmatprep.subr.bf16.mxu0 0
    %6380 = vmatpush1.bf16.msra.mxu0 %v6193
    %6381 = vmatprep.subr.bf16.mxu0 0
    %6382 = vmatpush1.bf16.msra.mxu0 %v6192
    %6383 = vmatprep.subr.bf16.mxu0 0
    %6384 = vmatpush1.bf16.msra.mxu0 %v6191
    %6385 = vmatprep.subr.bf16.mxu0 0
    %6386 = vmatpush2.bf16.msra.mxu0 %v6206
    %6387 = vmatprep.subr.bf16.mxu0 0
    %6388 = vmatpush2.bf16.msra.mxu0 %v6205
    %6389 = vmatprep.subr.bf16.mxu0 0
    %6390 = vmatpush2.bf16.msra.mxu0 %v6204
    %6391 = vmatprep.subr.bf16.mxu0 0
    %6392 = vmatpush2.bf16.msra.mxu0 %v6203
    %6393 = vmatprep.subr.bf16.mxu0 0
    %6394 = vmatpush2.bf16.msra.mxu0 %v6202
    %6395 = vmatprep.subr.bf16.mxu0 0
    %6396 = vmatpush2.bf16.msra.mxu0 %v6201
    %6397 = vmatprep.subr.bf16.mxu0 0
    %6398 = vmatpush2.bf16.msra.mxu0 %v6200
    %6399 = vmatprep.subr.bf16.mxu0 0
    %6400 = vmatpush2.bf16.msra.mxu0 %v6199
    %6401 = vmatprep.mubr.bf16.mxu0 %v5765
    %6402 = vmatmul.mubr.bf16.gmra.mxu0 %v5764
    %v6403 = vpop.f32.mrf.mxu0
    %v6404 = vadd.f32 %v6363, %v6403
    %v6405 = vpop.f32.mrf.mxu0
    %v6406 = vpop.f32.mrf.mxu0
    %v6407 = vadd.f32 %v6366, %v6406
    %v6408 = vpop.f32.mrf.mxu0
    %6409 = vdwg.mxu0
    %6410 = vmatprep.subr.bf16.mxu0 0
    %6411 = vmatpush1.bf16.msra.mxu0 %v6214
    %6412 = vmatprep.subr.bf16.mxu0 0
    %6413 = vmatpush1.bf16.msra.mxu0 %v6213
    %6414 = vmatprep.subr.bf16.mxu0 0
    %6415 = vmatpush1.bf16.msra.mxu0 %v6212
    %6416 = vmatprep.subr.bf16.mxu0 0
    %6417 = vmatpush1.bf16.msra.mxu0 %v6211
    %6418 = vmatprep.subr.bf16.mxu0 0
    %6419 = vmatpush1.bf16.msra.mxu0 %v6210
    %6420 = vmatprep.subr.bf16.mxu0 0
    %6421 = vmatpush1.bf16.msra.mxu0 %v6209
    %6422 = vmatprep.subr.bf16.mxu0 0
    %6423 = vmatpush1.bf16.msra.mxu0 %v6208
    %6424 = vmatprep.subr.bf16.mxu0 0
    %6425 = vmatpush1.bf16.msra.mxu0 %v6207
    %6426 = vmatprep.subr.bf16.mxu0 0
    %6427 = vmatpush2.bf16.msra.mxu0 %v6222
    %6428 = vmatprep.subr.bf16.mxu0 0
    %6429 = vmatpush2.bf16.msra.mxu0 %v6221
    %6430 = vmatprep.subr.bf16.mxu0 0
    %6431 = vmatpush2.bf16.msra.mxu0 %v6220
    %6432 = vmatprep.subr.bf16.mxu0 0
    %6433 = vmatpush2.bf16.msra.mxu0 %v6219
    %6434 = vmatprep.subr.bf16.mxu0 0
    %6435 = vmatpush2.bf16.msra.mxu0 %v6218
    %6436 = vmatprep.subr.bf16.mxu0 0
    %6437 = vmatpush2.bf16.msra.mxu0 %v6217
    %6438 = vmatprep.subr.bf16.mxu0 0
    %6439 = vmatpush2.bf16.msra.mxu0 %v6216
    %6440 = vmatprep.subr.bf16.mxu0 0
    %6441 = vmatpush2.bf16.msra.mxu0 %v6215
    %6442 = vmatprep.mubr.bf16.mxu0 %v5767
    %6443 = vmatmul.mubr.bf16.gmra.mxu0 %v5766
    %v6444 = vpop.f32.mrf.mxu0
    %v6445 = vadd.f32 %v6404, %v6444
    %v6446 = vpop.f32.mrf.mxu0
    %v6447 = vpop.f32.mrf.mxu0
    %v6448 = vadd.f32 %v6407, %v6447
    %v6449 = vpop.f32.mrf.mxu0
    %6450 = vdwg.mxu0
    %6451 = vst [vmem:[#allocation22] sm:$0xff] %v6445
    %6452 = vst [vmem:[#allocation22 + $0x8] sm:$0xff] %v6448
    %6453 = vst [vmem:[#allocation23] sm:$0xff] %v3489
    %6454 = vst [vmem:[#allocation23 + $0x8] sm:$0xff] %v3493
    %6455 = vst [vmem:[#allocation25] sm:$0xff] %v3491
    %6456 = vst [vmem:[#allocation25 + $0x8] sm:$0xff] %v3495
    // Predicated region
    $region114: #{tpu_custom_call.1} parent=1 // pred_check
      _
    $region115: #{tpu_custom_call.1} parent=1 // pred_check_branch
      %6458 = sbr.rel (0) target = $region117
    $region116: #{tpu_custom_call.1} parent=1 // pred_region
      %s6460 = ssub.s32 256, 256
      %6461 = vsyncadd [#allocation4], %s6460
      %s6462 = sshll.u32 [#allocation22], 4
      %s6463 = int_to_ptr.vmem [resolvable:$true] %s6462
      %6468 = dma.vmem_to_hbm [thread:$0]  %s6463, 256, %s16, [#allocation4], 128, 128, 8
    $region117: #{tpu_custom_call.1} parent=1 // pred_fallthru
      _
    // Predicated region
    $region118: #{tpu_custom_call.1} parent=1 // pred_check
      _
    $region119: #{tpu_custom_call.1} parent=1 // pred_check_branch
      %6470 = sbr.rel (0) target = $region121
    $region120: #{tpu_custom_call.1} parent=1 // pred_region
      %s6472 = ssub.s32 256, 256
      %6473 = vsyncadd [#allocation24], %s6472
      %s6474 = sshll.u32 [#allocation23], 4
      %s6475 = int_to_ptr.vmem [resolvable:$true] %s6474
      %6480 = dma.vmem_to_hbm [thread:$0]  %s6475, 256, %s17, [#allocation24], 128, 128, 8
    $region121: #{tpu_custom_call.1} parent=1 // pred_fallthru
      _
    // Predicated region
    $region122: #{tpu_custom_call.1} parent=1 // pred_check
      _
    $region123: #{tpu_custom_call.1} parent=1 // pred_check_branch
      %6482 = sbr.rel (0) target = $region125
    $region124: #{tpu_custom_call.1} parent=1 // pred_region
      %s6484 = ssub.s32 256, 256
      %6485 = vsyncadd [#allocation24], %s6484
      %s6486 = sshll.u32 [#allocation25], 4
      %s6487 = int_to_ptr.vmem [resolvable:$true] %s6486
      %6492 = dma.vmem_to_hbm [thread:$0]  %s6487, 256, %s18, [#allocation24], 128, 128, 8
    $region125: #{tpu_custom_call.1} parent=1 // pred_fallthru
      _
    // Predicated region
    $region126: #{tpu_custom_call.1} parent=1 // pred_check
      _
    $region127: #{tpu_custom_call.1} parent=1 // pred_check_branch
      %6494 = sbr.rel (0) target = $region129
    $region128: #{tpu_custom_call.1} parent=1 // pred_region
      %6495 = dma.done [#allocation4], 256
    $region129: #{tpu_custom_call.1} parent=1 // pred_fallthru
      _
    // Predicated region
    $region130: #{tpu_custom_call.1} parent=1 // pred_check
      _
    $region131: #{tpu_custom_call.1} parent=1 // pred_check_branch
      %6497 = sbr.rel (0) target = $region133
    $region132: #{tpu_custom_call.1} parent=1 // pred_region
      %6498 = dma.done [#allocation24], 256
    $region133: #{tpu_custom_call.1} parent=1 // pred_fallthru
      _
    // Predicated region
    $region134: #{tpu_custom_call.1} parent=1 // pred_check
      _
    $region135: #{tpu_custom_call.1} parent=1 // pred_check_branch
      %6500 = sbr.rel (0) target = $region137
    $region136: #{tpu_custom_call.1} parent=1 // pred_region
      %6501 = dma.done [#allocation24], 256
    $region137: #{tpu_custom_call.1} parent=1 // pred_fallthru
      _
    %6502 = vsyncpa [#allocation3], 1
    %6503 = vsyncpa [#allocation6], 1
    %6504 = vsyncpa [#allocation9], 1
    %6505 = vsyncpa [#allocation12], 1
    %6506 = vsyncpa [#allocation15], 1
    %6507 = vsyncpa [#allocation18], 1
    %6508 = vsyncpa [#allocation21], 1
    %6509 = vsyncpa [#allocation4], 1
    %6510 = vsyncpa [#allocation24], 1

</llo_original>
